<compile_context>
chip_gen: v6e
topology: v6e:2x2x1
jax: 0.10.0
libtpu: 0.0.40
codegen_flags: <defaults>
</compile_context>

<pallas_src>
from functools import partial

import jax
import jax.numpy as jnp
from jax.experimental import pallas as pl
from jax.experimental.pallas import tpu as pltpu

# ---- small, module-consistent config (scaled-down ViT_EBC) -----------------
IMG_SIZE = 16
PATCH = 4
IN_CHANS = 3
EMBED_DIM = 32
DEPTH = 2
NUM_HEADS = 4
FFN_DIM = 64                         # scaled-down dim_feedforward
NUM_CLASSES = 12                     # len(CLASS_VALUES)
HEAD_DIM = EMBED_DIM // NUM_HEADS
NUM_PATCHES = (IMG_SIZE // PATCH) ** 2
SEQ = NUM_PATCHES + 1
S_PAD = ((SEQ + 7) // 8) * 8         # 24: sublane-aligned sequence length
CPP = IN_CHANS * PATCH * PATCH       # 48 flattened patch features
CPP_PAD = 128                        # lane-dense padded patch features
C_PAD = 128                          # lane-dense padded class count
LN_EPS = 1e-5
TB_MAX = 8                           # max images folded into one grid step


def _layernorm(x, gamma, beta):
    # torch.nn.LayerNorm: biased variance over last dim, eps=1e-5 (f32)
    mean = jnp.mean(x, axis=-1, keepdims=True)
    var = jnp.mean((x - mean) ** 2, axis=-1, keepdims=True)
    return (x - mean) * jax.lax.rsqrt(var + LN_EPS) * gamma + beta


# ---------------------------------------------------------------------------
# The fused kernel: one grid step == TB images, whole forward pass.
# ---------------------------------------------------------------------------
def _vit_fused_kernel(
    patches_ref,               # (TB, S_PAD, CPP_PAD) f32, zero-padded patches
    base_ref,                  # (TB*S_PAD, D) f32: pos + cls + conv-bias slab
    proj_wt_ref,               # (CPP_PAD, D) bf16 (zero rows for padding)
    wqkv_ref, bqkv_ref,        # (DEPTH, D, 3D) bf16, (DEPTH, 1, 3D) f32
    wo_ref, bo_ref,            # (DEPTH, D, D) bf16,  (DEPTH, 1, D) f32
    ln1_g_ref, ln1_b_ref,      # (DEPTH, 1, D) f32
    w1_ref, b1_ref,            # (DEPTH, D, F) bf16,  (DEPTH, 1, F) f32
    w2_ref, b2_ref,            # (DEPTH, F, D) bf16,  (DEPTH, 1, D) f32
    ln2_g_ref, ln2_b_ref,      # (DEPTH, 1, D) f32
    norm_g_ref, norm_b_ref,    # (1, D) f32
    head_wt_ref, head_b_ref,   # (D, C_PAD) bf16, (1, C_PAD) f32
    out_ref,                   # (1, TB, C_PAD) f32
    *, tb,
):
    D, F, HD = EMBED_DIM, FFN_DIM, HEAD_DIM
    M = tb * S_PAD
    bf16 = jnp.bfloat16

    # --- patch embedding + cls/pos: single matmul + add.  Conv bias, cls
    # token and pos embed are pre-folded into base_ref; the zero-padded
    # cls/pad rows and padded feature lanes contribute exactly 0. ---
    p2d = patches_ref[...].astype(bf16).reshape(M, CPP_PAD)
    x = base_ref[...] + jnp.dot(p2d, proj_wt_ref[...],
                                preferred_element_type=jnp.float32)   # (M, D) f32

    # hoisted float key mask: pad key columns are zeroed post-exp
    col = jax.lax.broadcasted_iota(jnp.int32, (1, S_PAD, S_PAD), 2)
    key_mask = (col < SEQ).astype(jnp.float32)

    # --- DEPTH encoder layers (post-norm, ReLU FFN, eval mode) ---
    for d in range(DEPTH):
        # fused QKV projection, batched across the whole image tile
        qkv = (jnp.dot(x.astype(bf16), wqkv_ref[d],
                       preferred_element_type=jnp.float32)
               + bqkv_ref[d])                                         # (M, 3D)

        heads = []
        for h in range(NUM_HEADS):
            lo = h * HD
            qh = qkv[:, lo:lo + HD].reshape(tb, S_PAD, HD)
            kh = qkv[:, D + lo:D + lo + HD].reshape(tb, S_PAD, HD)
            vh = qkv[:, 2 * D + lo:2 * D + lo + HD].reshape(tb, S_PAD, HD)
            # scale 1/sqrt(HD) already folded into the Q weights/bias
            s = jnp.einsum('bqd,bkd->bqk', qh.astype(bf16), kh.astype(bf16),
                           preferred_element_type=jnp.float32)        # (tb,S,S)
            m = jnp.max(s, axis=-1, keepdims=True)     # >= valid max: safe
            p = jnp.exp(s - m) * key_mask              # pad keys -> exactly 0
            denom = jnp.sum(p, axis=-1, keepdims=True)
            p = p * pl.reciprocal(denom, approx=True)
            heads.append(jnp.einsum('bqk,bkd->bqd', p.astype(bf16),
                                    vh.astype(bf16),
                                    preferred_element_type=jnp.float32))
        # lane-concat the 4 head outputs, then ONE out-projection matmul
        attn = jnp.concatenate(heads, axis=-1).reshape(M, D)          # f32
        attn = (jnp.dot(attn.astype(bf16), wo_ref[d],
                        preferred_element_type=jnp.float32) + bo_ref[d])

        # residual + norm1
        x1 = _layernorm(x + attn, ln1_g_ref[d], ln1_b_ref[d])

        # FFN (ReLU)
        hmid = (jnp.dot(x1.astype(bf16), w1_ref[d],
                        preferred_element_type=jnp.float32) + b1_ref[d])
        hmid = jnp.maximum(hmid, 0.0)
        ff = (jnp.dot(hmid.astype(bf16), w2_ref[d],
                      preferred_element_type=jnp.float32) + b2_ref[d])

        # residual + norm2
        x = _layernorm(x1 + ff, ln2_g_ref[d], ln2_b_ref[d])

    # --- final LayerNorm on each image's CLS row + classification head ---
    cls_rows = [x[b * S_PAD + NUM_PATCHES:b * S_PAD + NUM_PATCHES + 1, :]
                for b in range(tb)]
    cls = cls_rows[0] if tb == 1 else jnp.concatenate(cls_rows, axis=0)
    cls = _layernorm(cls, norm_g_ref[...], norm_b_ref[...])
    out_ref[0] = (jnp.dot(cls.astype(bf16), head_wt_ref[...],
                          preferred_element_type=jnp.float32)
                  + head_b_ref[...])                                  # (TB, C_PAD)


# ---------------------------------------------------------------------------
# Parameter construction (torch layout) and host-side preparation
# ---------------------------------------------------------------------------
def init_params(key):
    D, F, C, P = EMBED_DIM, FFN_DIM, IN_CHANS, PATCH
    ks = iter(jax.random.split(key, 64))
    n = lambda shp, s=0.02: (s * jax.random.normal(next(ks), shp)).astype(jnp.float32)
    z = lambda shp: jnp.zeros(shp, jnp.float32)
    o = lambda shp: jnp.ones(shp, jnp.float32)

    params = {
        "proj_w": n((D, C, P, P), 0.1),     # Conv2d weight (out, in, kh, kw)
        "proj_b": z((D,)),
        "cls_token": n((1, 1, D)),
        "pos_embed": n((1, SEQ, D)),
        "norm_g": o((D,)),
        "norm_b": z((D,)),
        "head_w": n((NUM_CLASSES, D)),
        "head_b": z((NUM_CLASSES,)),
        "layers": [],
    }
    for _ in range(DEPTH):
        params["layers"].append({
            "in_proj_w": n((3 * D, D), 0.05),
            "in_proj_b": z((3 * D,)),
            "out_proj_w": n((D, D), 0.05),
            "out_proj_b": z((D,)),
            "ln1_g": o((D,)), "ln1_b": z((D,)),
            "lin1_w": n((F, D), 0.05), "lin1_b": z((F,)),
            "lin2_w": n((D, F), 0.05), "lin2_b": z((D,)),
            "ln2_g": o((D,)), "ln2_b": z((D,)),
        })
    return params


def prepare_params(params, tb):
    """Pre-transpose / pre-split / pre-scale / pre-pad weights; stack layers."""
    D, F = EMBED_DIM, FFN_DIM
    scale = 1.0 / (HEAD_DIM ** 0.5)
    bf16 = jnp.bfloat16

    # patch embed: Conv2d(out,in,kh,kw) -> (CPP, D), rows padded to CPP_PAD
    proj_wt = params["proj_w"].reshape(D, CPP).T
    proj_wt = jnp.zeros((CPP_PAD, D), jnp.float32).at[:CPP].set(proj_wt)

    # per-image base slab: patch rows = pos[1:] + conv bias, row NP = cls+pos0,
    # pad rows = 0.  Conv bias is folded here so the kernel's patch matmul is
    # bias-free and the zero-padded cls/pad patch rows contribute exactly 0.
    pos = params["pos_embed"][0]                                  # (SEQ, D)
    base = jnp.zeros((S_PAD, D), jnp.float32)
    base = base.at[:NUM_PATCHES].set(pos[1:] + params["proj_b"][None, :])
    base = base.at[NUM_PATCHES].set(pos[0] + params["cls_token"][0, 0])
    base_tiled = jnp.tile(base, (tb, 1))                          # (tb*S_PAD, D)

    wqkv, bqkv, wo, bo = [], [], [], []
    ln1_g, ln1_b, w1, b1, w2, b2, ln2_g, ln2_b = ([] for _ in range(8))
    for lp in params["layers"]:
        win, bin_ = lp["in_proj_w"], lp["in_proj_b"]
        wq = win[:D].T * scale                    # fold 1/sqrt(HD) into Q
        bq = bin_[:D] * scale
        wk, bk = win[D:2 * D].T, bin_[D:2 * D]
        wv, bv = win[2 * D:].T, bin_[2 * D:]
        wqkv.append(jnp.concatenate([wq, wk, wv], axis=1))        # (D, 3D)
        bqkv.append(jnp.concatenate([bq, bk, bv]).reshape(1, 3 * D))
        wo.append(lp["out_proj_w"].T)
        bo.append(lp["out_proj_b"].reshape(1, D))
        ln1_g.append(lp["ln1_g"].reshape(1, D)); ln1_b.append(lp["ln1_b"].reshape(1, D))
        w1.append(lp["lin1_w"].T); b1.append(lp["lin1_b"].reshape(1, F))
        w2.append(lp["lin2_w"].T); b2.append(lp["lin2_b"].reshape(1, D))
        ln2_g.append(lp["ln2_g"].reshape(1, D)); ln2_b.append(lp["ln2_b"].reshape(1, D))

    head_wt = jnp.zeros((D, C_PAD), jnp.float32).at[:, :NUM_CLASSES].set(
        params["head_w"].T)
    head_b = jnp.zeros((1, C_PAD), jnp.float32).at[0, :NUM_CLASSES].set(
        params["head_b"])

    return {
        "base": base_tiled,
        "proj_wt": proj_wt.astype(bf16),
        "wqkv": jnp.stack(wqkv).astype(bf16), "bqkv": jnp.stack(bqkv),
        "wo": jnp.stack(wo).astype(bf16), "bo": jnp.stack(bo),
        "ln1_g": jnp.stack(ln1_g), "ln1_b": jnp.stack(ln1_b),
        "w1": jnp.stack(w1).astype(bf16), "b1": jnp.stack(b1),
        "w2": jnp.stack(w2).astype(bf16), "b2": jnp.stack(b2),
        "ln2_g": jnp.stack(ln2_g), "ln2_b": jnp.stack(ln2_b),
        "norm_g": params["norm_g"].reshape(1, EMBED_DIM),
        "norm_b": params["norm_b"].reshape(1, EMBED_DIM),
        "head_wt": head_wt.astype(bf16),
        "head_b": head_b,
    }


# ---------------------------------------------------------------------------
# Full forward pass (single pallas_call)
# ---------------------------------------------------------------------------
def vit_ebc_forward(params, x):
    # x: (B, C, H, W) float32
    B = x.shape[0]
    Hp = IMG_SIZE // PATCH
    D, F = EMBED_DIM, FFN_DIM

    # batch tiling: TB images per grid step; keep >=2 parallel steps so a v7x
    # megacore gets work on both TensorCores (v5e/v6e: steps are serial).
    num_steps = max(2, -(-B // TB_MAX)) if B >= 2 else 1
    TB = -(-B // num_steps)
    B_pad = num_steps * TB

    prep = prepare_params(params, TB)

    # patch extraction glue (Conv2d k=stride=P == linear proj of flat patches)
    # TODO(synk): at real image sizes fold this transpose into the kernel via
    # an (Hp, Wp)-aware index_map instead of a standalone XLA transpose.
    patches = x.reshape(B, IN_CHANS, Hp, PATCH, Hp, PATCH)
    patches = jnp.transpose(patches, (0, 2, 4, 1, 3, 5)).reshape(B, NUM_PATCHES, CPP)
    # zero-pad: batch -> B_pad, rows -> S_PAD, features -> CPP_PAD (lane-dense)
    patches = jnp.pad(patches, ((0, B_pad - B),
                                (0, S_PAD - NUM_PATCHES),
                                (0, CPP_PAD - CPP)))

    def full(shp):
        zeros = (0,) * len(shp)
        return pl.BlockSpec(shp, lambda s, _z=zeros: _z)

    # TODO(synk): at real ViT sizes (D=768, F=3072, DEPTH=12) stream the
    # (DEPTH, ...) weight stacks with a depth grid axis / pltpu.emit_pipeline
    # instead of keeping everything resident (won't fit v7x's 64 MiB VMEM).
    out = pl.pallas_call(
        partial(_vit_fused_kernel, tb=TB),
        out_shape=jax.ShapeDtypeStruct((num_steps, TB, C_PAD), jnp.float32),
        grid=(num_steps,),
        in_specs=[
            pl.BlockSpec((TB, S_PAD, CPP_PAD), lambda s: (s, 0, 0)),
            full((TB * S_PAD, D)),
            full((CPP_PAD, D)),
            full((DEPTH, D, 3 * D)), full((DEPTH, 1, 3 * D)),   # wqkv, bqkv
            full((DEPTH, D, D)), full((DEPTH, 1, D)),           # wo, bo
            full((DEPTH, 1, D)), full((DEPTH, 1, D)),           # ln1
            full((DEPTH, D, F)), full((DEPTH, 1, F)),           # lin1
            full((DEPTH, F, D)), full((DEPTH, 1, D)),           # lin2
            full((DEPTH, 1, D)), full((DEPTH, 1, D)),           # ln2
            full((1, D)), full((1, D)),                         # final norm
            full((D, C_PAD)), full((1, C_PAD)),                 # head
        ],
        out_specs=pl.BlockSpec((1, TB, C_PAD), lambda s: (s, 0, 0)),
        compiler_params=pltpu.CompilerParams(
            dimension_semantics=("parallel",),
            vmem_limit_bytes=32 * 1024 * 1024),
    )(
        patches, prep["base"], prep["proj_wt"],
        prep["wqkv"], prep["bqkv"], prep["wo"], prep["bo"],
        prep["ln1_g"], prep["ln1_b"],
        prep["w1"], prep["b1"], prep["w2"], prep["b2"],
        prep["ln2_g"], prep["ln2_b"],
        prep["norm_g"], prep["norm_b"],
        prep["head_wt"], prep["head_b"],
    )
    return out.reshape(B_pad, C_PAD)[:B, :NUM_CLASSES]


if __name__ == "__main__":
    key = jax.random.PRNGKey(0)
    pkey, xkey = jax.random.split(key)
    params = init_params(pkey)
    x = jax.random.normal(xkey, (2, IN_CHANS, IMG_SIZE, IMG_SIZE), dtype=jnp.float32)

    logits = jax.jit(vit_ebc_forward)(params, x)
    jax.block_until_ready(logits)
    assert logits.shape == (2, NUM_CLASSES), logits.shape
    assert bool(jnp.all(jnp.isfinite(logits)))
    print("KERNEL_OK")
</pallas_src>

<mosaic_0001>
module attributes {stable_mosaic.version = 11 : i64} {
  func.func @_vit_fused_kernel(%arg0: i32, %arg1: memref<1x24x128xf32, #tpu.memory_space<vmem>>, %arg2: memref<24x32xf32, #tpu.memory_space<vmem>>, %arg3: memref<128x32xbf16, #tpu.memory_space<vmem>>, %arg4: memref<2x32x96xbf16, #tpu.memory_space<vmem>>, %arg5: memref<2x1x96xf32, #tpu.memory_space<vmem>>, %arg6: memref<2x32x32xbf16, #tpu.memory_space<vmem>>, %arg7: memref<2x1x32xf32, #tpu.memory_space<vmem>>, %arg8: memref<2x1x32xf32, #tpu.memory_space<vmem>>, %arg9: memref<2x1x32xf32, #tpu.memory_space<vmem>>, %arg10: memref<2x32x64xbf16, #tpu.memory_space<vmem>>, %arg11: memref<2x1x64xf32, #tpu.memory_space<vmem>>, %arg12: memref<2x64x32xbf16, #tpu.memory_space<vmem>>, %arg13: memref<2x1x32xf32, #tpu.memory_space<vmem>>, %arg14: memref<2x1x32xf32, #tpu.memory_space<vmem>>, %arg15: memref<2x1x32xf32, #tpu.memory_space<vmem>>, %arg16: memref<1x32xf32, #tpu.memory_space<vmem>>, %arg17: memref<1x32xf32, #tpu.memory_space<vmem>>, %arg18: memref<32x128xbf16, #tpu.memory_space<vmem>>, %arg19: memref<1x128xf32, #tpu.memory_space<vmem>>, %arg20: memref<1x1x128xf32, #tpu.memory_space<vmem>>) attributes {dimension_semantics = [#tpu.dimension_semantics<parallel>], iteration_bounds = array<i64: 2>, scalar_prefetch = 0 : i64, scratch_operands = 0 : i64, tpu.core_type = #tpu.core_type<tc>, window_params = [{transform_indices = @transform_0, window_bounds = array<i64: 1, 24, 128>}, {pipeline_mode = #tpu.pipeline_mode<synchronous>, transform_indices = @transform_1, window_bounds = array<i64: 24, 32>}, {pipeline_mode = #tpu.pipeline_mode<synchronous>, transform_indices = @transform_2, window_bounds = array<i64: 128, 32>}, {pipeline_mode = #tpu.pipeline_mode<synchronous>, transform_indices = @transform_3, window_bounds = array<i64: 2, 32, 96>}, {pipeline_mode = #tpu.pipeline_mode<synchronous>, transform_indices = @transform_4, window_bounds = array<i64: 2, 1, 96>}, {pipeline_mode = #tpu.pipeline_mode<synchronous>, transform_indices = @transform_5, window_bounds = array<i64: 2, 32, 32>}, {pipeline_mode = #tpu.pipeline_mode<synchronous>, transform_indices = @transform_6, window_bounds = array<i64: 2, 1, 32>}, {pipeline_mode = #tpu.pipeline_mode<synchronous>, transform_indices = @transform_7, window_bounds = array<i64: 2, 1, 32>}, {pipeline_mode = #tpu.pipeline_mode<synchronous>, transform_indices = @transform_8, window_bounds = array<i64: 2, 1, 32>}, {pipeline_mode = #tpu.pipeline_mode<synchronous>, transform_indices = @transform_9, window_bounds = array<i64: 2, 32, 64>}, {pipeline_mode = #tpu.pipeline_mode<synchronous>, transform_indices = @transform_10, window_bounds = array<i64: 2, 1, 64>}, {pipeline_mode = #tpu.pipeline_mode<synchronous>, transform_indices = @transform_11, window_bounds = array<i64: 2, 64, 32>}, {pipeline_mode = #tpu.pipeline_mode<synchronous>, transform_indices = @transform_12, window_bounds = array<i64: 2, 1, 32>}, {pipeline_mode = #tpu.pipeline_mode<synchronous>, transform_indices = @transform_13, window_bounds = array<i64: 2, 1, 32>}, {pipeline_mode = #tpu.pipeline_mode<synchronous>, transform_indices = @transform_14, window_bounds = array<i64: 2, 1, 32>}, {pipeline_mode = #tpu.pipeline_mode<synchronous>, transform_indices = @transform_15, window_bounds = array<i64: 1, 32>}, {pipeline_mode = #tpu.pipeline_mode<synchronous>, transform_indices = @transform_16, window_bounds = array<i64: 1, 32>}, {pipeline_mode = #tpu.pipeline_mode<synchronous>, transform_indices = @transform_17, window_bounds = array<i64: 32, 128>}, {pipeline_mode = #tpu.pipeline_mode<synchronous>, transform_indices = @transform_18, window_bounds = array<i64: 1, 128>}, {transform_indices = @transform_19, window_bounds = array<i64: 1, 1, 128>}]} {
    %c0 = arith.constant 0 : index
    %c0_0 = arith.constant 0 : index
    %c0_1 = arith.constant 0 : index
    %0 = vector.load %arg1[%c0, %c0_0, %c0_1] : memref<1x24x128xf32, #tpu.memory_space<vmem>>, vector<1x24x128xf32>
    %1 = arith.truncf %0 : vector<1x24x128xf32> to vector<1x24x128xbf16>
    %2 = vector.shape_cast %1 : vector<1x24x128xbf16> to vector<24x128xbf16>
    %c0_2 = arith.constant 0 : index
    %c0_3 = arith.constant 0 : index
    %3 = vector.load %arg2[%c0_2, %c0_3] : memref<24x32xf32, #tpu.memory_space<vmem>>, vector<24x32xf32>
    %c0_4 = arith.constant 0 : index
    %c0_5 = arith.constant 0 : index
    %4 = vector.load %arg3[%c0_4, %c0_5] : memref<128x32xbf16, #tpu.memory_space<vmem>>, vector<128x32xbf16>
    %cst = arith.constant dense<0.000000e+00> : vector<24x32xf32>
    %5 = tpu.matmul %2, %4, %cst {dimension_numbers = #tpu.dot_dimension_numbers<[1], [0], [0], [1], [0, 0, 1, 1], [], []>} : vector<24x128xbf16>, vector<128x32xbf16>, vector<24x32xf32> -> vector<24x32xf32>
    %6 = arith.addf %3, %5 : vector<24x32xf32>
    %7 = tpu.iota {dimensions = array<i32: 2>} : vector<1x24x24xi32>
    %c17_i32 = arith.constant 17 : i32
    %8 = vector.broadcast %c17_i32 : i32 to vector<1x24x24xi32>
    %9 = arith.cmpi slt, %7, %8 : vector<1x24x24xi32>
    %10 = arith.extui %9 : vector<1x24x24xi1> to vector<1x24x24xi32>
    %11 = arith.sitofp %10 : vector<1x24x24xi32> to vector<1x24x24xf32>
    %12 = arith.truncf %6 : vector<24x32xf32> to vector<24x32xbf16>
    %c0_6 = arith.constant 0 : index
    %c0_7 = arith.constant 0 : index
    %c0_8 = arith.constant 0 : index
    %13 = vector.load %arg4[%c0_6, %c0_7, %c0_8] : memref<2x32x96xbf16, #tpu.memory_space<vmem>>, vector<1x32x96xbf16>
    %14 = vector.shape_cast %13 : vector<1x32x96xbf16> to vector<32x96xbf16>
    %cst_9 = arith.constant dense<0.000000e+00> : vector<24x96xf32>
    %15 = tpu.matmul %12, %14, %cst_9 {dimension_numbers = #tpu.dot_dimension_numbers<[1], [0], [0], [1], [0, 0, 1, 1], [], []>} : vector<24x32xbf16>, vector<32x96xbf16>, vector<24x96xf32> -> vector<24x96xf32>
    %c0_10 = arith.constant 0 : index
    %c0_11 = arith.constant 0 : index
    %c0_12 = arith.constant 0 : index
    %16 = vector.load %arg5[%c0_10, %c0_11, %c0_12] : memref<2x1x96xf32, #tpu.memory_space<vmem>>, vector<1x1x96xf32>
    %17 = vector.shape_cast %16 : vector<1x1x96xf32> to vector<1x96xf32>
    %18 = vector.broadcast %17 : vector<1x96xf32> to vector<24x96xf32>
    %19 = arith.addf %15, %18 : vector<24x96xf32>
    %20 = vector.extract_strided_slice %19 {offsets = [0, 0], sizes = [24, 8], strides = [1, 1]} : vector<24x96xf32> to vector<24x8xf32>
    %21 = vector.shape_cast %20 : vector<24x8xf32> to vector<1x24x8xf32>
    %22 = vector.extract_strided_slice %19 {offsets = [0, 32], sizes = [24, 8], strides = [1, 1]} : vector<24x96xf32> to vector<24x8xf32>
    %23 = vector.shape_cast %22 : vector<24x8xf32> to vector<1x24x8xf32>
    %24 = vector.extract_strided_slice %19 {offsets = [0, 64], sizes = [24, 8], strides = [1, 1]} : vector<24x96xf32> to vector<24x8xf32>
    %25 = vector.shape_cast %24 : vector<24x8xf32> to vector<1x24x8xf32>
    %26 = arith.truncf %21 : vector<1x24x8xf32> to vector<1x24x8xbf16>
    %27 = arith.truncf %23 : vector<1x24x8xf32> to vector<1x24x8xbf16>
    "tpu.trace_start"() <{level = 10 : i32, message = "bqd,bkd->bqk"}> : () -> ()
    %cst_13 = arith.constant dense<0.000000e+00> : vector<1x24x24xf32>
    %28 = tpu.matmul %26, %27, %cst_13 {dimension_numbers = #tpu.dot_dimension_numbers<[2], [2], [1], [1], [0, 0, 0, 1, 1, 1], [0], [0]>} : vector<1x24x8xbf16>, vector<1x24x8xbf16>, vector<1x24x24xf32> -> vector<1x24x24xf32>
    "tpu.trace_stop"() : () -> ()
    %cst_14 = arith.constant dense<0xFF800000> : vector<1x24xf32>
    %29 = vector.multi_reduction <maximumf>, %28, %cst_14 [2] : vector<1x24x24xf32> to vector<1x24xf32>
    %30 = vector.shape_cast %29 : vector<1x24xf32> to vector<1x24x1xf32>
    %31 = vector.broadcast %30 : vector<1x24x1xf32> to vector<1x24x24xf32>
    %32 = arith.subf %28, %31 : vector<1x24x24xf32>
    %33 = math.exp %32 : vector<1x24x24xf32>
    %34 = arith.mulf %33, %11 : vector<1x24x24xf32>
    %cst_15 = arith.constant dense<0.000000e+00> : vector<1x24xf32>
    %35 = vector.multi_reduction <add>, %34, %cst_15 [2] : vector<1x24x24xf32> to vector<1x24xf32>
    %36 = vector.shape_cast %35 : vector<1x24xf32> to vector<1x24x1xf32>
    %37 = tpu.reciprocal %36 {approx = true} : vector<1x24x1xf32> -> vector<1x24x1xf32>
    %38 = vector.broadcast %37 : vector<1x24x1xf32> to vector<1x24x24xf32>
    %39 = arith.mulf %34, %38 : vector<1x24x24xf32>
    %40 = arith.truncf %39 : vector<1x24x24xf32> to vector<1x24x24xbf16>
    %41 = arith.truncf %25 : vector<1x24x8xf32> to vector<1x24x8xbf16>
    "tpu.trace_start"() <{level = 10 : i32, message = "bqk,bkd->bqd"}> : () -> ()
    %cst_16 = arith.constant dense<0.000000e+00> : vector<1x24x8xf32>
    %42 = tpu.matmul %40, %41, %cst_16 {dimension_numbers = #tpu.dot_dimension_numbers<[2], [1], [1], [2], [0, 0, 0, 1, 1, 2], [0], [0]>} : vector<1x24x24xbf16>, vector<1x24x8xbf16>, vector<1x24x8xf32> -> vector<1x24x8xf32>
    "tpu.trace_stop"() : () -> ()
    %43 = vector.extract_strided_slice %19 {offsets = [0, 8], sizes = [24, 8], strides = [1, 1]} : vector<24x96xf32> to vector<24x8xf32>
    %44 = vector.shape_cast %43 : vector<24x8xf32> to vector<1x24x8xf32>
    %45 = vector.extract_strided_slice %19 {offsets = [0, 40], sizes = [24, 8], strides = [1, 1]} : vector<24x96xf32> to vector<24x8xf32>
    %46 = vector.shape_cast %45 : vector<24x8xf32> to vector<1x24x8xf32>
    %47 = vector.extract_strided_slice %19 {offsets = [0, 72], sizes = [24, 8], strides = [1, 1]} : vector<24x96xf32> to vector<24x8xf32>
    %48 = vector.shape_cast %47 : vector<24x8xf32> to vector<1x24x8xf32>
    %49 = arith.truncf %44 : vector<1x24x8xf32> to vector<1x24x8xbf16>
    %50 = arith.truncf %46 : vector<1x24x8xf32> to vector<1x24x8xbf16>
    "tpu.trace_start"() <{level = 10 : i32, message = "bqd,bkd->bqk"}> : () -> ()
    %cst_17 = arith.constant dense<0.000000e+00> : vector<1x24x24xf32>
    %51 = tpu.matmul %49, %50, %cst_17 {dimension_numbers = #tpu.dot_dimension_numbers<[2], [2], [1], [1], [0, 0, 0, 1, 1, 1], [0], [0]>} : vector<1x24x8xbf16>, vector<1x24x8xbf16>, vector<1x24x24xf32> -> vector<1x24x24xf32>
    "tpu.trace_stop"() : () -> ()
    %cst_18 = arith.constant dense<0xFF800000> : vector<1x24xf32>
    %52 = vector.multi_reduction <maximumf>, %51, %cst_18 [2] : vector<1x24x24xf32> to vector<1x24xf32>
    %53 = vector.shape_cast %52 : vector<1x24xf32> to vector<1x24x1xf32>
    %54 = vector.broadcast %53 : vector<1x24x1xf32> to vector<1x24x24xf32>
    %55 = arith.subf %51, %54 : vector<1x24x24xf32>
    %56 = math.exp %55 : vector<1x24x24xf32>
    %57 = arith.mulf %56, %11 : vector<1x24x24xf32>
    %cst_19 = arith.constant dense<0.000000e+00> : vector<1x24xf32>
    %58 = vector.multi_reduction <add>, %57, %cst_19 [2] : vector<1x24x24xf32> to vector<1x24xf32>
    %59 = vector.shape_cast %58 : vector<1x24xf32> to vector<1x24x1xf32>
    %60 = tpu.reciprocal %59 {approx = true} : vector<1x24x1xf32> -> vector<1x24x1xf32>
    %61 = vector.broadcast %60 : vector<1x24x1xf32> to vector<1x24x24xf32>
    %62 = arith.mulf %57, %61 : vector<1x24x24xf32>
    %63 = arith.truncf %62 : vector<1x24x24xf32> to vector<1x24x24xbf16>
    %64 = arith.truncf %48 : vector<1x24x8xf32> to vector<1x24x8xbf16>
    "tpu.trace_start"() <{level = 10 : i32, message = "bqk,bkd->bqd"}> : () -> ()
    %cst_20 = arith.constant dense<0.000000e+00> : vector<1x24x8xf32>
    %65 = tpu.matmul %63, %64, %cst_20 {dimension_numbers = #tpu.dot_dimension_numbers<[2], [1], [1], [2], [0, 0, 0, 1, 1, 2], [0], [0]>} : vector<1x24x24xbf16>, vector<1x24x8xbf16>, vector<1x24x8xf32> -> vector<1x24x8xf32>
    "tpu.trace_stop"() : () -> ()
    %66 = vector.extract_strided_slice %19 {offsets = [0, 16], sizes = [24, 8], strides = [1, 1]} : vector<24x96xf32> to vector<24x8xf32>
    %67 = vector.shape_cast %66 : vector<24x8xf32> to vector<1x24x8xf32>
    %68 = vector.extract_strided_slice %19 {offsets = [0, 48], sizes = [24, 8], strides = [1, 1]} : vector<24x96xf32> to vector<24x8xf32>
    %69 = vector.shape_cast %68 : vector<24x8xf32> to vector<1x24x8xf32>
    %70 = vector.extract_strided_slice %19 {offsets = [0, 80], sizes = [24, 8], strides = [1, 1]} : vector<24x96xf32> to vector<24x8xf32>
    %71 = vector.shape_cast %70 : vector<24x8xf32> to vector<1x24x8xf32>
    %72 = arith.truncf %67 : vector<1x24x8xf32> to vector<1x24x8xbf16>
    %73 = arith.truncf %69 : vector<1x24x8xf32> to vector<1x24x8xbf16>
    "tpu.trace_start"() <{level = 10 : i32, message = "bqd,bkd->bqk"}> : () -> ()
    %cst_21 = arith.constant dense<0.000000e+00> : vector<1x24x24xf32>
    %74 = tpu.matmul %72, %73, %cst_21 {dimension_numbers = #tpu.dot_dimension_numbers<[2], [2], [1], [1], [0, 0, 0, 1, 1, 1], [0], [0]>} : vector<1x24x8xbf16>, vector<1x24x8xbf16>, vector<1x24x24xf32> -> vector<1x24x24xf32>
    "tpu.trace_stop"() : () -> ()
    %cst_22 = arith.constant dense<0xFF800000> : vector<1x24xf32>
    %75 = vector.multi_reduction <maximumf>, %74, %cst_22 [2] : vector<1x24x24xf32> to vector<1x24xf32>
    %76 = vector.shape_cast %75 : vector<1x24xf32> to vector<1x24x1xf32>
    %77 = vector.broadcast %76 : vector<1x24x1xf32> to vector<1x24x24xf32>
    %78 = arith.subf %74, %77 : vector<1x24x24xf32>
    %79 = math.exp %78 : vector<1x24x24xf32>
    %80 = arith.mulf %79, %11 : vector<1x24x24xf32>
    %cst_23 = arith.constant dense<0.000000e+00> : vector<1x24xf32>
    %81 = vector.multi_reduction <add>, %80, %cst_23 [2] : vector<1x24x24xf32> to vector<1x24xf32>
    %82 = vector.shape_cast %81 : vector<1x24xf32> to vector<1x24x1xf32>
    %83 = tpu.reciprocal %82 {approx = true} : vector<1x24x1xf32> -> vector<1x24x1xf32>
    %84 = vector.broadcast %83 : vector<1x24x1xf32> to vector<1x24x24xf32>
    %85 = arith.mulf %80, %84 : vector<1x24x24xf32>
    %86 = arith.truncf %85 : vector<1x24x24xf32> to vector<1x24x24xbf16>
    %87 = arith.truncf %71 : vector<1x24x8xf32> to vector<1x24x8xbf16>
    "tpu.trace_start"() <{level = 10 : i32, message = "bqk,bkd->bqd"}> : () -> ()
    %cst_24 = arith.constant dense<0.000000e+00> : vector<1x24x8xf32>
    %88 = tpu.matmul %86, %87, %cst_24 {dimension_numbers = #tpu.dot_dimension_numbers<[2], [1], [1], [2], [0, 0, 0, 1, 1, 2], [0], [0]>} : vector<1x24x24xbf16>, vector<1x24x8xbf16>, vector<1x24x8xf32> -> vector<1x24x8xf32>
    "tpu.trace_stop"() : () -> ()
    %89 = vector.extract_strided_slice %19 {offsets = [0, 24], sizes = [24, 8], strides = [1, 1]} : vector<24x96xf32> to vector<24x8xf32>
    %90 = vector.shape_cast %89 : vector<24x8xf32> to vector<1x24x8xf32>
    %91 = vector.extract_strided_slice %19 {offsets = [0, 56], sizes = [24, 8], strides = [1, 1]} : vector<24x96xf32> to vector<24x8xf32>
    %92 = vector.shape_cast %91 : vector<24x8xf32> to vector<1x24x8xf32>
    %93 = vector.extract_strided_slice %19 {offsets = [0, 88], sizes = [24, 8], strides = [1, 1]} : vector<24x96xf32> to vector<24x8xf32>
    %94 = vector.shape_cast %93 : vector<24x8xf32> to vector<1x24x8xf32>
    %95 = arith.truncf %90 : vector<1x24x8xf32> to vector<1x24x8xbf16>
    %96 = arith.truncf %92 : vector<1x24x8xf32> to vector<1x24x8xbf16>
    "tpu.trace_start"() <{level = 10 : i32, message = "bqd,bkd->bqk"}> : () -> ()
    %cst_25 = arith.constant dense<0.000000e+00> : vector<1x24x24xf32>
    %97 = tpu.matmul %95, %96, %cst_25 {dimension_numbers = #tpu.dot_dimension_numbers<[2], [2], [1], [1], [0, 0, 0, 1, 1, 1], [0], [0]>} : vector<1x24x8xbf16>, vector<1x24x8xbf16>, vector<1x24x24xf32> -> vector<1x24x24xf32>
    "tpu.trace_stop"() : () -> ()
    %cst_26 = arith.constant dense<0xFF800000> : vector<1x24xf32>
    %98 = vector.multi_reduction <maximumf>, %97, %cst_26 [2] : vector<1x24x24xf32> to vector<1x24xf32>
    %99 = vector.shape_cast %98 : vector<1x24xf32> to vector<1x24x1xf32>
    %100 = vector.broadcast %99 : vector<1x24x1xf32> to vector<1x24x24xf32>
    %101 = arith.subf %97, %100 : vector<1x24x24xf32>
    %102 = math.exp %101 : vector<1x24x24xf32>
    %103 = arith.mulf %102, %11 : vector<1x24x24xf32>
    %cst_27 = arith.constant dense<0.000000e+00> : vector<1x24xf32>
    %104 = vector.multi_reduction <add>, %103, %cst_27 [2] : vector<1x24x24xf32> to vector<1x24xf32>
    %105 = vector.shape_cast %104 : vector<1x24xf32> to vector<1x24x1xf32>
    %106 = tpu.reciprocal %105 {approx = true} : vector<1x24x1xf32> -> vector<1x24x1xf32>
    %107 = vector.broadcast %106 : vector<1x24x1xf32> to vector<1x24x24xf32>
    %108 = arith.mulf %103, %107 : vector<1x24x24xf32>
    %109 = arith.truncf %108 : vector<1x24x24xf32> to vector<1x24x24xbf16>
    %110 = arith.truncf %94 : vector<1x24x8xf32> to vector<1x24x8xbf16>
    "tpu.trace_start"() <{level = 10 : i32, message = "bqk,bkd->bqd"}> : () -> ()
    %cst_28 = arith.constant dense<0.000000e+00> : vector<1x24x8xf32>
    %111 = tpu.matmul %109, %110, %cst_28 {dimension_numbers = #tpu.dot_dimension_numbers<[2], [1], [1], [2], [0, 0, 0, 1, 1, 2], [0], [0]>} : vector<1x24x24xbf16>, vector<1x24x8xbf16>, vector<1x24x8xf32> -> vector<1x24x8xf32>
    "tpu.trace_stop"() : () -> ()
    %112 = tpu.concatenate %42, %65, %88, %111 in 2 : vector<1x24x8xf32>, vector<1x24x8xf32>, vector<1x24x8xf32>, vector<1x24x8xf32> -> vector<1x24x32xf32>
    %113 = vector.shape_cast %112 : vector<1x24x32xf32> to vector<24x32xf32>
    %114 = arith.truncf %113 : vector<24x32xf32> to vector<24x32xbf16>
    %c0_29 = arith.constant 0 : index
    %c0_30 = arith.constant 0 : index
    %c0_31 = arith.constant 0 : index
    %115 = vector.load %arg6[%c0_29, %c0_30, %c0_31] : memref<2x32x32xbf16, #tpu.memory_space<vmem>>, vector<1x32x32xbf16>
    %116 = vector.shape_cast %115 : vector<1x32x32xbf16> to vector<32x32xbf16>
    %cst_32 = arith.constant dense<0.000000e+00> : vector<24x32xf32>
    %117 = tpu.matmul %114, %116, %cst_32 {dimension_numbers = #tpu.dot_dimension_numbers<[1], [0], [0], [1], [0, 0, 1, 1], [], []>} : vector<24x32xbf16>, vector<32x32xbf16>, vector<24x32xf32> -> vector<24x32xf32>
    %c0_33 = arith.constant 0 : index
    %c0_34 = arith.constant 0 : index
    %c0_35 = arith.constant 0 : index
    %118 = vector.load %arg7[%c0_33, %c0_34, %c0_35] : memref<2x1x32xf32, #tpu.memory_space<vmem>>, vector<1x1x32xf32>
    %119 = vector.shape_cast %118 : vector<1x1x32xf32> to vector<1x32xf32>
    %120 = vector.broadcast %119 : vector<1x32xf32> to vector<24x32xf32>
    %121 = arith.addf %117, %120 : vector<24x32xf32>
    %122 = arith.addf %6, %121 : vector<24x32xf32>
    %c0_36 = arith.constant 0 : index
    %c0_37 = arith.constant 0 : index
    %c0_38 = arith.constant 0 : index
    %123 = vector.load %arg8[%c0_36, %c0_37, %c0_38] : memref<2x1x32xf32, #tpu.memory_space<vmem>>, vector<1x1x32xf32>
    %124 = vector.shape_cast %123 : vector<1x1x32xf32> to vector<1x32xf32>
    %c0_39 = arith.constant 0 : index
    %c0_40 = arith.constant 0 : index
    %c0_41 = arith.constant 0 : index
    %125 = vector.load %arg9[%c0_39, %c0_40, %c0_41] : memref<2x1x32xf32, #tpu.memory_space<vmem>>, vector<1x1x32xf32>
    %126 = vector.shape_cast %125 : vector<1x1x32xf32> to vector<1x32xf32>
    %cst_42 = arith.constant dense<0.000000e+00> : vector<24xf32>
    %127 = vector.multi_reduction <add>, %122, %cst_42 [1] : vector<24x32xf32> to vector<24xf32>
    %128 = vector.shape_cast %127 : vector<24xf32> to vector<24x1xf32>
    %cst_43 = arith.constant 3.200000e+01 : f32
    %129 = vector.broadcast %cst_43 : f32 to vector<24x1xf32>
    %130 = arith.divf %128, %129 : vector<24x1xf32>
    %131 = vector.broadcast %130 : vector<24x1xf32> to vector<24x32xf32>
    %132 = arith.subf %122, %131 : vector<24x32xf32>
    %133 = arith.mulf %132, %132 : vector<24x32xf32>
    %cst_44 = arith.constant dense<0.000000e+00> : vector<24xf32>
    %134 = vector.multi_reduction <add>, %133, %cst_44 [1] : vector<24x32xf32> to vector<24xf32>
    %135 = vector.shape_cast %134 : vector<24xf32> to vector<24x1xf32>
    %cst_45 = arith.constant 3.200000e+01 : f32
    %136 = vector.broadcast %cst_45 : f32 to vector<24x1xf32>
    %137 = arith.divf %135, %136 : vector<24x1xf32>
    %138 = vector.broadcast %130 : vector<24x1xf32> to vector<24x32xf32>
    %139 = arith.subf %122, %138 : vector<24x32xf32>
    %cst_46 = arith.constant 9.99999974E-6 : f32
    %140 = vector.broadcast %cst_46 : f32 to vector<24x1xf32>
    %141 = arith.addf %137, %140 : vector<24x1xf32>
    %142 = math.rsqrt %141 : vector<24x1xf32>
    %143 = vector.broadcast %142 : vector<24x1xf32> to vector<24x32xf32>
    %144 = arith.mulf %139, %143 : vector<24x32xf32>
    %145 = vector.broadcast %124 : vector<1x32xf32> to vector<24x32xf32>
    %146 = arith.mulf %144, %145 : vector<24x32xf32>
    %147 = vector.broadcast %126 : vector<1x32xf32> to vector<24x32xf32>
    %148 = arith.addf %146, %147 : vector<24x32xf32>
    %149 = arith.truncf %148 : vector<24x32xf32> to vector<24x32xbf16>
    %c0_47 = arith.constant 0 : index
    %c0_48 = arith.constant 0 : index
    %c0_49 = arith.constant 0 : index
    %150 = vector.load %arg10[%c0_47, %c0_48, %c0_49] : memref<2x32x64xbf16, #tpu.memory_space<vmem>>, vector<1x32x64xbf16>
    %151 = vector.shape_cast %150 : vector<1x32x64xbf16> to vector<32x64xbf16>
    %cst_50 = arith.constant dense<0.000000e+00> : vector<24x64xf32>
    %152 = tpu.matmul %149, %151, %cst_50 {dimension_numbers = #tpu.dot_dimension_numbers<[1], [0], [0], [1], [0, 0, 1, 1], [], []>} : vector<24x32xbf16>, vector<32x64xbf16>, vector<24x64xf32> -> vector<24x64xf32>
    %c0_51 = arith.constant 0 : index
    %c0_52 = arith.constant 0 : index
    %c0_53 = arith.constant 0 : index
    %153 = vector.load %arg11[%c0_51, %c0_52, %c0_53] : memref<2x1x64xf32, #tpu.memory_space<vmem>>, vector<1x1x64xf32>
    %154 = vector.shape_cast %153 : vector<1x1x64xf32> to vector<1x64xf32>
    %155 = vector.broadcast %154 : vector<1x64xf32> to vector<24x64xf32>
    %156 = arith.addf %152, %155 : vector<24x64xf32>
    %cst_54 = arith.constant 0.000000e+00 : f32
    %157 = vector.broadcast %cst_54 : f32 to vector<24x64xf32>
    %158 = arith.maximumf %156, %157 : vector<24x64xf32>
    %159 = arith.truncf %158 : vector<24x64xf32> to vector<24x64xbf16>
    %c0_55 = arith.constant 0 : index
    %c0_56 = arith.constant 0 : index
    %c0_57 = arith.constant 0 : index
    %160 = vector.load %arg12[%c0_55, %c0_56, %c0_57] : memref<2x64x32xbf16, #tpu.memory_space<vmem>>, vector<1x64x32xbf16>
    %161 = vector.shape_cast %160 : vector<1x64x32xbf16> to vector<64x32xbf16>
    %cst_58 = arith.constant dense<0.000000e+00> : vector<24x32xf32>
    %162 = tpu.matmul %159, %161, %cst_58 {dimension_numbers = #tpu.dot_dimension_numbers<[1], [0], [0], [1], [0, 0, 1, 1], [], []>} : vector<24x64xbf16>, vector<64x32xbf16>, vector<24x32xf32> -> vector<24x32xf32>
    %c0_59 = arith.constant 0 : index
    %c0_60 = arith.constant 0 : index
    %c0_61 = arith.constant 0 : index
    %163 = vector.load %arg13[%c0_59, %c0_60, %c0_61] : memref<2x1x32xf32, #tpu.memory_space<vmem>>, vector<1x1x32xf32>
    %164 = vector.shape_cast %163 : vector<1x1x32xf32> to vector<1x32xf32>
    %165 = vector.broadcast %164 : vector<1x32xf32> to vector<24x32xf32>
    %166 = arith.addf %162, %165 : vector<24x32xf32>
    %167 = arith.addf %148, %166 : vector<24x32xf32>
    %c0_62 = arith.constant 0 : index
    %c0_63 = arith.constant 0 : index
    %c0_64 = arith.constant 0 : index
    %168 = vector.load %arg14[%c0_62, %c0_63, %c0_64] : memref<2x1x32xf32, #tpu.memory_space<vmem>>, vector<1x1x32xf32>
    %169 = vector.shape_cast %168 : vector<1x1x32xf32> to vector<1x32xf32>
    %c0_65 = arith.constant 0 : index
    %c0_66 = arith.constant 0 : index
    %c0_67 = arith.constant 0 : index
    %170 = vector.load %arg15[%c0_65, %c0_66, %c0_67] : memref<2x1x32xf32, #tpu.memory_space<vmem>>, vector<1x1x32xf32>
    %171 = vector.shape_cast %170 : vector<1x1x32xf32> to vector<1x32xf32>
    %cst_68 = arith.constant dense<0.000000e+00> : vector<24xf32>
    %172 = vector.multi_reduction <add>, %167, %cst_68 [1] : vector<24x32xf32> to vector<24xf32>
    %173 = vector.shape_cast %172 : vector<24xf32> to vector<24x1xf32>
    %cst_69 = arith.constant 3.200000e+01 : f32
    %174 = vector.broadcast %cst_69 : f32 to vector<24x1xf32>
    %175 = arith.divf %173, %174 : vector<24x1xf32>
    %176 = vector.broadcast %175 : vector<24x1xf32> to vector<24x32xf32>
    %177 = arith.subf %167, %176 : vector<24x32xf32>
    %178 = arith.mulf %177, %177 : vector<24x32xf32>
    %cst_70 = arith.constant dense<0.000000e+00> : vector<24xf32>
    %179 = vector.multi_reduction <add>, %178, %cst_70 [1] : vector<24x32xf32> to vector<24xf32>
    %180 = vector.shape_cast %179 : vector<24xf32> to vector<24x1xf32>
    %cst_71 = arith.constant 3.200000e+01 : f32
    %181 = vector.broadcast %cst_71 : f32 to vector<24x1xf32>
    %182 = arith.divf %180, %181 : vector<24x1xf32>
    %183 = vector.broadcast %175 : vector<24x1xf32> to vector<24x32xf32>
    %184 = arith.subf %167, %183 : vector<24x32xf32>
    %cst_72 = arith.constant 9.99999974E-6 : f32
    %185 = vector.broadcast %cst_72 : f32 to vector<24x1xf32>
    %186 = arith.addf %182, %185 : vector<24x1xf32>
    %187 = math.rsqrt %186 : vector<24x1xf32>
    %188 = vector.broadcast %187 : vector<24x1xf32> to vector<24x32xf32>
    %189 = arith.mulf %184, %188 : vector<24x32xf32>
    %190 = vector.broadcast %169 : vector<1x32xf32> to vector<24x32xf32>
    %191 = arith.mulf %189, %190 : vector<24x32xf32>
    %192 = vector.broadcast %171 : vector<1x32xf32> to vector<24x32xf32>
    %193 = arith.addf %191, %192 : vector<24x32xf32>
    %194 = arith.truncf %193 : vector<24x32xf32> to vector<24x32xbf16>
    %c1 = arith.constant 1 : index
    %c0_73 = arith.constant 0 : index
    %c0_74 = arith.constant 0 : index
    %195 = vector.load %arg4[%c1, %c0_73, %c0_74] : memref<2x32x96xbf16, #tpu.memory_space<vmem>>, vector<1x32x96xbf16>
    %196 = vector.shape_cast %195 : vector<1x32x96xbf16> to vector<32x96xbf16>
    %cst_75 = arith.constant dense<0.000000e+00> : vector<24x96xf32>
    %197 = tpu.matmul %194, %196, %cst_75 {dimension_numbers = #tpu.dot_dimension_numbers<[1], [0], [0], [1], [0, 0, 1, 1], [], []>} : vector<24x32xbf16>, vector<32x96xbf16>, vector<24x96xf32> -> vector<24x96xf32>
    %c1_76 = arith.constant 1 : index
    %c0_77 = arith.constant 0 : index
    %c0_78 = arith.constant 0 : index
    %198 = vector.load %arg5[%c1_76, %c0_77, %c0_78] : memref<2x1x96xf32, #tpu.memory_space<vmem>>, vector<1x1x96xf32>
    %199 = vector.shape_cast %198 : vector<1x1x96xf32> to vector<1x96xf32>
    %200 = vector.broadcast %199 : vector<1x96xf32> to vector<24x96xf32>
    %201 = arith.addf %197, %200 : vector<24x96xf32>
    %202 = vector.extract_strided_slice %201 {offsets = [0, 0], sizes = [24, 8], strides = [1, 1]} : vector<24x96xf32> to vector<24x8xf32>
    %203 = vector.shape_cast %202 : vector<24x8xf32> to vector<1x24x8xf32>
    %204 = vector.extract_strided_slice %201 {offsets = [0, 32], sizes = [24, 8], strides = [1, 1]} : vector<24x96xf32> to vector<24x8xf32>
    %205 = vector.shape_cast %204 : vector<24x8xf32> to vector<1x24x8xf32>
    %206 = vector.extract_strided_slice %201 {offsets = [0, 64], sizes = [24, 8], strides = [1, 1]} : vector<24x96xf32> to vector<24x8xf32>
    %207 = vector.shape_cast %206 : vector<24x8xf32> to vector<1x24x8xf32>
    %208 = arith.truncf %203 : vector<1x24x8xf32> to vector<1x24x8xbf16>
    %209 = arith.truncf %205 : vector<1x24x8xf32> to vector<1x24x8xbf16>
    "tpu.trace_start"() <{level = 10 : i32, message = "bqd,bkd->bqk"}> : () -> ()
    %cst_79 = arith.constant dense<0.000000e+00> : vector<1x24x24xf32>
    %210 = tpu.matmul %208, %209, %cst_79 {dimension_numbers = #tpu.dot_dimension_numbers<[2], [2], [1], [1], [0, 0, 0, 1, 1, 1], [0], [0]>} : vector<1x24x8xbf16>, vector<1x24x8xbf16>, vector<1x24x24xf32> -> vector<1x24x24xf32>
    "tpu.trace_stop"() : () -> ()
    %cst_80 = arith.constant dense<0xFF800000> : vector<1x24xf32>
    %211 = vector.multi_reduction <maximumf>, %210, %cst_80 [2] : vector<1x24x24xf32> to vector<1x24xf32>
    %212 = vector.shape_cast %211 : vector<1x24xf32> to vector<1x24x1xf32>
    %213 = vector.broadcast %212 : vector<1x24x1xf32> to vector<1x24x24xf32>
    %214 = arith.subf %210, %213 : vector<1x24x24xf32>
    %215 = math.exp %214 : vector<1x24x24xf32>
    %216 = arith.mulf %215, %11 : vector<1x24x24xf32>
    %cst_81 = arith.constant dense<0.000000e+00> : vector<1x24xf32>
    %217 = vector.multi_reduction <add>, %216, %cst_81 [2] : vector<1x24x24xf32> to vector<1x24xf32>
    %218 = vector.shape_cast %217 : vector<1x24xf32> to vector<1x24x1xf32>
    %219 = tpu.reciprocal %218 {approx = true} : vector<1x24x1xf32> -> vector<1x24x1xf32>
    %220 = vector.broadcast %219 : vector<1x24x1xf32> to vector<1x24x24xf32>
    %221 = arith.mulf %216, %220 : vector<1x24x24xf32>
    %222 = arith.truncf %221 : vector<1x24x24xf32> to vector<1x24x24xbf16>
    %223 = arith.truncf %207 : vector<1x24x8xf32> to vector<1x24x8xbf16>
    "tpu.trace_start"() <{level = 10 : i32, message = "bqk,bkd->bqd"}> : () -> ()
    %cst_82 = arith.constant dense<0.000000e+00> : vector<1x24x8xf32>
    %224 = tpu.matmul %222, %223, %cst_82 {dimension_numbers = #tpu.dot_dimension_numbers<[2], [1], [1], [2], [0, 0, 0, 1, 1, 2], [0], [0]>} : vector<1x24x24xbf16>, vector<1x24x8xbf16>, vector<1x24x8xf32> -> vector<1x24x8xf32>
    "tpu.trace_stop"() : () -> ()
    %225 = vector.extract_strided_slice %201 {offsets = [0, 8], sizes = [24, 8], strides = [1, 1]} : vector<24x96xf32> to vector<24x8xf32>
    %226 = vector.shape_cast %225 : vector<24x8xf32> to vector<1x24x8xf32>
    %227 = vector.extract_strided_slice %201 {offsets = [0, 40], sizes = [24, 8], strides = [1, 1]} : vector<24x96xf32> to vector<24x8xf32>
    %228 = vector.shape_cast %227 : vector<24x8xf32> to vector<1x24x8xf32>
    %229 = vector.extract_strided_slice %201 {offsets = [0, 72], sizes = [24, 8], strides = [1, 1]} : vector<24x96xf32> to vector<24x8xf32>
    %230 = vector.shape_cast %229 : vector<24x8xf32> to vector<1x24x8xf32>
    %231 = arith.truncf %226 : vector<1x24x8xf32> to vector<1x24x8xbf16>
    %232 = arith.truncf %228 : vector<1x24x8xf32> to vector<1x24x8xbf16>
    "tpu.trace_start"() <{level = 10 : i32, message = "bqd,bkd->bqk"}> : () -> ()
    %cst_83 = arith.constant dense<0.000000e+00> : vector<1x24x24xf32>
    %233 = tpu.matmul %231, %232, %cst_83 {dimension_numbers = #tpu.dot_dimension_numbers<[2], [2], [1], [1], [0, 0, 0, 1, 1, 1], [0], [0]>} : vector<1x24x8xbf16>, vector<1x24x8xbf16>, vector<1x24x24xf32> -> vector<1x24x24xf32>
    "tpu.trace_stop"() : () -> ()
    %cst_84 = arith.constant dense<0xFF800000> : vector<1x24xf32>
    %234 = vector.multi_reduction <maximumf>, %233, %cst_84 [2] : vector<1x24x24xf32> to vector<1x24xf32>
    %235 = vector.shape_cast %234 : vector<1x24xf32> to vector<1x24x1xf32>
    %236 = vector.broadcast %235 : vector<1x24x1xf32> to vector<1x24x24xf32>
    %237 = arith.subf %233, %236 : vector<1x24x24xf32>
    %238 = math.exp %237 : vector<1x24x24xf32>
    %239 = arith.mulf %238, %11 : vector<1x24x24xf32>
    %cst_85 = arith.constant dense<0.000000e+00> : vector<1x24xf32>
    %240 = vector.multi_reduction <add>, %239, %cst_85 [2] : vector<1x24x24xf32> to vector<1x24xf32>
    %241 = vector.shape_cast %240 : vector<1x24xf32> to vector<1x24x1xf32>
    %242 = tpu.reciprocal %241 {approx = true} : vector<1x24x1xf32> -> vector<1x24x1xf32>
    %243 = vector.broadcast %242 : vector<1x24x1xf32> to vector<1x24x24xf32>
    %244 = arith.mulf %239, %243 : vector<1x24x24xf32>
    %245 = arith.truncf %244 : vector<1x24x24xf32> to vector<1x24x24xbf16>
    %246 = arith.truncf %230 : vector<1x24x8xf32> to vector<1x24x8xbf16>
    "tpu.trace_start"() <{level = 10 : i32, message = "bqk,bkd->bqd"}> : () -> ()
    %cst_86 = arith.constant dense<0.000000e+00> : vector<1x24x8xf32>
    %247 = tpu.matmul %245, %246, %cst_86 {dimension_numbers = #tpu.dot_dimension_numbers<[2], [1], [1], [2], [0, 0, 0, 1, 1, 2], [0], [0]>} : vector<1x24x24xbf16>, vector<1x24x8xbf16>, vector<1x24x8xf32> -> vector<1x24x8xf32>
    "tpu.trace_stop"() : () -> ()
    %248 = vector.extract_strided_slice %201 {offsets = [0, 16], sizes = [24, 8], strides = [1, 1]} : vector<24x96xf32> to vector<24x8xf32>
    %249 = vector.shape_cast %248 : vector<24x8xf32> to vector<1x24x8xf32>
    %250 = vector.extract_strided_slice %201 {offsets = [0, 48], sizes = [24, 8], strides = [1, 1]} : vector<24x96xf32> to vector<24x8xf32>
    %251 = vector.shape_cast %250 : vector<24x8xf32> to vector<1x24x8xf32>
    %252 = vector.extract_strided_slice %201 {offsets = [0, 80], sizes = [24, 8], strides = [1, 1]} : vector<24x96xf32> to vector<24x8xf32>
    %253 = vector.shape_cast %252 : vector<24x8xf32> to vector<1x24x8xf32>
    %254 = arith.truncf %249 : vector<1x24x8xf32> to vector<1x24x8xbf16>
    %255 = arith.truncf %251 : vector<1x24x8xf32> to vector<1x24x8xbf16>
    "tpu.trace_start"() <{level = 10 : i32, message = "bqd,bkd->bqk"}> : () -> ()
    %cst_87 = arith.constant dense<0.000000e+00> : vector<1x24x24xf32>
    %256 = tpu.matmul %254, %255, %cst_87 {dimension_numbers = #tpu.dot_dimension_numbers<[2], [2], [1], [1], [0, 0, 0, 1, 1, 1], [0], [0]>} : vector<1x24x8xbf16>, vector<1x24x8xbf16>, vector<1x24x24xf32> -> vector<1x24x24xf32>
    "tpu.trace_stop"() : () -> ()
    %cst_88 = arith.constant dense<0xFF800000> : vector<1x24xf32>
    %257 = vector.multi_reduction <maximumf>, %256, %cst_88 [2] : vector<1x24x24xf32> to vector<1x24xf32>
    %258 = vector.shape_cast %257 : vector<1x24xf32> to vector<1x24x1xf32>
    %259 = vector.broadcast %258 : vector<1x24x1xf32> to vector<1x24x24xf32>
    %260 = arith.subf %256, %259 : vector<1x24x24xf32>
    %261 = math.exp %260 : vector<1x24x24xf32>
    %262 = arith.mulf %261, %11 : vector<1x24x24xf32>
    %cst_89 = arith.constant dense<0.000000e+00> : vector<1x24xf32>
    %263 = vector.multi_reduction <add>, %262, %cst_89 [2] : vector<1x24x24xf32> to vector<1x24xf32>
    %264 = vector.shape_cast %263 : vector<1x24xf32> to vector<1x24x1xf32>
    %265 = tpu.reciprocal %264 {approx = true} : vector<1x24x1xf32> -> vector<1x24x1xf32>
    %266 = vector.broadcast %265 : vector<1x24x1xf32> to vector<1x24x24xf32>
    %267 = arith.mulf %262, %266 : vector<1x24x24xf32>
    %268 = arith.truncf %267 : vector<1x24x24xf32> to vector<1x24x24xbf16>
    %269 = arith.truncf %253 : vector<1x24x8xf32> to vector<1x24x8xbf16>
    "tpu.trace_start"() <{level = 10 : i32, message = "bqk,bkd->bqd"}> : () -> ()
    %cst_90 = arith.constant dense<0.000000e+00> : vector<1x24x8xf32>
    %270 = tpu.matmul %268, %269, %cst_90 {dimension_numbers = #tpu.dot_dimension_numbers<[2], [1], [1], [2], [0, 0, 0, 1, 1, 2], [0], [0]>} : vector<1x24x24xbf16>, vector<1x24x8xbf16>, vector<1x24x8xf32> -> vector<1x24x8xf32>
    "tpu.trace_stop"() : () -> ()
    %271 = vector.extract_strided_slice %201 {offsets = [0, 24], sizes = [24, 8], strides = [1, 1]} : vector<24x96xf32> to vector<24x8xf32>
    %272 = vector.shape_cast %271 : vector<24x8xf32> to vector<1x24x8xf32>
    %273 = vector.extract_strided_slice %201 {offsets = [0, 56], sizes = [24, 8], strides = [1, 1]} : vector<24x96xf32> to vector<24x8xf32>
    %274 = vector.shape_cast %273 : vector<24x8xf32> to vector<1x24x8xf32>
    %275 = vector.extract_strided_slice %201 {offsets = [0, 88], sizes = [24, 8], strides = [1, 1]} : vector<24x96xf32> to vector<24x8xf32>
    %276 = vector.shape_cast %275 : vector<24x8xf32> to vector<1x24x8xf32>
    %277 = arith.truncf %272 : vector<1x24x8xf32> to vector<1x24x8xbf16>
    %278 = arith.truncf %274 : vector<1x24x8xf32> to vector<1x24x8xbf16>
    "tpu.trace_start"() <{level = 10 : i32, message = "bqd,bkd->bqk"}> : () -> ()
    %cst_91 = arith.constant dense<0.000000e+00> : vector<1x24x24xf32>
    %279 = tpu.matmul %277, %278, %cst_91 {dimension_numbers = #tpu.dot_dimension_numbers<[2], [2], [1], [1], [0, 0, 0, 1, 1, 1], [0], [0]>} : vector<1x24x8xbf16>, vector<1x24x8xbf16>, vector<1x24x24xf32> -> vector<1x24x24xf32>
    "tpu.trace_stop"() : () -> ()
    %cst_92 = arith.constant dense<0xFF800000> : vector<1x24xf32>
    %280 = vector.multi_reduction <maximumf>, %279, %cst_92 [2] : vector<1x24x24xf32> to vector<1x24xf32>
    %281 = vector.shape_cast %280 : vector<1x24xf32> to vector<1x24x1xf32>
    %282 = vector.broadcast %281 : vector<1x24x1xf32> to vector<1x24x24xf32>
    %283 = arith.subf %279, %282 : vector<1x24x24xf32>
    %284 = math.exp %283 : vector<1x24x24xf32>
    %285 = arith.mulf %284, %11 : vector<1x24x24xf32>
    %cst_93 = arith.constant dense<0.000000e+00> : vector<1x24xf32>
    %286 = vector.multi_reduction <add>, %285, %cst_93 [2] : vector<1x24x24xf32> to vector<1x24xf32>
    %287 = vector.shape_cast %286 : vector<1x24xf32> to vector<1x24x1xf32>
    %288 = tpu.reciprocal %287 {approx = true} : vector<1x24x1xf32> -> vector<1x24x1xf32>
    %289 = vector.broadcast %288 : vector<1x24x1xf32> to vector<1x24x24xf32>
    %290 = arith.mulf %285, %289 : vector<1x24x24xf32>
    %291 = arith.truncf %290 : vector<1x24x24xf32> to vector<1x24x24xbf16>
    %292 = arith.truncf %276 : vector<1x24x8xf32> to vector<1x24x8xbf16>
    "tpu.trace_start"() <{level = 10 : i32, message = "bqk,bkd->bqd"}> : () -> ()
    %cst_94 = arith.constant dense<0.000000e+00> : vector<1x24x8xf32>
    %293 = tpu.matmul %291, %292, %cst_94 {dimension_numbers = #tpu.dot_dimension_numbers<[2], [1], [1], [2], [0, 0, 0, 1, 1, 2], [0], [0]>} : vector<1x24x24xbf16>, vector<1x24x8xbf16>, vector<1x24x8xf32> -> vector<1x24x8xf32>
    "tpu.trace_stop"() : () -> ()
    %294 = tpu.concatenate %224, %247, %270, %293 in 2 : vector<1x24x8xf32>, vector<1x24x8xf32>, vector<1x24x8xf32>, vector<1x24x8xf32> -> vector<1x24x32xf32>
    %295 = vector.shape_cast %294 : vector<1x24x32xf32> to vector<24x32xf32>
    %296 = arith.truncf %295 : vector<24x32xf32> to vector<24x32xbf16>
    %c1_95 = arith.constant 1 : index
    %c0_96 = arith.constant 0 : index
    %c0_97 = arith.constant 0 : index
    %297 = vector.load %arg6[%c1_95, %c0_96, %c0_97] : memref<2x32x32xbf16, #tpu.memory_space<vmem>>, vector<1x32x32xbf16>
    %298 = vector.shape_cast %297 : vector<1x32x32xbf16> to vector<32x32xbf16>
    %cst_98 = arith.constant dense<0.000000e+00> : vector<24x32xf32>
    %299 = tpu.matmul %296, %298, %cst_98 {dimension_numbers = #tpu.dot_dimension_numbers<[1], [0], [0], [1], [0, 0, 1, 1], [], []>} : vector<24x32xbf16>, vector<32x32xbf16>, vector<24x32xf32> -> vector<24x32xf32>
    %c1_99 = arith.constant 1 : index
    %c0_100 = arith.constant 0 : index
    %c0_101 = arith.constant 0 : index
    %300 = vector.load %arg7[%c1_99, %c0_100, %c0_101] : memref<2x1x32xf32, #tpu.memory_space<vmem>>, vector<1x1x32xf32>
    %301 = vector.shape_cast %300 : vector<1x1x32xf32> to vector<1x32xf32>
    %302 = vector.broadcast %301 : vector<1x32xf32> to vector<24x32xf32>
    %303 = arith.addf %299, %302 : vector<24x32xf32>
    %304 = arith.addf %193, %303 : vector<24x32xf32>
    %c1_102 = arith.constant 1 : index
    %c0_103 = arith.constant 0 : index
    %c0_104 = arith.constant 0 : index
    %305 = vector.load %arg8[%c1_102, %c0_103, %c0_104] : memref<2x1x32xf32, #tpu.memory_space<vmem>>, vector<1x1x32xf32>
    %306 = vector.shape_cast %305 : vector<1x1x32xf32> to vector<1x32xf32>
    %c1_105 = arith.constant 1 : index
    %c0_106 = arith.constant 0 : index
    %c0_107 = arith.constant 0 : index
    %307 = vector.load %arg9[%c1_105, %c0_106, %c0_107] : memref<2x1x32xf32, #tpu.memory_space<vmem>>, vector<1x1x32xf32>
    %308 = vector.shape_cast %307 : vector<1x1x32xf32> to vector<1x32xf32>
    %cst_108 = arith.constant dense<0.000000e+00> : vector<24xf32>
    %309 = vector.multi_reduction <add>, %304, %cst_108 [1] : vector<24x32xf32> to vector<24xf32>
    %310 = vector.shape_cast %309 : vector<24xf32> to vector<24x1xf32>
    %cst_109 = arith.constant 3.200000e+01 : f32
    %311 = vector.broadcast %cst_109 : f32 to vector<24x1xf32>
    %312 = arith.divf %310, %311 : vector<24x1xf32>
    %313 = vector.broadcast %312 : vector<24x1xf32> to vector<24x32xf32>
    %314 = arith.subf %304, %313 : vector<24x32xf32>
    %315 = arith.mulf %314, %314 : vector<24x32xf32>
    %cst_110 = arith.constant dense<0.000000e+00> : vector<24xf32>
    %316 = vector.multi_reduction <add>, %315, %cst_110 [1] : vector<24x32xf32> to vector<24xf32>
    %317 = vector.shape_cast %316 : vector<24xf32> to vector<24x1xf32>
    %cst_111 = arith.constant 3.200000e+01 : f32
    %318 = vector.broadcast %cst_111 : f32 to vector<24x1xf32>
    %319 = arith.divf %317, %318 : vector<24x1xf32>
    %320 = vector.broadcast %312 : vector<24x1xf32> to vector<24x32xf32>
    %321 = arith.subf %304, %320 : vector<24x32xf32>
    %cst_112 = arith.constant 9.99999974E-6 : f32
    %322 = vector.broadcast %cst_112 : f32 to vector<24x1xf32>
    %323 = arith.addf %319, %322 : vector<24x1xf32>
    %324 = math.rsqrt %323 : vector<24x1xf32>
    %325 = vector.broadcast %324 : vector<24x1xf32> to vector<24x32xf32>
    %326 = arith.mulf %321, %325 : vector<24x32xf32>
    %327 = vector.broadcast %306 : vector<1x32xf32> to vector<24x32xf32>
    %328 = arith.mulf %326, %327 : vector<24x32xf32>
    %329 = vector.broadcast %308 : vector<1x32xf32> to vector<24x32xf32>
    %330 = arith.addf %328, %329 : vector<24x32xf32>
    %331 = arith.truncf %330 : vector<24x32xf32> to vector<24x32xbf16>
    %c1_113 = arith.constant 1 : index
    %c0_114 = arith.constant 0 : index
    %c0_115 = arith.constant 0 : index
    %332 = vector.load %arg10[%c1_113, %c0_114, %c0_115] : memref<2x32x64xbf16, #tpu.memory_space<vmem>>, vector<1x32x64xbf16>
    %333 = vector.shape_cast %332 : vector<1x32x64xbf16> to vector<32x64xbf16>
    %cst_116 = arith.constant dense<0.000000e+00> : vector<24x64xf32>
    %334 = tpu.matmul %331, %333, %cst_116 {dimension_numbers = #tpu.dot_dimension_numbers<[1], [0], [0], [1], [0, 0, 1, 1], [], []>} : vector<24x32xbf16>, vector<32x64xbf16>, vector<24x64xf32> -> vector<24x64xf32>
    %c1_117 = arith.constant 1 : index
    %c0_118 = arith.constant 0 : index
    %c0_119 = arith.constant 0 : index
    %335 = vector.load %arg11[%c1_117, %c0_118, %c0_119] : memref<2x1x64xf32, #tpu.memory_space<vmem>>, vector<1x1x64xf32>
    %336 = vector.shape_cast %335 : vector<1x1x64xf32> to vector<1x64xf32>
    %337 = vector.broadcast %336 : vector<1x64xf32> to vector<24x64xf32>
    %338 = arith.addf %334, %337 : vector<24x64xf32>
    %cst_120 = arith.constant 0.000000e+00 : f32
    %339 = vector.broadcast %cst_120 : f32 to vector<24x64xf32>
    %340 = arith.maximumf %338, %339 : vector<24x64xf32>
    %341 = arith.truncf %340 : vector<24x64xf32> to vector<24x64xbf16>
    %c1_121 = arith.constant 1 : index
    %c0_122 = arith.constant 0 : index
    %c0_123 = arith.constant 0 : index
    %342 = vector.load %arg12[%c1_121, %c0_122, %c0_123] : memref<2x64x32xbf16, #tpu.memory_space<vmem>>, vector<1x64x32xbf16>
    %343 = vector.shape_cast %342 : vector<1x64x32xbf16> to vector<64x32xbf16>
    %cst_124 = arith.constant dense<0.000000e+00> : vector<24x32xf32>
    %344 = tpu.matmul %341, %343, %cst_124 {dimension_numbers = #tpu.dot_dimension_numbers<[1], [0], [0], [1], [0, 0, 1, 1], [], []>} : vector<24x64xbf16>, vector<64x32xbf16>, vector<24x32xf32> -> vector<24x32xf32>
    %c1_125 = arith.constant 1 : index
    %c0_126 = arith.constant 0 : index
    %c0_127 = arith.constant 0 : index
    %345 = vector.load %arg13[%c1_125, %c0_126, %c0_127] : memref<2x1x32xf32, #tpu.memory_space<vmem>>, vector<1x1x32xf32>
    %346 = vector.shape_cast %345 : vector<1x1x32xf32> to vector<1x32xf32>
    %347 = vector.broadcast %346 : vector<1x32xf32> to vector<24x32xf32>
    %348 = arith.addf %344, %347 : vector<24x32xf32>
    %349 = arith.addf %330, %348 : vector<24x32xf32>
    %c1_128 = arith.constant 1 : index
    %c0_129 = arith.constant 0 : index
    %c0_130 = arith.constant 0 : index
    %350 = vector.load %arg14[%c1_128, %c0_129, %c0_130] : memref<2x1x32xf32, #tpu.memory_space<vmem>>, vector<1x1x32xf32>
    %351 = vector.shape_cast %350 : vector<1x1x32xf32> to vector<1x32xf32>
    %c1_131 = arith.constant 1 : index
    %c0_132 = arith.constant 0 : index
    %c0_133 = arith.constant 0 : index
    %352 = vector.load %arg15[%c1_131, %c0_132, %c0_133] : memref<2x1x32xf32, #tpu.memory_space<vmem>>, vector<1x1x32xf32>
    %353 = vector.shape_cast %352 : vector<1x1x32xf32> to vector<1x32xf32>
    %cst_134 = arith.constant dense<0.000000e+00> : vector<24xf32>
    %354 = vector.multi_reduction <add>, %349, %cst_134 [1] : vector<24x32xf32> to vector<24xf32>
    %355 = vector.shape_cast %354 : vector<24xf32> to vector<24x1xf32>
    %cst_135 = arith.constant 3.200000e+01 : f32
    %356 = vector.broadcast %cst_135 : f32 to vector<24x1xf32>
    %357 = arith.divf %355, %356 : vector<24x1xf32>
    %358 = vector.broadcast %357 : vector<24x1xf32> to vector<24x32xf32>
    %359 = arith.subf %349, %358 : vector<24x32xf32>
    %360 = arith.mulf %359, %359 : vector<24x32xf32>
    %cst_136 = arith.constant dense<0.000000e+00> : vector<24xf32>
    %361 = vector.multi_reduction <add>, %360, %cst_136 [1] : vector<24x32xf32> to vector<24xf32>
    %362 = vector.shape_cast %361 : vector<24xf32> to vector<24x1xf32>
    %cst_137 = arith.constant 3.200000e+01 : f32
    %363 = vector.broadcast %cst_137 : f32 to vector<24x1xf32>
    %364 = arith.divf %362, %363 : vector<24x1xf32>
    %365 = vector.broadcast %357 : vector<24x1xf32> to vector<24x32xf32>
    %366 = arith.subf %349, %365 : vector<24x32xf32>
    %cst_138 = arith.constant 9.99999974E-6 : f32
    %367 = vector.broadcast %cst_138 : f32 to vector<24x1xf32>
    %368 = arith.addf %364, %367 : vector<24x1xf32>
    %369 = math.rsqrt %368 : vector<24x1xf32>
    %370 = vector.broadcast %369 : vector<24x1xf32> to vector<24x32xf32>
    %371 = arith.mulf %366, %370 : vector<24x32xf32>
    %372 = vector.broadcast %351 : vector<1x32xf32> to vector<24x32xf32>
    %373 = arith.mulf %371, %372 : vector<24x32xf32>
    %374 = vector.broadcast %353 : vector<1x32xf32> to vector<24x32xf32>
    %375 = arith.addf %373, %374 : vector<24x32xf32>
    %376 = vector.extract_strided_slice %375 {offsets = [16, 0], sizes = [1, 32], strides = [1, 1]} : vector<24x32xf32> to vector<1x32xf32>
    %c0_139 = arith.constant 0 : index
    %c0_140 = arith.constant 0 : index
    %377 = vector.load %arg16[%c0_139, %c0_140] : memref<1x32xf32, #tpu.memory_space<vmem>>, vector<1x32xf32>
    %c0_141 = arith.constant 0 : index
    %c0_142 = arith.constant 0 : index
    %378 = vector.load %arg17[%c0_141, %c0_142] : memref<1x32xf32, #tpu.memory_space<vmem>>, vector<1x32xf32>
    %cst_143 = arith.constant dense<0.000000e+00> : vector<1xf32>
    %379 = vector.multi_reduction <add>, %376, %cst_143 [1] : vector<1x32xf32> to vector<1xf32>
    %380 = vector.shape_cast %379 : vector<1xf32> to vector<1x1xf32>
    %cst_144 = arith.constant 3.200000e+01 : f32
    %381 = vector.broadcast %cst_144 : f32 to vector<1x1xf32>
    %382 = arith.divf %380, %381 : vector<1x1xf32>
    %383 = vector.broadcast %382 : vector<1x1xf32> to vector<1x32xf32>
    %384 = arith.subf %376, %383 : vector<1x32xf32>
    %385 = arith.mulf %384, %384 : vector<1x32xf32>
    %cst_145 = arith.constant dense<0.000000e+00> : vector<1xf32>
    %386 = vector.multi_reduction <add>, %385, %cst_145 [1] : vector<1x32xf32> to vector<1xf32>
    %387 = vector.shape_cast %386 : vector<1xf32> to vector<1x1xf32>
    %cst_146 = arith.constant 3.200000e+01 : f32
    %388 = vector.broadcast %cst_146 : f32 to vector<1x1xf32>
    %389 = arith.divf %387, %388 : vector<1x1xf32>
    %390 = vector.broadcast %382 : vector<1x1xf32> to vector<1x32xf32>
    %391 = arith.subf %376, %390 : vector<1x32xf32>
    %cst_147 = arith.constant 9.99999974E-6 : f32
    %392 = vector.broadcast %cst_147 : f32 to vector<1x1xf32>
    %393 = arith.addf %389, %392 : vector<1x1xf32>
    %394 = math.rsqrt %393 : vector<1x1xf32>
    %395 = vector.broadcast %394 : vector<1x1xf32> to vector<1x32xf32>
    %396 = arith.mulf %391, %395 : vector<1x32xf32>
    %397 = arith.mulf %396, %377 : vector<1x32xf32>
    %398 = arith.addf %397, %378 : vector<1x32xf32>
    %399 = arith.truncf %398 : vector<1x32xf32> to vector<1x32xbf16>
    %c0_148 = arith.constant 0 : index
    %c0_149 = arith.constant 0 : index
    %400 = vector.load %arg18[%c0_148, %c0_149] : memref<32x128xbf16, #tpu.memory_space<vmem>>, vector<32x128xbf16>
    %cst_150 = arith.constant dense<0.000000e+00> : vector<1x128xf32>
    %401 = tpu.matmul %399, %400, %cst_150 {dimension_numbers = #tpu.dot_dimension_numbers<[1], [0], [0], [1], [0, 0, 1, 1], [], []>} : vector<1x32xbf16>, vector<32x128xbf16>, vector<1x128xf32> -> vector<1x128xf32>
    %c0_151 = arith.constant 0 : index
    %c0_152 = arith.constant 0 : index
    %402 = vector.load %arg19[%c0_151, %c0_152] : memref<1x128xf32, #tpu.memory_space<vmem>>, vector<1x128xf32>
    %403 = arith.addf %401, %402 : vector<1x128xf32>
    %c0_153 = arith.constant 0 : index
    %c0_154 = arith.constant 0 : index
    %c0_155 = arith.constant 0 : index
    %404 = vector.load %arg20[%c0_153, %c0_154, %c0_155] : memref<1x1x128xf32, #tpu.memory_space<vmem>>, vector<1x1x128xf32>
    %405 = vector.shape_cast %404 : vector<1x1x128xf32> to vector<1x128xf32>
    %406 = vector.shape_cast %403 : vector<1x128xf32> to vector<1x1x128xf32>
    tpu.vector_store %arg20[%c0_153, %c0_154, %c0_155], %406 {strides = array<i32>} : memref<1x1x128xf32, #tpu.memory_space<vmem>>, vector<1x1x128xf32>,
    return
  }
  func.func @transform_0(%arg0: i32) -> (i32, i32, i32) {
    %c0_i32 = arith.constant 0 : i32
    %c0_i32_0 = arith.constant 0 : i32
    %c0_i32_1 = arith.constant 0 : i32
    return %arg0, %c0_i32, %c0_i32_0 : i32, i32, i32
  }
  func.func @transform_1(%arg0: i32) -> (i32, i32) {
    %c0_i32 = arith.constant 0 : i32
    %c0_i32_0 = arith.constant 0 : i32
    %c0_i32_1 = arith.constant 0 : i32
    return %c0_i32, %c0_i32_0 : i32, i32
  }
  func.func @transform_2(%arg0: i32) -> (i32, i32) {
    %c0_i32 = arith.constant 0 : i32
    %c0_i32_0 = arith.constant 0 : i32
    %c0_i32_1 = arith.constant 0 : i32
    return %c0_i32, %c0_i32_0 : i32, i32
  }
  func.func @transform_3(%arg0: i32) -> (i32, i32, i32) {
    %c0_i32 = arith.constant 0 : i32
    %c0_i32_0 = arith.constant 0 : i32
    %c0_i32_1 = arith.constant 0 : i32
    %c0_i32_2 = arith.constant 0 : i32
    return %c0_i32, %c0_i32_0, %c0_i32_1 : i32, i32, i32
  }
  func.func @transform_4(%arg0: i32) -> (i32, i32, i32) {
    %c0_i32 = arith.constant 0 : i32
    %c0_i32_0 = arith.constant 0 : i32
    %c0_i32_1 = arith.constant 0 : i32
    %c0_i32_2 = arith.constant 0 : i32
    return %c0_i32, %c0_i32_0, %c0_i32_1 : i32, i32, i32
  }
  func.func @transform_5(%arg0: i32) -> (i32, i32, i32) {
    %c0_i32 = arith.constant 0 : i32
    %c0_i32_0 = arith.constant 0 : i32
    %c0_i32_1 = arith.constant 0 : i32
    %c0_i32_2 = arith.constant 0 : i32
    return %c0_i32, %c0_i32_0, %c0_i32_1 : i32, i32, i32
  }
  func.func @transform_6(%arg0: i32) -> (i32, i32, i32) {
    %c0_i32 = arith.constant 0 : i32
    %c0_i32_0 = arith.constant 0 : i32
    %c0_i32_1 = arith.constant 0 : i32
    %c0_i32_2 = arith.constant 0 : i32
    return %c0_i32, %c0_i32_0, %c0_i32_1 : i32, i32, i32
  }
  func.func @transform_7(%arg0: i32) -> (i32, i32, i32) {
    %c0_i32 = arith.constant 0 : i32
    %c0_i32_0 = arith.constant 0 : i32
    %c0_i32_1 = arith.constant 0 : i32
    %c0_i32_2 = arith.constant 0 : i32
    return %c0_i32, %c0_i32_0, %c0_i32_1 : i32, i32, i32
  }
  func.func @transform_8(%arg0: i32) -> (i32, i32, i32) {
    %c0_i32 = arith.constant 0 : i32
    %c0_i32_0 = arith.constant 0 : i32
    %c0_i32_1 = arith.constant 0 : i32
    %c0_i32_2 = arith.constant 0 : i32
    return %c0_i32, %c0_i32_0, %c0_i32_1 : i32, i32, i32
  }
  func.func @transform_9(%arg0: i32) -> (i32, i32, i32) {
    %c0_i32 = arith.constant 0 : i32
    %c0_i32_0 = arith.constant 0 : i32
    %c0_i32_1 = arith.constant 0 : i32
    %c0_i32_2 = arith.constant 0 : i32
    return %c0_i32, %c0_i32_0, %c0_i32_1 : i32, i32, i32
  }
  func.func @transform_10(%arg0: i32) -> (i32, i32, i32) {
    %c0_i32 = arith.constant 0 : i32
    %c0_i32_0 = arith.constant 0 : i32
    %c0_i32_1 = arith.constant 0 : i32
    %c0_i32_2 = arith.constant 0 : i32
    return %c0_i32, %c0_i32_0, %c0_i32_1 : i32, i32, i32
  }
  func.func @transform_11(%arg0: i32) -> (i32, i32, i32) {
    %c0_i32 = arith.constant 0 : i32
    %c0_i32_0 = arith.constant 0 : i32
    %c0_i32_1 = arith.constant 0 : i32
    %c0_i32_2 = arith.constant 0 : i32
    return %c0_i32, %c0_i32_0, %c0_i32_1 : i32, i32, i32
  }
  func.func @transform_12(%arg0: i32) -> (i32, i32, i32) {
    %c0_i32 = arith.constant 0 : i32
    %c0_i32_0 = arith.constant 0 : i32
    %c0_i32_1 = arith.constant 0 : i32
    %c0_i32_2 = arith.constant 0 : i32
    return %c0_i32, %c0_i32_0, %c0_i32_1 : i32, i32, i32
  }
  func.func @transform_13(%arg0: i32) -> (i32, i32, i32) {
    %c0_i32 = arith.constant 0 : i32
    %c0_i32_0 = arith.constant 0 : i32
    %c0_i32_1 = arith.constant 0 : i32
    %c0_i32_2 = arith.constant 0 : i32
    return %c0_i32, %c0_i32_0, %c0_i32_1 : i32, i32, i32
  }
  func.func @transform_14(%arg0: i32) -> (i32, i32, i32) {
    %c0_i32 = arith.constant 0 : i32
    %c0_i32_0 = arith.constant 0 : i32
    %c0_i32_1 = arith.constant 0 : i32
    %c0_i32_2 = arith.constant 0 : i32
    return %c0_i32, %c0_i32_0, %c0_i32_1 : i32, i32, i32
  }
  func.func @transform_15(%arg0: i32) -> (i32, i32) {
    %c0_i32 = arith.constant 0 : i32
    %c0_i32_0 = arith.constant 0 : i32
    %c0_i32_1 = arith.constant 0 : i32
    return %c0_i32, %c0_i32_0 : i32, i32
  }
  func.func @transform_16(%arg0: i32) -> (i32, i32) {
    %c0_i32 = arith.constant 0 : i32
    %c0_i32_0 = arith.constant 0 : i32
    %c0_i32_1 = arith.constant 0 : i32
    return %c0_i32, %c0_i32_0 : i32, i32
  }
  func.func @transform_17(%arg0: i32) -> (i32, i32) {
    %c0_i32 = arith.constant 0 : i32
    %c0_i32_0 = arith.constant 0 : i32
    %c0_i32_1 = arith.constant 0 : i32
    return %c0_i32, %c0_i32_0 : i32, i32
  }
  func.func @transform_18(%arg0: i32) -> (i32, i32) {
    %c0_i32 = arith.constant 0 : i32
    %c0_i32_0 = arith.constant 0 : i32
    %c0_i32_1 = arith.constant 0 : i32
    return %c0_i32, %c0_i32_0 : i32, i32
  }
  func.func @transform_19(%arg0: i32) -> (i32, i32, i32) {
    %c0_i32 = arith.constant 0 : i32
    %c0_i32_0 = arith.constant 0 : i32
    %c0_i32_1 = arith.constant 0 : i32
    return %arg0, %c0_i32, %c0_i32_0 : i32, i32, i32
  }
}

</mosaic_0001>

<llo_original>
// kernel: vit_ebc_forward.1
$region0: #{vit_ebc_forward.1}
  #allocation0 [shape = 'u32[]', space=smem, size = 0x4, offset = 0x4, fixed_abs, tag = 'smem constant byte address 0x4 - core index']
  #allocation1 [shape = 'u32[144,128]{1,0:T(1,128)}', space=vmem, size = 0x12000, scoped, tag = 'internal scratch']
  %s0 = inlined_call_operand.vmem [shape: f32[2,24,128], index: 0, kind: input, shape index: {}]
  %s1 = inlined_call_operand.vmem [shape: f32[24,32], index: 1, kind: input, shape index: {}]
  %s2 = inlined_call_operand.vmem [shape: bf16[128,32], index: 2, kind: input, shape index: {}]
  %s3 = inlined_call_operand.vmem [shape: bf16[2,32,96], index: 3, kind: input, shape index: {}]
  %s4 = inlined_call_operand.vmem [shape: f32[2,1,96], index: 4, kind: input, shape index: {}]
  %s5 = inlined_call_operand.vmem [shape: bf16[2,32,32], index: 5, kind: input, shape index: {}]
  %s6 = inlined_call_operand.vmem [shape: f32[2,1,32], index: 6, kind: input, shape index: {}]
  %s7 = inlined_call_operand.vmem [shape: f32[2,1,32], index: 7, kind: input, shape index: {}]
  %s8 = inlined_call_operand.vmem [shape: f32[2,1,32], index: 8, kind: input, shape index: {}]
  %s9 = inlined_call_operand.vmem [shape: bf16[2,32,64], index: 9, kind: input, shape index: {}]
  %s10 = inlined_call_operand.vmem [shape: f32[2,1,64], index: 10, kind: input, shape index: {}]
  %s11 = inlined_call_operand.vmem [shape: bf16[2,64,32], index: 11, kind: input, shape index: {}]
  %s12 = inlined_call_operand.vmem [shape: f32[2,1,32], index: 12, kind: input, shape index: {}]
  %s13 = inlined_call_operand.vmem [shape: f32[2,1,32], index: 13, kind: input, shape index: {}]
  %s14 = inlined_call_operand.vmem [shape: f32[2,1,32], index: 14, kind: input, shape index: {}]
  %s15 = inlined_call_operand.vmem [shape: f32[1,32], index: 15, kind: input, shape index: {}]
  %s16 = inlined_call_operand.vmem [shape: f32[1,32], index: 16, kind: input, shape index: {}]
  %s17 = inlined_call_operand.vmem [shape: bf16[32,128], index: 17, kind: input, shape index: {}]
  %s18 = inlined_call_operand.vmem [shape: f32[1,128], index: 18, kind: input, shape index: {}]
  %s19 = inlined_call_operand.hbm [shape: f32[2,1,128], index: 19, kind: output, shape index: {}]
  %s20 = sld [smem:[#allocation0]]
  $region109: #{vit_ebc_forward.1} parent=0
    _
  %s22 = ssub.s32 1, %s20
  %s23 = scalar_select 0, %s22, %s20
  $region1: #{vit_ebc_forward.1} parent=0
    #allocation2 [shape = 'u8[1024]{0}', space=vmem, size = 0x400, scoped, tag = 'output window, operand 0']
    #allocation3 [shape = 's32[2]{0}', space=sflag, size = 0x8, scoped, tag = 'scoped memory for vit_ebc_forward.1']
    %24 = vsyncpa [#allocation3], 0
    %s25 = scalar_lea.sflag [#allocation3], 1
    %26 = vsyncpa %s25, 0
    loop: start=0, step=1, limit=4
    $region2: #{vit_ebc_forward.1} parent=1 // loop_pre_header
      _
    $region3: #{vit_ebc_forward.1} parent=1 // loop_header
      %s28 = sphi 0, %s32
      %p29 = scmp.ge.s32.totalorder %s28, 4
      %s38 = sphi 0, %s40
      %s41 = sphi 0, %s38
      %s42 = sphi 0, %s41
      %s58 = sphi 0, %s42
      %s62 = sphi 0, %s62
      %s64 = sphi 0, %s62
      %s65 = sphi 0, %s64
      %s79 = sphi 0, %s65
      %s83 = sphi 0, %s83
      %s85 = sphi 0, %s83
      %s86 = sphi 0, %s85
      %s100 = sphi 0, %s86
      %s104 = sphi 0, %s104
      %s106 = sphi 0, %s104
      %s107 = sphi 0, %s106
      %s121 = sphi 0, %s107
      %s125 = sphi 0, %s125
      %s127 = sphi 0, %s125
      %s128 = sphi 0, %s127
      %s142 = sphi 0, %s128
      %s146 = sphi 0, %s146
      %s148 = sphi 0, %s146
      %s149 = sphi 0, %s148
      %s163 = sphi 0, %s149
      %s167 = sphi 0, %s167
      %s169 = sphi 0, %s167
      %s170 = sphi 0, %s169
      %s184 = sphi 0, %s170
      %s188 = sphi 0, %s188
      %s190 = sphi 0, %s188
      %s191 = sphi 0, %s190
      %s205 = sphi 0, %s191
      %s209 = sphi 0, %s209
      %s211 = sphi 0, %s209
      %s212 = sphi 0, %s211
      %s226 = sphi 0, %s212
      %s230 = sphi 0, %s230
      %s232 = sphi 0, %s230
      %s233 = sphi 0, %s232
      %s247 = sphi 0, %s233
      %s251 = sphi 0, %s251
      %s253 = sphi 0, %s251
      %s254 = sphi 0, %s253
      %s268 = sphi 0, %s254
      %s272 = sphi 0, %s272
      %s274 = sphi 0, %s272
      %s275 = sphi 0, %s274
      %s289 = sphi 0, %s275
      %s293 = sphi 0, %s293
      %s295 = sphi 0, %s293
      %s296 = sphi 0, %s295
      %s310 = sphi 0, %s296
      %s314 = sphi 0, %s314
      %s316 = sphi 0, %s314
      %s317 = sphi 0, %s316
      %s331 = sphi 0, %s317
      %s335 = sphi 0, %s335
      %s337 = sphi 0, %s335
      %s338 = sphi 0, %s337
      %s352 = sphi 0, %s338
      %s356 = sphi 0, %s356
      %s358 = sphi 0, %s356
      %s359 = sphi 0, %s358
      %s373 = sphi 0, %s359
      %s377 = sphi 0, %s377
      %s379 = sphi 0, %s377
      %s380 = sphi 0, %s379
      %s394 = sphi 0, %s380
      %s398 = sphi 0, %s398
      %s400 = sphi 0, %s398
      %s401 = sphi 0, %s400
      %s415 = sphi 0, %s401
      %s419 = sphi 0, %s419
      %s421 = sphi 0, %s419
      %s422 = sphi 0, %s421
      %s436 = sphi 0, %s422
      %s442 = sphi 0, %s444
      %s445 = sphi 0, %s442
      %s446 = sphi 0, %s445
      %s462 = sphi 0, %s446
    $region4: #{vit_ebc_forward.1} parent=1 // loop_header_branch
      %31 = sbr.rel (%p29) target = $region8
    $region5: #{vit_ebc_forward.1} parent=1 // loop_body
      %s33 = ssub.s32 %s28, 1
      %s34 = ssub.s32 %s28, 2
      %s35 = sadd.s32 %s28, 1
      %s36 = ssub.s32 %s28, %s35
      %p37 = scmp.eq.s32.totalorder %s36, 0
      %s39 = sadd.s32 %s38, 1
      %s40 = scalar_select %p37, %s38, %s39
      %p43 = pneg %p37
      %p44 = scmp.eq.s32.totalorder %s28, 1
      %p45 = por %p43, %p44
      %p46 = scmp.ne.s32.totalorder %s38, %s41
      %p47 = scmp.eq.s32.totalorder %s28, 0
      %p48 = por %p46, %p47
      %p49 = scmp.ne.s32.totalorder %s38, %s41
      %p50 = scmp.eq.s32.totalorder %s33, 1
      %p51 = por %p49, %p50
      %p52 = scmp.ne.s32.totalorder %s41, %s42
      %p53 = scmp.eq.s32.totalorder %s33, 0
      %p54 = por %p52, %p53
      %p55 = scmp.ne.s32.totalorder %s41, %s42
      %p56 = scmp.eq.s32.totalorder %s34, 1
      %p57 = por %p55, %p56
      %p59 = scmp.ne.s32.totalorder %s42, %s58
      %p60 = scmp.eq.s32.totalorder %s34, 0
      %p61 = por %p59, %p60
      %s63 = sadd.s32 %s62, 1
      %p66 = scmp.eq.s32.totalorder %s28, 1
      %p67 = scmp.ne.s32.totalorder %s62, %s64
      %p68 = scmp.eq.s32.totalorder %s28, 0
      %p69 = por %p67, %p68
      %p70 = scmp.ne.s32.totalorder %s62, %s64
      %p71 = scmp.eq.s32.totalorder %s33, 1
      %p72 = por %p70, %p71
      %p73 = scmp.ne.s32.totalorder %s64, %s65
      %p74 = scmp.eq.s32.totalorder %s33, 0
      %p75 = por %p73, %p74
      %p76 = scmp.ne.s32.totalorder %s64, %s65
      %p77 = scmp.eq.s32.totalorder %s34, 1
      %p78 = por %p76, %p77
      %p80 = scmp.ne.s32.totalorder %s65, %s79
      %p81 = scmp.eq.s32.totalorder %s34, 0
      %p82 = por %p80, %p81
      %s84 = sadd.s32 %s83, 1
      %p87 = scmp.eq.s32.totalorder %s28, 1
      %p88 = scmp.ne.s32.totalorder %s83, %s85
      %p89 = scmp.eq.s32.totalorder %s28, 0
      %p90 = por %p88, %p89
      %p91 = scmp.ne.s32.totalorder %s83, %s85
      %p92 = scmp.eq.s32.totalorder %s33, 1
      %p93 = por %p91, %p92
      %p94 = scmp.ne.s32.totalorder %s85, %s86
      %p95 = scmp.eq.s32.totalorder %s33, 0
      %p96 = por %p94, %p95
      %p97 = scmp.ne.s32.totalorder %s85, %s86
      %p98 = scmp.eq.s32.totalorder %s34, 1
      %p99 = por %p97, %p98
      %p101 = scmp.ne.s32.totalorder %s86, %s100
      %p102 = scmp.eq.s32.totalorder %s34, 0
      %p103 = por %p101, %p102
      %s105 = sadd.s32 %s104, 1
      %p108 = scmp.eq.s32.totalorder %s28, 1
      %p109 = scmp.ne.s32.totalorder %s104, %s106
      %p110 = scmp.eq.s32.totalorder %s28, 0
      %p111 = por %p109, %p110
      %p112 = scmp.ne.s32.totalorder %s104, %s106
      %p113 = scmp.eq.s32.totalorder %s33, 1
      %p114 = por %p112, %p113
      %p115 = scmp.ne.s32.totalorder %s106, %s107
      %p116 = scmp.eq.s32.totalorder %s33, 0
      %p117 = por %p115, %p116
      %p118 = scmp.ne.s32.totalorder %s106, %s107
      %p119 = scmp.eq.s32.totalorder %s34, 1
      %p120 = por %p118, %p119
      %p122 = scmp.ne.s32.totalorder %s107, %s121
      %p123 = scmp.eq.s32.totalorder %s34, 0
      %p124 = por %p122, %p123
      %s126 = sadd.s32 %s125, 1
      %p129 = scmp.eq.s32.totalorder %s28, 1
      %p130 = scmp.ne.s32.totalorder %s125, %s127
      %p131 = scmp.eq.s32.totalorder %s28, 0
      %p132 = por %p130, %p131
      %p133 = scmp.ne.s32.totalorder %s125, %s127
      %p134 = scmp.eq.s32.totalorder %s33, 1
      %p135 = por %p133, %p134
      %p136 = scmp.ne.s32.totalorder %s127, %s128
      %p137 = scmp.eq.s32.totalorder %s33, 0
      %p138 = por %p136, %p137
      %p139 = scmp.ne.s32.totalorder %s127, %s128
      %p140 = scmp.eq.s32.totalorder %s34, 1
      %p141 = por %p139, %p140
      %p143 = scmp.ne.s32.totalorder %s128, %s142
      %p144 = scmp.eq.s32.totalorder %s34, 0
      %p145 = por %p143, %p144
      %s147 = sadd.s32 %s146, 1
      %p150 = scmp.eq.s32.totalorder %s28, 1
      %p151 = scmp.ne.s32.totalorder %s146, %s148
      %p152 = scmp.eq.s32.totalorder %s28, 0
      %p153 = por %p151, %p152
      %p154 = scmp.ne.s32.totalorder %s146, %s148
      %p155 = scmp.eq.s32.totalorder %s33, 1
      %p156 = por %p154, %p155
      %p157 = scmp.ne.s32.totalorder %s148, %s149
      %p158 = scmp.eq.s32.totalorder %s33, 0
      %p159 = por %p157, %p158
      %p160 = scmp.ne.s32.totalorder %s148, %s149
      %p161 = scmp.eq.s32.totalorder %s34, 1
      %p162 = por %p160, %p161
      %p164 = scmp.ne.s32.totalorder %s149, %s163
      %p165 = scmp.eq.s32.totalorder %s34, 0
      %p166 = por %p164, %p165
      %s168 = sadd.s32 %s167, 1
      %p171 = scmp.eq.s32.totalorder %s28, 1
      %p172 = scmp.ne.s32.totalorder %s167, %s169
      %p173 = scmp.eq.s32.totalorder %s28, 0
      %p174 = por %p172, %p173
      %p175 = scmp.ne.s32.totalorder %s167, %s169
      %p176 = scmp.eq.s32.totalorder %s33, 1
      %p177 = por %p175, %p176
      %p178 = scmp.ne.s32.totalorder %s169, %s170
      %p179 = scmp.eq.s32.totalorder %s33, 0
      %p180 = por %p178, %p179
      %p181 = scmp.ne.s32.totalorder %s169, %s170
      %p182 = scmp.eq.s32.totalorder %s34, 1
      %p183 = por %p181, %p182
      %p185 = scmp.ne.s32.totalorder %s170, %s184
      %p186 = scmp.eq.s32.totalorder %s34, 0
      %p187 = por %p185, %p186
      %s189 = sadd.s32 %s188, 1
      %p192 = scmp.eq.s32.totalorder %s28, 1
      %p193 = scmp.ne.s32.totalorder %s188, %s190
      %p194 = scmp.eq.s32.totalorder %s28, 0
      %p195 = por %p193, %p194
      %p196 = scmp.ne.s32.totalorder %s188, %s190
      %p197 = scmp.eq.s32.totalorder %s33, 1
      %p198 = por %p196, %p197
      %p199 = scmp.ne.s32.totalorder %s190, %s191
      %p200 = scmp.eq.s32.totalorder %s33, 0
      %p201 = por %p199, %p200
      %p202 = scmp.ne.s32.totalorder %s190, %s191
      %p203 = scmp.eq.s32.totalorder %s34, 1
      %p204 = por %p202, %p203
      %p206 = scmp.ne.s32.totalorder %s191, %s205
      %p207 = scmp.eq.s32.totalorder %s34, 0
      %p208 = por %p206, %p207
      %s210 = sadd.s32 %s209, 1
      %p213 = scmp.eq.s32.totalorder %s28, 1
      %p214 = scmp.ne.s32.totalorder %s209, %s211
      %p215 = scmp.eq.s32.totalorder %s28, 0
      %p216 = por %p214, %p215
      %p217 = scmp.ne.s32.totalorder %s209, %s211
      %p218 = scmp.eq.s32.totalorder %s33, 1
      %p219 = por %p217, %p218
      %p220 = scmp.ne.s32.totalorder %s211, %s212
      %p221 = scmp.eq.s32.totalorder %s33, 0
      %p222 = por %p220, %p221
      %p223 = scmp.ne.s32.totalorder %s211, %s212
      %p224 = scmp.eq.s32.totalorder %s34, 1
      %p225 = por %p223, %p224
      %p227 = scmp.ne.s32.totalorder %s212, %s226
      %p228 = scmp.eq.s32.totalorder %s34, 0
      %p229 = por %p227, %p228
      %s231 = sadd.s32 %s230, 1
      %p234 = scmp.eq.s32.totalorder %s28, 1
      %p235 = scmp.ne.s32.totalorder %s230, %s232
      %p236 = scmp.eq.s32.totalorder %s28, 0
      %p237 = por %p235, %p236
      %p238 = scmp.ne.s32.totalorder %s230, %s232
      %p239 = scmp.eq.s32.totalorder %s33, 1
      %p240 = por %p238, %p239
      %p241 = scmp.ne.s32.totalorder %s232, %s233
      %p242 = scmp.eq.s32.totalorder %s33, 0
      %p243 = por %p241, %p242
      %p244 = scmp.ne.s32.totalorder %s232, %s233
      %p245 = scmp.eq.s32.totalorder %s34, 1
      %p246 = por %p244, %p245
      %p248 = scmp.ne.s32.totalorder %s233, %s247
      %p249 = scmp.eq.s32.totalorder %s34, 0
      %p250 = por %p248, %p249
      %s252 = sadd.s32 %s251, 1
      %p255 = scmp.eq.s32.totalorder %s28, 1
      %p256 = scmp.ne.s32.totalorder %s251, %s253
      %p257 = scmp.eq.s32.totalorder %s28, 0
      %p258 = por %p256, %p257
      %p259 = scmp.ne.s32.totalorder %s251, %s253
      %p260 = scmp.eq.s32.totalorder %s33, 1
      %p261 = por %p259, %p260
      %p262 = scmp.ne.s32.totalorder %s253, %s254
      %p263 = scmp.eq.s32.totalorder %s33, 0
      %p264 = por %p262, %p263
      %p265 = scmp.ne.s32.totalorder %s253, %s254
      %p266 = scmp.eq.s32.totalorder %s34, 1
      %p267 = por %p265, %p266
      %p269 = scmp.ne.s32.totalorder %s254, %s268
      %p270 = scmp.eq.s32.totalorder %s34, 0
      %p271 = por %p269, %p270
      %s273 = sadd.s32 %s272, 1
      %p276 = scmp.eq.s32.totalorder %s28, 1
      %p277 = scmp.ne.s32.totalorder %s272, %s274
      %p278 = scmp.eq.s32.totalorder %s28, 0
      %p279 = por %p277, %p278
      %p280 = scmp.ne.s32.totalorder %s272, %s274
      %p281 = scmp.eq.s32.totalorder %s33, 1
      %p282 = por %p280, %p281
      %p283 = scmp.ne.s32.totalorder %s274, %s275
      %p284 = scmp.eq.s32.totalorder %s33, 0
      %p285 = por %p283, %p284
      %p286 = scmp.ne.s32.totalorder %s274, %s275
      %p287 = scmp.eq.s32.totalorder %s34, 1
      %p288 = por %p286, %p287
      %p290 = scmp.ne.s32.totalorder %s275, %s289
      %p291 = scmp.eq.s32.totalorder %s34, 0
      %p292 = por %p290, %p291
      %s294 = sadd.s32 %s293, 1
      %p297 = scmp.eq.s32.totalorder %s28, 1
      %p298 = scmp.ne.s32.totalorder %s293, %s295
      %p299 = scmp.eq.s32.totalorder %s28, 0
      %p300 = por %p298, %p299
      %p301 = scmp.ne.s32.totalorder %s293, %s295
      %p302 = scmp.eq.s32.totalorder %s33, 1
      %p303 = por %p301, %p302
      %p304 = scmp.ne.s32.totalorder %s295, %s296
      %p305 = scmp.eq.s32.totalorder %s33, 0
      %p306 = por %p304, %p305
      %p307 = scmp.ne.s32.totalorder %s295, %s296
      %p308 = scmp.eq.s32.totalorder %s34, 1
      %p309 = por %p307, %p308
      %p311 = scmp.ne.s32.totalorder %s296, %s310
      %p312 = scmp.eq.s32.totalorder %s34, 0
      %p313 = por %p311, %p312
      %s315 = sadd.s32 %s314, 1
      %p318 = scmp.eq.s32.totalorder %s28, 1
      %p319 = scmp.ne.s32.totalorder %s314, %s316
      %p320 = scmp.eq.s32.totalorder %s28, 0
      %p321 = por %p319, %p320
      %p322 = scmp.ne.s32.totalorder %s314, %s316
      %p323 = scmp.eq.s32.totalorder %s33, 1
      %p324 = por %p322, %p323
      %p325 = scmp.ne.s32.totalorder %s316, %s317
      %p326 = scmp.eq.s32.totalorder %s33, 0
      %p327 = por %p325, %p326
      %p328 = scmp.ne.s32.totalorder %s316, %s317
      %p329 = scmp.eq.s32.totalorder %s34, 1
      %p330 = por %p328, %p329
      %p332 = scmp.ne.s32.totalorder %s317, %s331
      %p333 = scmp.eq.s32.totalorder %s34, 0
      %p334 = por %p332, %p333
      %s336 = sadd.s32 %s335, 1
      %p339 = scmp.eq.s32.totalorder %s28, 1
      %p340 = scmp.ne.s32.totalorder %s335, %s337
      %p341 = scmp.eq.s32.totalorder %s28, 0
      %p342 = por %p340, %p341
      %p343 = scmp.ne.s32.totalorder %s335, %s337
      %p344 = scmp.eq.s32.totalorder %s33, 1
      %p345 = por %p343, %p344
      %p346 = scmp.ne.s32.totalorder %s337, %s338
      %p347 = scmp.eq.s32.totalorder %s33, 0
      %p348 = por %p346, %p347
      %p349 = scmp.ne.s32.totalorder %s337, %s338
      %p350 = scmp.eq.s32.totalorder %s34, 1
      %p351 = por %p349, %p350
      %p353 = scmp.ne.s32.totalorder %s338, %s352
      %p354 = scmp.eq.s32.totalorder %s34, 0
      %p355 = por %p353, %p354
      %s357 = sadd.s32 %s356, 1
      %p360 = scmp.eq.s32.totalorder %s28, 1
      %p361 = scmp.ne.s32.totalorder %s356, %s358
      %p362 = scmp.eq.s32.totalorder %s28, 0
      %p363 = por %p361, %p362
      %p364 = scmp.ne.s32.totalorder %s356, %s358
      %p365 = scmp.eq.s32.totalorder %s33, 1
      %p366 = por %p364, %p365
      %p367 = scmp.ne.s32.totalorder %s358, %s359
      %p368 = scmp.eq.s32.totalorder %s33, 0
      %p369 = por %p367, %p368
      %p370 = scmp.ne.s32.totalorder %s358, %s359
      %p371 = scmp.eq.s32.totalorder %s34, 1
      %p372 = por %p370, %p371
      %p374 = scmp.ne.s32.totalorder %s359, %s373
      %p375 = scmp.eq.s32.totalorder %s34, 0
      %p376 = por %p374, %p375
      %s378 = sadd.s32 %s377, 1
      %p381 = scmp.eq.s32.totalorder %s28, 1
      %p382 = scmp.ne.s32.totalorder %s377, %s379
      %p383 = scmp.eq.s32.totalorder %s28, 0
      %p384 = por %p382, %p383
      %p385 = scmp.ne.s32.totalorder %s377, %s379
      %p386 = scmp.eq.s32.totalorder %s33, 1
      %p387 = por %p385, %p386
      %p388 = scmp.ne.s32.totalorder %s379, %s380
      %p389 = scmp.eq.s32.totalorder %s33, 0
      %p390 = por %p388, %p389
      %p391 = scmp.ne.s32.totalorder %s379, %s380
      %p392 = scmp.eq.s32.totalorder %s34, 1
      %p393 = por %p391, %p392
      %p395 = scmp.ne.s32.totalorder %s380, %s394
      %p396 = scmp.eq.s32.totalorder %s34, 0
      %p397 = por %p395, %p396
      %s399 = sadd.s32 %s398, 1
      %p402 = scmp.eq.s32.totalorder %s28, 1
      %p403 = scmp.ne.s32.totalorder %s398, %s400
      %p404 = scmp.eq.s32.totalorder %s28, 0
      %p405 = por %p403, %p404
      %p406 = scmp.ne.s32.totalorder %s398, %s400
      %p407 = scmp.eq.s32.totalorder %s33, 1
      %p408 = por %p406, %p407
      %p409 = scmp.ne.s32.totalorder %s400, %s401
      %p410 = scmp.eq.s32.totalorder %s33, 0
      %p411 = por %p409, %p410
      %p412 = scmp.ne.s32.totalorder %s400, %s401
      %p413 = scmp.eq.s32.totalorder %s34, 1
      %p414 = por %p412, %p413
      %p416 = scmp.ne.s32.totalorder %s401, %s415
      %p417 = scmp.eq.s32.totalorder %s34, 0
      %p418 = por %p416, %p417
      %s420 = sadd.s32 %s419, 1
      %p423 = scmp.eq.s32.totalorder %s28, 1
      %p424 = scmp.ne.s32.totalorder %s419, %s421
      %p425 = scmp.eq.s32.totalorder %s28, 0
      %p426 = por %p424, %p425
      %p427 = scmp.ne.s32.totalorder %s419, %s421
      %p428 = scmp.eq.s32.totalorder %s33, 1
      %p429 = por %p427, %p428
      %p430 = scmp.ne.s32.totalorder %s421, %s422
      %p431 = scmp.eq.s32.totalorder %s33, 0
      %p432 = por %p430, %p431
      %p433 = scmp.ne.s32.totalorder %s421, %s422
      %p434 = scmp.eq.s32.totalorder %s34, 1
      %p435 = por %p433, %p434
      %p437 = scmp.ne.s32.totalorder %s422, %s436
      %p438 = scmp.eq.s32.totalorder %s34, 0
      %p439 = por %p437, %p438
      %s440 = ssub.s32 %s28, %s35
      %p441 = scmp.eq.s32.totalorder %s440, 0
      %s443 = sadd.s32 %s442, 1
      %s444 = scalar_select %p441, %s442, %s443
      %p447 = pneg %p441
      %p448 = scmp.eq.s32.totalorder %s28, 1
      %p449 = por %p447, %p448
      %p450 = scmp.ne.s32.totalorder %s442, %s445
      %p451 = scmp.eq.s32.totalorder %s28, 0
      %p452 = por %p450, %p451
      %p453 = scmp.ne.s32.totalorder %s442, %s445
      %p454 = scmp.eq.s32.totalorder %s33, 1
      %p455 = por %p453, %p454
      %p456 = scmp.ne.s32.totalorder %s445, %s446
      %p457 = scmp.eq.s32.totalorder %s33, 0
      %p458 = por %p456, %p457
      %p459 = scmp.ne.s32.totalorder %s445, %s446
      %p460 = scmp.eq.s32.totalorder %s34, 1
      %p461 = por %p459, %p460
      %p463 = scmp.ne.s32.totalorder %s446, %s462
      %p464 = scmp.eq.s32.totalorder %s34, 0
      %p465 = por %p463, %p464
      %p466 = scmp.le.s32.totalorder 1, %s28
      %p467 = scmp.lt.s32.totalorder %s28, 3
      %p468 = pnand %p466, %p467
      %p469 = pneg %p468
      // Predicated region
      $region9: #{vit_ebc_forward.1} parent=5 // pred_check
        _
      $region10: #{vit_ebc_forward.1} parent=5 // pred_check_branch
        %471 = sbr.rel (%p468) target = $region12
      $region11: #{vit_ebc_forward.1} parent=5 // pred_region
        %s472 = ssub.s32 %s28, 1
        // Predicated region
        $region13: #{vit_ebc_forward.1} parent=11 // pred_check
          %p473 = pneg %p75
        $region14: #{vit_ebc_forward.1} parent=11 // pred_check_branch
          %475 = sbr.rel (%p473) target = $region16
        $region15: #{vit_ebc_forward.1} parent=11 // pred_region
          _
        $region16: #{vit_ebc_forward.1} parent=11 // pred_fallthru
          _
        // Predicated region
        $region17: #{vit_ebc_forward.1} parent=11 // pred_check
          %p476 = pneg %p96
        $region18: #{vit_ebc_forward.1} parent=11 // pred_check_branch
          %478 = sbr.rel (%p476) target = $region20
        $region19: #{vit_ebc_forward.1} parent=11 // pred_region
          _
        $region20: #{vit_ebc_forward.1} parent=11 // pred_fallthru
          _
        // Predicated region
        $region21: #{vit_ebc_forward.1} parent=11 // pred_check
          %p479 = pneg %p117
        $region22: #{vit_ebc_forward.1} parent=11 // pred_check_branch
          %481 = sbr.rel (%p479) target = $region24
        $region23: #{vit_ebc_forward.1} parent=11 // pred_region
          _
        $region24: #{vit_ebc_forward.1} parent=11 // pred_fallthru
          _
        // Predicated region
        $region25: #{vit_ebc_forward.1} parent=11 // pred_check
          %p482 = pneg %p138
        $region26: #{vit_ebc_forward.1} parent=11 // pred_check_branch
          %484 = sbr.rel (%p482) target = $region28
        $region27: #{vit_ebc_forward.1} parent=11 // pred_region
          _
        $region28: #{vit_ebc_forward.1} parent=11 // pred_fallthru
          _
        // Predicated region
        $region29: #{vit_ebc_forward.1} parent=11 // pred_check
          %p485 = pneg %p159
        $region30: #{vit_ebc_forward.1} parent=11 // pred_check_branch
          %487 = sbr.rel (%p485) target = $region32
        $region31: #{vit_ebc_forward.1} parent=11 // pred_region
          _
        $region32: #{vit_ebc_forward.1} parent=11 // pred_fallthru
          _
        // Predicated region
        $region33: #{vit_ebc_forward.1} parent=11 // pred_check
          %p488 = pneg %p180
        $region34: #{vit_ebc_forward.1} parent=11 // pred_check_branch
          %490 = sbr.rel (%p488) target = $region36
        $region35: #{vit_ebc_forward.1} parent=11 // pred_region
          _
        $region36: #{vit_ebc_forward.1} parent=11 // pred_fallthru
          _
        // Predicated region
        $region37: #{vit_ebc_forward.1} parent=11 // pred_check
          %p491 = pneg %p201
        $region38: #{vit_ebc_forward.1} parent=11 // pred_check_branch
          %493 = sbr.rel (%p491) target = $region40
        $region39: #{vit_ebc_forward.1} parent=11 // pred_region
          _
        $region40: #{vit_ebc_forward.1} parent=11 // pred_fallthru
          _
        // Predicated region
        $region41: #{vit_ebc_forward.1} parent=11 // pred_check
          %p494 = pneg %p222
        $region42: #{vit_ebc_forward.1} parent=11 // pred_check_branch
          %496 = sbr.rel (%p494) target = $region44
        $region43: #{vit_ebc_forward.1} parent=11 // pred_region
          _
        $region44: #{vit_ebc_forward.1} parent=11 // pred_fallthru
          _
        // Predicated region
        $region45: #{vit_ebc_forward.1} parent=11 // pred_check
          %p497 = pneg %p243
        $region46: #{vit_ebc_forward.1} parent=11 // pred_check_branch
          %499 = sbr.rel (%p497) target = $region48
        $region47: #{vit_ebc_forward.1} parent=11 // pred_region
          _
        $region48: #{vit_ebc_forward.1} parent=11 // pred_fallthru
          _
        // Predicated region
        $region49: #{vit_ebc_forward.1} parent=11 // pred_check
          %p500 = pneg %p264
        $region50: #{vit_ebc_forward.1} parent=11 // pred_check_branch
          %502 = sbr.rel (%p500) target = $region52
        $region51: #{vit_ebc_forward.1} parent=11 // pred_region
          _
        $region52: #{vit_ebc_forward.1} parent=11 // pred_fallthru
          _
        // Predicated region
        $region53: #{vit_ebc_forward.1} parent=11 // pred_check
          %p503 = pneg %p285
        $region54: #{vit_ebc_forward.1} parent=11 // pred_check_branch
          %505 = sbr.rel (%p503) target = $region56
        $region55: #{vit_ebc_forward.1} parent=11 // pred_region
          _
        $region56: #{vit_ebc_forward.1} parent=11 // pred_fallthru
          _
        // Predicated region
        $region57: #{vit_ebc_forward.1} parent=11 // pred_check
          %p506 = pneg %p306
        $region58: #{vit_ebc_forward.1} parent=11 // pred_check_branch
          %508 = sbr.rel (%p506) target = $region60
        $region59: #{vit_ebc_forward.1} parent=11 // pred_region
          _
        $region60: #{vit_ebc_forward.1} parent=11 // pred_fallthru
          _
        // Predicated region
        $region61: #{vit_ebc_forward.1} parent=11 // pred_check
          %p509 = pneg %p327
        $region62: #{vit_ebc_forward.1} parent=11 // pred_check_branch
          %511 = sbr.rel (%p509) target = $region64
        $region63: #{vit_ebc_forward.1} parent=11 // pred_region
          _
        $region64: #{vit_ebc_forward.1} parent=11 // pred_fallthru
          _
        // Predicated region
        $region65: #{vit_ebc_forward.1} parent=11 // pred_check
          %p512 = pneg %p348
        $region66: #{vit_ebc_forward.1} parent=11 // pred_check_branch
          %514 = sbr.rel (%p512) target = $region68
        $region67: #{vit_ebc_forward.1} parent=11 // pred_region
          _
        $region68: #{vit_ebc_forward.1} parent=11 // pred_fallthru
          _
        // Predicated region
        $region69: #{vit_ebc_forward.1} parent=11 // pred_check
          %p515 = pneg %p369
        $region70: #{vit_ebc_forward.1} parent=11 // pred_check_branch
          %517 = sbr.rel (%p515) target = $region72
        $region71: #{vit_ebc_forward.1} parent=11 // pred_region
          _
        $region72: #{vit_ebc_forward.1} parent=11 // pred_fallthru
          _
        // Predicated region
        $region73: #{vit_ebc_forward.1} parent=11 // pred_check
          %p518 = pneg %p390
        $region74: #{vit_ebc_forward.1} parent=11 // pred_check_branch
          %520 = sbr.rel (%p518) target = $region76
        $region75: #{vit_ebc_forward.1} parent=11 // pred_region
          _
        $region76: #{vit_ebc_forward.1} parent=11 // pred_fallthru
          _
        // Predicated region
        $region77: #{vit_ebc_forward.1} parent=11 // pred_check
          %p521 = pneg %p411
        $region78: #{vit_ebc_forward.1} parent=11 // pred_check_branch
          %523 = sbr.rel (%p521) target = $region80
        $region79: #{vit_ebc_forward.1} parent=11 // pred_region
          _
        $region80: #{vit_ebc_forward.1} parent=11 // pred_fallthru
          _
        // Predicated region
        $region81: #{vit_ebc_forward.1} parent=11 // pred_check
          %p524 = pneg %p432
        $region82: #{vit_ebc_forward.1} parent=11 // pred_check_branch
          %526 = sbr.rel (%p524) target = $region84
        $region83: #{vit_ebc_forward.1} parent=11 // pred_region
          _
        $region84: #{vit_ebc_forward.1} parent=11 // pred_fallthru
          _
      $region12: #{vit_ebc_forward.1} parent=5 // pred_fallthru
        _
      %p527 = scmp.lt.s32.totalorder %s28, 2
      // Predicated region
      $region85: #{vit_ebc_forward.1} parent=5 // pred_check
        %p528 = pneg %p527
      $region86: #{vit_ebc_forward.1} parent=5 // pred_check_branch
        %530 = sbr.rel (%p528) target = $region88
      $region87: #{vit_ebc_forward.1} parent=5 // pred_region
        // Predicated region
        $region89: #{vit_ebc_forward.1} parent=87 // pred_check
          %p531 = pneg %p48
        $region90: #{vit_ebc_forward.1} parent=87 // pred_check_branch
          %533 = sbr.rel (%p531) target = $region92
        $region91: #{vit_ebc_forward.1} parent=87 // pred_region
          %p534 = scmp.lt.s32.totalorder %s28, 1
          %s535 = scalar_select %p534, %s28, 1
          %s536 = smul.addr %s535, 3
          %s537 = smul.addr %s536, 8
          %s538 = scalar_lea.vmem %s0, %s537
        $region92: #{vit_ebc_forward.1} parent=87 // pred_fallthru
          _
      $region88: #{vit_ebc_forward.1} parent=5 // pred_fallthru
        _
      %p539 = scmp.le.s32.totalorder 1, %s28
      %p540 = scmp.lt.s32.totalorder %s28, 3
      %p541 = pnand %p539, %p540
      %p542 = pneg %p541
      // Predicated region
      $region93: #{vit_ebc_forward.1} parent=5 // pred_check
        _
      $region94: #{vit_ebc_forward.1} parent=5 // pred_check_branch
        %544 = sbr.rel (%p541) target = $region96
      $region95: #{vit_ebc_forward.1} parent=5 // pred_region
        %s545 = ssub.s32 %s28, 1
        %p546 = scmp.lt.s32.totalorder %s33, 1
        %s547 = scalar_select %p546, %s33, 1
        %s548 = smul.addr %s547, 3
        %s549 = smul.addr %s548, 8
        %s550 = scalar_lea.vmem %s0, %s549
        %p551 = pneg %p54
        %p552 = pneg %p51
        %p553 = pneg %p75
        %p554 = pneg %p72
        %p555 = pneg %p96
        %p556 = pneg %p93
        %p557 = pneg %p117
        %p558 = pneg %p114
        %p559 = pneg %p138
        %p560 = pneg %p135
        %p561 = pneg %p159
        %p562 = pneg %p156
        %p563 = pneg %p180
        %p564 = pneg %p177
        %p565 = pneg %p201
        %p566 = pneg %p198
        %p567 = pneg %p222
        %p568 = pneg %p219
        %p569 = pneg %p243
        %p570 = pneg %p240
        %p571 = pneg %p264
        %p572 = pneg %p261
        %p573 = pneg %p285
        %p574 = pneg %p282
        %p575 = pneg %p306
        %p576 = pneg %p303
        %p577 = pneg %p327
        %p578 = pneg %p324
        %p579 = pneg %p348
        %p580 = pneg %p345
        %p581 = pneg %p369
        %p582 = pneg %p366
        %p583 = pneg %p390
        %p584 = pneg %p387
        %p585 = pneg %p411
        %p586 = pneg %p408
        %p587 = pneg %p432
        %p588 = pneg %p429
        %p589 = pneg %p458
        %p590 = pneg %p455
        %s591 = sand.u32 %s445, 1
        %s592 = scalar_lea.sflag [#allocation3], %s591
        %s593 = sand.u32 %s445, 1
        %s594 = scalar_lea.vmem [#allocation2], %s593
        %p595 = scmp.lt.s32.totalorder %s33, 1
        %s596 = scalar_select %p595, %s33, 1
        %s597 = smul.addr %s596, 3
        %s598 = smul.addr %s597, 8
        %s599 = scalar_lea.vmem %s0, %s598
        %v601 = vld [vmem:[%s599] sm:$0xff]
        %v602 = vld [vmem:[%s599 + $0x8] sm:$0xff]
        %v603 = vld [vmem:[%s599 + $0x10] sm:$0xff]
        %v604 = vpack.c.bf16 %v602, %v601
        %v605 = vpack.c.bf16 %v603, %v603
        %v606 = vld [vmem:[%s1] sm:$0xff]
        %v607 = vld [vmem:[%s1 + $0x8] sm:$0xff]
        %v608 = vld [vmem:[%s1 + $0x10] sm:$0xff]
        %v609 = vld [vmem:[%s2] sm:$0xf]
        %v610 = vld [vmem:[%s2 + $0x4] sm:$0xf]
        %v611 = vld [vmem:[%s2 + $0x8] sm:$0xf]
        %v612 = vld [vmem:[%s2 + $0xc] sm:$0xf]
        %v613 = vld [vmem:[%s2 + $0x10] sm:$0xf]
        %v614 = vld [vmem:[%s2 + $0x14] sm:$0xf]
        %v615 = vld [vmem:[%s2 + $0x18] sm:$0xf]
        %v616 = vld [vmem:[%s2 + $0x1c] sm:$0xf]
        %v617 = vld [vmem:[%s2 + $0x20] sm:$0xf]
        %v618 = vld [vmem:[%s2 + $0x24] sm:$0xf]
        %v619 = vld [vmem:[%s2 + $0x28] sm:$0xf]
        %v620 = vld [vmem:[%s2 + $0x2c] sm:$0xf]
        %v621 = vld [vmem:[%s2 + $0x30] sm:$0xf]
        %v622 = vld [vmem:[%s2 + $0x34] sm:$0xf]
        %v623 = vld [vmem:[%s2 + $0x38] sm:$0xf]
        %v624 = vld [vmem:[%s2 + $0x3c] sm:$0xf]
        %v641 = vunpack.c.l.b16 %v609
        %v642 = vunpack.c.l.b16 %v610
        %v643 = vunpack.c.l.b16 %v611
        %v644 = vunpack.c.l.b16 %v612
        %v645 = vunpack.c.l.b16 %v613
        %v646 = vunpack.c.l.b16 %v614
        %v647 = vunpack.c.l.b16 %v615
        %v648 = vunpack.c.l.b16 %v616
        %v649 = vunpack.c.l.b16 %v617
        %v650 = vunpack.c.l.b16 %v618
        %v651 = vunpack.c.l.b16 %v619
        %v652 = vunpack.c.l.b16 %v620
        %v653 = vunpack.c.l.b16 %v621
        %v654 = vunpack.c.l.b16 %v622
        %v655 = vunpack.c.l.b16 %v623
        %v656 = vunpack.c.l.b16 %v624
        %v657 = vpack.c.b16 %v642, %v641
        %v658 = vpack.c.b16 %v644, %v643
        %v659 = vpack.c.b16 %v646, %v645
        %v660 = vpack.c.b16 %v648, %v647
        %v661 = vpack.c.b16 %v650, %v649
        %v662 = vpack.c.b16 %v652, %v651
        %v663 = vpack.c.b16 %v654, %v653
        %v664 = vpack.c.b16 %v656, %v655
        %673 = vmatprep.subr.bf16.mxu0 0
        %674 = vmatpush1.bf16.msra.mxu0 %v664
        %675 = vmatprep.subr.bf16.mxu0 0
        %676 = vmatpush1.bf16.msra.mxu0 %v663
        %677 = vmatprep.subr.bf16.mxu0 0
        %678 = vmatpush1.bf16.msra.mxu0 %v662
        %679 = vmatprep.subr.bf16.mxu0 0
        %680 = vmatpush1.bf16.msra.mxu0 %v661
        %681 = vmatprep.subr.bf16.mxu0 0
        %682 = vmatpush1.bf16.msra.mxu0 %v660
        %683 = vmatprep.subr.bf16.mxu0 0
        %684 = vmatpush1.bf16.msra.mxu0 %v659
        %685 = vmatprep.subr.bf16.mxu0 0
        %686 = vmatpush1.bf16.msra.mxu0 %v658
        %687 = vmatprep.subr.bf16.mxu0 0
        %688 = vmatpush1.bf16.msra.mxu0 %v657
        %689 = vmatprep.subr.bf16.mxu0 0
        %690 = vmatpush2.bf16.msra.mxu0 0
        %691 = vmatprep.subr.bf16.mxu0 0
        %692 = vmatpush2.bf16.msra.mxu0 0
        %693 = vmatprep.subr.bf16.mxu0 0
        %694 = vmatpush2.bf16.msra.mxu0 0
        %695 = vmatprep.subr.bf16.mxu0 0
        %696 = vmatpush2.bf16.msra.mxu0 0
        %697 = vmatprep.subr.bf16.mxu0 0
        %698 = vmatpush2.bf16.msra.mxu0 0
        %699 = vmatprep.subr.bf16.mxu0 0
        %700 = vmatpush2.bf16.msra.mxu0 0
        %701 = vmatprep.subr.bf16.mxu0 0
        %702 = vmatpush2.bf16.msra.mxu0 0
        %703 = vmatprep.subr.bf16.mxu0 0
        %704 = vmatpush2.bf16.msra.mxu0 0
        %705 = vmatprep.mubr.bf16.mxu0 0
        %706 = vmatmul.mubr.bf16.gmra.mxu0 %v604
        %v707 = vpop.f32.mrf.mxu0
        %v708 = vadd.f32 0.0, %v707
        %v709 = vpop.f32.mrf.mxu0
        %v710 = vpop.f32.mrf.mxu0
        %v711 = vadd.f32 0.0, %v710
        %v712 = vpop.f32.mrf.mxu0
        %713 = vmatprep.mubr.bf16.mxu0 0
        %714 = vmatmul.mubr.bf16.gmra.mxu0 %v605
        %v715 = vpop.f32.mrf.mxu0
        %v716 = vadd.f32 0.0, %v715
        %v717 = vpop.f32.mrf.mxu0
        %v718 = vpop.f32.mrf.mxu0
        %v719 = vpop.f32.mrf.mxu0
        %720 = vdwg.mxu0
        %v721 = vadd.f32 %v606, %v708
        %v722 = vadd.f32 %v607, %v711
        %v723 = vadd.f32 %v608, %v716
        %v724 = vlaneseq
        %v725 = vand.u32 %v724, 127
        %vm726 = vcmp.lt.s32.totalorder %v725, 17
        %v727 = vsel %vm726, 1, 0
        %v728 = vcvt.s32.f32 %v727
        %v729 = vpack.c.bf16 %v722, %v721
        %v730 = vpack.c.bf16 %v723, %v723
        %v731 = vld [vmem:[%s3] sm:$0xf]
        %v732 = vld [vmem:[%s3 + $0x4] sm:$0xf]
        %v733 = vld [vmem:[%s3 + $0x8] sm:$0xf]
        %v734 = vld [vmem:[%s3 + $0xc] sm:$0xf]
        %v735 = vld [vmem:[%s4] sm:$0x1]
        %v737 = vlaneseq
        %v738 = vshrl.u32 %v737, 7
        %v739 = vsub.s32 0, %v738
        %v740 = vrot.slane %v735, %v739
        %v746 = vunpack.c.l.b16 %v731
        %v747 = vunpack.c.l.b16 %v732
        %v748 = vunpack.c.l.b16 %v733
        %v749 = vunpack.c.l.b16 %v734
        %v750 = vpack.c.b16 %v747, %v746
        %v751 = vpack.c.b16 %v749, %v748
        %vm754 = vcmask 261120
        %v756 = vsel %vm754, %v729, 0
        %v759 = vsel %vm754, %v730, 0
        %761 = vmatprep.subr.bf16.mxu0 0
        %762 = vmatpush1.bf16.msra.mxu0 0
        %763 = vmatprep.subr.bf16.mxu0 0
        %764 = vmatpush1.bf16.msra.mxu0 0
        %765 = vmatprep.subr.bf16.mxu0 0
        %766 = vmatpush1.bf16.msra.mxu0 0
        %767 = vmatprep.subr.bf16.mxu0 0
        %768 = vmatpush1.bf16.msra.mxu0 0
        %769 = vmatprep.subr.bf16.mxu0 0
        %770 = vmatpush1.bf16.msra.mxu0 0
        %771 = vmatprep.subr.bf16.mxu0 0
        %772 = vmatpush1.bf16.msra.mxu0 0
        %773 = vmatprep.subr.bf16.mxu0 0
        %774 = vmatpush1.bf16.msra.mxu0 %v751
        %775 = vmatprep.subr.bf16.mxu0 0
        %776 = vmatpush1.bf16.msra.mxu0 %v750
        %777 = vmatprep.subr.bf16.mxu0 0
        %778 = vmatpush2.bf16.msra.mxu0 0
        %779 = vmatprep.subr.bf16.mxu0 0
        %780 = vmatpush2.bf16.msra.mxu0 0
        %781 = vmatprep.subr.bf16.mxu0 0
        %782 = vmatpush2.bf16.msra.mxu0 0
        %783 = vmatprep.subr.bf16.mxu0 0
        %784 = vmatpush2.bf16.msra.mxu0 0
        %785 = vmatprep.subr.bf16.mxu0 0
        %786 = vmatpush2.bf16.msra.mxu0 0
        %787 = vmatprep.subr.bf16.mxu0 0
        %788 = vmatpush2.bf16.msra.mxu0 0
        %789 = vmatprep.subr.bf16.mxu0 0
        %790 = vmatpush2.bf16.msra.mxu0 0
        %791 = vmatprep.subr.bf16.mxu0 0
        %792 = vmatpush2.bf16.msra.mxu0 0
        %793 = vmatprep.mubr.bf16.mxu0 0
        %794 = vmatmul.mubr.bf16.gmra.mxu0 %v756
        %v795 = vpop.f32.mrf.mxu0
        %v796 = vadd.f32 %v740, %v795
        %v797 = vpop.f32.mrf.mxu0
        %v798 = vpop.f32.mrf.mxu0
        %v799 = vadd.f32 %v740, %v798
        %v800 = vpop.f32.mrf.mxu0
        %801 = vmatprep.mubr.bf16.mxu0 0
        %802 = vmatmul.mubr.bf16.gmra.mxu0 %v759
        %v803 = vpop.f32.mrf.mxu0
        %v804 = vadd.f32 %v740, %v803
        %v805 = vpop.f32.mrf.mxu0
        %v806 = vpop.f32.mrf.mxu0
        %v807 = vpop.f32.mrf.mxu0
        %808 = vdwg.mxu0
        %v809 = vpack.c.bf16 %v799, %v796
        %v810 = vpack.c.bf16 %v804, %v804
        %813 = vrot.lane.b32.xlu0 %v809, 96
        %v814 = vpop.permute.xlu0 %813
        %815 = vrot.lane.b32.xlu0 %v810, 96
        %v816 = vpop.permute.xlu0 %815
        %vm817 = vcmask 64512
        %v819 = vsel %vm817, %v809, 0
        %v822 = vsel %vm817, %v810, 0
        %v825 = vsel %vm817, %v814, 0
        %v828 = vsel %vm817, %v816, 0
        %830 = vmatprep.subr.bf16.mxu0 0
        %831 = vmatpush1.bf16.xpose.msra.mxu0 0
        %832 = vmatprep.subr.bf16.mxu0 0
        %833 = vmatpush1.bf16.xpose.msra.mxu0 0
        %834 = vmatprep.subr.bf16.mxu0 0
        %835 = vmatpush1.bf16.xpose.msra.mxu0 0
        %836 = vmatprep.subr.bf16.mxu0 0
        %837 = vmatpush1.bf16.xpose.msra.mxu0 0
        %838 = vmatprep.subr.bf16.mxu0 0
        %839 = vmatpush1.bf16.xpose.msra.mxu0 0
        %840 = vmatprep.subr.bf16.mxu0 0
        %841 = vmatpush1.bf16.xpose.msra.mxu0 0
        %842 = vmatprep.subr.bf16.mxu0 0
        %843 = vmatpush1.bf16.xpose.msra.mxu0 %v828
        %844 = vmatprep.subr.bf16.mxu0 0
        %845 = vmatpush1.bf16.xpose.msra.mxu0 %v825
        %846 = vmatprep.subr.bf16.mxu0 0
        %847 = vmatpush2.bf16.xpose.msra.mxu0 0
        %848 = vmatprep.subr.bf16.mxu0 0
        %849 = vmatpush2.bf16.xpose.msra.mxu0 0
        %850 = vmatprep.subr.bf16.mxu0 0
        %851 = vmatpush2.bf16.xpose.msra.mxu0 0
        %852 = vmatprep.subr.bf16.mxu0 0
        %853 = vmatpush2.bf16.xpose.msra.mxu0 0
        %854 = vmatprep.subr.bf16.mxu0 0
        %855 = vmatpush2.bf16.xpose.msra.mxu0 0
        %856 = vmatprep.subr.bf16.mxu0 0
        %857 = vmatpush2.bf16.xpose.msra.mxu0 0
        %858 = vmatprep.subr.bf16.mxu0 0
        %859 = vmatpush2.bf16.xpose.msra.mxu0 0
        %860 = vmatprep.subr.bf16.mxu0 0
        %861 = vmatpush2.bf16.xpose.msra.mxu0 0
        %862 = vmatprep.mubr.bf16.mxu0 0
        %863 = vmatmul.mubr.bf16.gmra.mxu0 %v819
        %v864 = vpop.f32.mrf.mxu0
        %v865 = vadd.f32 0.0, %v864
        %v866 = vpop.f32.mrf.mxu0
        %v867 = vpop.f32.mrf.mxu0
        %v868 = vadd.f32 0.0, %v867
        %v869 = vpop.f32.mrf.mxu0
        %870 = vmatprep.mubr.bf16.mxu0 0
        %871 = vmatmul.mubr.bf16.gmra.mxu0 %v822
        %v872 = vpop.f32.mrf.mxu0
        %v873 = vadd.f32 0.0, %v872
        %v874 = vpop.f32.mrf.mxu0
        %v875 = vpop.f32.mrf.mxu0
        %v876 = vpop.f32.mrf.mxu0
        %877 = vdwg.mxu0
        %vm878 = vcmask 195584
        %v879 = vsel %vm878, %v865, -inf
        %880 = vmax.xlane.f32.xlu0 %v879
        %v881 = vpop.xlane.xlu0 %880
        %v882 = vsel %vm878, %v868, -inf
        %883 = vmax.xlane.f32.xlu0 %v882
        %v884 = vpop.xlane.xlu0 %883
        %v885 = vsel %vm878, %v873, -inf
        %886 = vmax.xlane.f32.xlu0 %v885
        %v887 = vpop.xlane.xlu0 %886
        %v888 = vsub.f32 %v865, %v881
        %v889 = vsub.f32 %v868, %v884
        %v890 = vsub.f32 %v873, %v887
        %v891 = vmul.f32 %v888, 1.442695
        %v892 = vpow.pop %v891
        %v893 = vmul.f32 %v889, 1.442695
        %v894 = vpow.pop %v893
        %v895 = vmul.f32 %v890, 1.442695
        %v896 = vpow.pop %v895
        %v897 = vmul.f32 %v892, %v728
        %v898 = vmul.f32 %v894, %v728
        %v899 = vmul.f32 %v896, %v728
        %v900 = vsel %vm878, %v897, 0.0
        %901 = vadd.xlane.f32.xlu0 %v900
        %v902 = vpop.xlane.xlu0 %901
        %v903 = vsel %vm878, %v898, 0.0
        %904 = vadd.xlane.f32.xlu0 %v903
        %v905 = vpop.xlane.xlu0 %904
        %v906 = vsel %vm878, %v899, 0.0
        %907 = vadd.xlane.f32.xlu0 %v906
        %v908 = vpop.xlane.xlu0 %907
        %v909 = vrcp.pop %v902
        %v910 = vrcp.pop %v905
        %v911 = vrcp.pop %v908
        %v912 = vmul.f32 %v897, %v909
        %v913 = vmul.f32 %v898, %v910
        %v914 = vmul.f32 %v899, %v911
        %v915 = vpack.c.bf16 %v913, %v912
        %v916 = vpack.c.bf16 %v914, %v914
        %917 = vrot.lane.b32.xlu0 %v809, 64
        %v918 = vpop.permute.xlu0 %917
        %919 = vrot.lane.b32.xlu0 %v810, 64
        %v920 = vpop.permute.xlu0 %919
        %v923 = vsel %vm878, %v915, 0
        %v926 = vsel %vm878, %v916, 0
        %vm928 = vcmask 1043456
        %v930 = vsel %vm928, %v920, 0
        %932 = vmatprep.subr.bf16.mxu0 0
        %933 = vmatpush1.bf16.msra.mxu0 0
        %934 = vmatprep.subr.bf16.mxu0 0
        %935 = vmatpush1.bf16.msra.mxu0 0
        %936 = vmatprep.subr.bf16.mxu0 0
        %937 = vmatpush1.bf16.msra.mxu0 0
        %938 = vmatprep.subr.bf16.mxu0 0
        %939 = vmatpush1.bf16.msra.mxu0 0
        %940 = vmatprep.subr.bf16.mxu0 0
        %941 = vmatpush1.bf16.msra.mxu0 0
        %942 = vmatprep.subr.bf16.mxu0 0
        %943 = vmatpush1.bf16.msra.mxu0 0
        %944 = vmatprep.subr.bf16.mxu0 0
        %945 = vmatpush1.bf16.msra.mxu0 %v930
        %946 = vmatprep.subr.bf16.mxu0 0
        %947 = vmatpush1.bf16.msra.mxu0 %v918
        %948 = vmatprep.subr.bf16.mxu0 0
        %949 = vmatpush2.bf16.msra.mxu0 0
        %950 = vmatprep.subr.bf16.mxu0 0
        %951 = vmatpush2.bf16.msra.mxu0 0
        %952 = vmatprep.subr.bf16.mxu0 0
        %953 = vmatpush2.bf16.msra.mxu0 0
        %954 = vmatprep.subr.bf16.mxu0 0
        %955 = vmatpush2.bf16.msra.mxu0 0
        %956 = vmatprep.subr.bf16.mxu0 0
        %957 = vmatpush2.bf16.msra.mxu0 0
        %958 = vmatprep.subr.bf16.mxu0 0
        %959 = vmatpush2.bf16.msra.mxu0 0
        %960 = vmatprep.subr.bf16.mxu0 0
        %961 = vmatpush2.bf16.msra.mxu0 0
        %962 = vmatprep.subr.bf16.mxu0 0
        %963 = vmatpush2.bf16.msra.mxu0 0
        %964 = vmatprep.mubr.bf16.mxu0 0
        %965 = vmatmul.mubr.bf16.gmra.mxu0 %v923
        %v966 = vpop.f32.mrf.mxu0
        %v967 = vadd.f32 0.0, %v966
        %v968 = vpop.f32.mrf.mxu0
        %v969 = vpop.f32.mrf.mxu0
        %v970 = vadd.f32 0.0, %v969
        %v971 = vpop.f32.mrf.mxu0
        %972 = vmatprep.mubr.bf16.mxu0 0
        %973 = vmatmul.mubr.bf16.gmra.mxu0 %v926
        %v974 = vpop.f32.mrf.mxu0
        %v975 = vadd.f32 0.0, %v974
        %v976 = vpop.f32.mrf.mxu0
        %v977 = vpop.f32.mrf.mxu0
        %v978 = vpop.f32.mrf.mxu0
        %979 = vdwg.mxu0
        %980 = vrot.lane.b32.xlu0 %v809, 120
        %v981 = vpop.permute.xlu0 %980
        %982 = vrot.lane.b32.xlu0 %v810, 120
        %v983 = vpop.permute.xlu0 %982
        %984 = vrot.lane.b32.xlu0 %v809, 88
        %v985 = vpop.permute.xlu0 %984
        %986 = vrot.lane.b32.xlu0 %v810, 88
        %v987 = vpop.permute.xlu0 %986
        %v989 = vsel %vm817, %v981, 0
        %v992 = vsel %vm817, %v983, 0
        %v995 = vsel %vm817, %v985, 0
        %v998 = vsel %vm817, %v987, 0
        %1000 = vmatprep.subr.bf16.mxu0 0
        %1001 = vmatpush1.bf16.xpose.msra.mxu0 0
        %1002 = vmatprep.subr.bf16.mxu0 0
        %1003 = vmatpush1.bf16.xpose.msra.mxu0 0
        %1004 = vmatprep.subr.bf16.mxu0 0
        %1005 = vmatpush1.bf16.xpose.msra.mxu0 0
        %1006 = vmatprep.subr.bf16.mxu0 0
        %1007 = vmatpush1.bf16.xpose.msra.mxu0 0
        %1008 = vmatprep.subr.bf16.mxu0 0
        %1009 = vmatpush1.bf16.xpose.msra.mxu0 0
        %1010 = vmatprep.subr.bf16.mxu0 0
        %1011 = vmatpush1.bf16.xpose.msra.mxu0 0
        %1012 = vmatprep.subr.bf16.mxu0 0
        %1013 = vmatpush1.bf16.xpose.msra.mxu0 %v998
        %1014 = vmatprep.subr.bf16.mxu0 0
        %1015 = vmatpush1.bf16.xpose.msra.mxu0 %v995
        %1016 = vmatprep.subr.bf16.mxu0 0
        %1017 = vmatpush2.bf16.xpose.msra.mxu0 0
        %1018 = vmatprep.subr.bf16.mxu0 0
        %1019 = vmatpush2.bf16.xpose.msra.mxu0 0
        %1020 = vmatprep.subr.bf16.mxu0 0
        %1021 = vmatpush2.bf16.xpose.msra.mxu0 0
        %1022 = vmatprep.subr.bf16.mxu0 0
        %1023 = vmatpush2.bf16.xpose.msra.mxu0 0
        %1024 = vmatprep.subr.bf16.mxu0 0
        %1025 = vmatpush2.bf16.xpose.msra.mxu0 0
        %1026 = vmatprep.subr.bf16.mxu0 0
        %1027 = vmatpush2.bf16.xpose.msra.mxu0 0
        %1028 = vmatprep.subr.bf16.mxu0 0
        %1029 = vmatpush2.bf16.xpose.msra.mxu0 0
        %1030 = vmatprep.subr.bf16.mxu0 0
        %1031 = vmatpush2.bf16.xpose.msra.mxu0 0
        %1032 = vmatprep.mubr.bf16.mxu0 0
        %1033 = vmatmul.mubr.bf16.gmra.mxu0 %v989
        %v1034 = vpop.f32.mrf.mxu0
        %v1035 = vadd.f32 0.0, %v1034
        %v1036 = vpop.f32.mrf.mxu0
        %v1037 = vpop.f32.mrf.mxu0
        %v1038 = vadd.f32 0.0, %v1037
        %v1039 = vpop.f32.mrf.mxu0
        %1040 = vmatprep.mubr.bf16.mxu0 0
        %1041 = vmatmul.mubr.bf16.gmra.mxu0 %v992
        %v1042 = vpop.f32.mrf.mxu0
        %v1043 = vadd.f32 0.0, %v1042
        %v1044 = vpop.f32.mrf.mxu0
        %v1045 = vpop.f32.mrf.mxu0
        %v1046 = vpop.f32.mrf.mxu0
        %1047 = vdwg.mxu0
        %v1048 = vsel %vm878, %v1035, -inf
        %1049 = vmax.xlane.f32.xlu0 %v1048
        %v1050 = vpop.xlane.xlu0 %1049
        %v1051 = vsel %vm878, %v1038, -inf
        %1052 = vmax.xlane.f32.xlu0 %v1051
        %v1053 = vpop.xlane.xlu0 %1052
        %v1054 = vsel %vm878, %v1043, -inf
        %1055 = vmax.xlane.f32.xlu0 %v1054
        %v1056 = vpop.xlane.xlu0 %1055
        %v1057 = vsub.f32 %v1035, %v1050
        %v1058 = vsub.f32 %v1038, %v1053
        %v1059 = vsub.f32 %v1043, %v1056
        %v1060 = vmul.f32 %v1057, 1.442695
        %v1061 = vpow.pop %v1060
        %v1062 = vmul.f32 %v1058, 1.442695
        %v1063 = vpow.pop %v1062
        %v1064 = vmul.f32 %v1059, 1.442695
        %v1065 = vpow.pop %v1064
        %v1066 = vmul.f32 %v1061, %v728
        %v1067 = vmul.f32 %v1063, %v728
        %v1068 = vmul.f32 %v1065, %v728
        %v1069 = vsel %vm878, %v1066, 0.0
        %1070 = vadd.xlane.f32.xlu0 %v1069
        %v1071 = vpop.xlane.xlu0 %1070
        %v1072 = vsel %vm878, %v1067, 0.0
        %1073 = vadd.xlane.f32.xlu0 %v1072
        %v1074 = vpop.xlane.xlu0 %1073
        %v1075 = vsel %vm878, %v1068, 0.0
        %1076 = vadd.xlane.f32.xlu0 %v1075
        %v1077 = vpop.xlane.xlu0 %1076
        %v1078 = vrcp.pop %v1071
        %v1079 = vrcp.pop %v1074
        %v1080 = vrcp.pop %v1077
        %v1081 = vmul.f32 %v1066, %v1078
        %v1082 = vmul.f32 %v1067, %v1079
        %v1083 = vmul.f32 %v1068, %v1080
        %v1084 = vpack.c.bf16 %v1082, %v1081
        %v1085 = vpack.c.bf16 %v1083, %v1083
        %1086 = vrot.lane.b32.xlu0 %v809, 56
        %v1087 = vpop.permute.xlu0 %1086
        %1088 = vrot.lane.b32.xlu0 %v810, 56
        %v1089 = vpop.permute.xlu0 %1088
        %v1092 = vsel %vm878, %v1084, 0
        %v1095 = vsel %vm878, %v1085, 0
        %v1098 = vsel %vm928, %v1089, 0
        %1100 = vmatprep.subr.bf16.mxu0 0
        %1101 = vmatpush1.bf16.msra.mxu0 0
        %1102 = vmatprep.subr.bf16.mxu0 0
        %1103 = vmatpush1.bf16.msra.mxu0 0
        %1104 = vmatprep.subr.bf16.mxu0 0
        %1105 = vmatpush1.bf16.msra.mxu0 0
        %1106 = vmatprep.subr.bf16.mxu0 0
        %1107 = vmatpush1.bf16.msra.mxu0 0
        %1108 = vmatprep.subr.bf16.mxu0 0
        %1109 = vmatpush1.bf16.msra.mxu0 0
        %1110 = vmatprep.subr.bf16.mxu0 0
        %1111 = vmatpush1.bf16.msra.mxu0 0
        %1112 = vmatprep.subr.bf16.mxu0 0
        %1113 = vmatpush1.bf16.msra.mxu0 %v1098
        %1114 = vmatprep.subr.bf16.mxu0 0
        %1115 = vmatpush1.bf16.msra.mxu0 %v1087
        %1116 = vmatprep.subr.bf16.mxu0 0
        %1117 = vmatpush2.bf16.msra.mxu0 0
        %1118 = vmatprep.subr.bf16.mxu0 0
        %1119 = vmatpush2.bf16.msra.mxu0 0
        %1120 = vmatprep.subr.bf16.mxu0 0
        %1121 = vmatpush2.bf16.msra.mxu0 0
        %1122 = vmatprep.subr.bf16.mxu0 0
        %1123 = vmatpush2.bf16.msra.mxu0 0
        %1124 = vmatprep.subr.bf16.mxu0 0
        %1125 = vmatpush2.bf16.msra.mxu0 0
        %1126 = vmatprep.subr.bf16.mxu0 0
        %1127 = vmatpush2.bf16.msra.mxu0 0
        %1128 = vmatprep.subr.bf16.mxu0 0
        %1129 = vmatpush2.bf16.msra.mxu0 0
        %1130 = vmatprep.subr.bf16.mxu0 0
        %1131 = vmatpush2.bf16.msra.mxu0 0
        %1132 = vmatprep.mubr.bf16.mxu0 0
        %1133 = vmatmul.mubr.bf16.gmra.mxu0 %v1092
        %v1134 = vpop.f32.mrf.mxu0
        %v1135 = vadd.f32 0.0, %v1134
        %v1136 = vpop.f32.mrf.mxu0
        %v1137 = vpop.f32.mrf.mxu0
        %v1138 = vadd.f32 0.0, %v1137
        %v1139 = vpop.f32.mrf.mxu0
        %1140 = vmatprep.mubr.bf16.mxu0 0
        %1141 = vmatmul.mubr.bf16.gmra.mxu0 %v1095
        %v1142 = vpop.f32.mrf.mxu0
        %v1143 = vadd.f32 0.0, %v1142
        %v1144 = vpop.f32.mrf.mxu0
        %v1145 = vpop.f32.mrf.mxu0
        %v1146 = vpop.f32.mrf.mxu0
        %1147 = vdwg.mxu0
        %1148 = vrot.lane.b32.xlu0 %v809, 112
        %v1149 = vpop.permute.xlu0 %1148
        %1150 = vrot.lane.b32.xlu0 %v810, 112
        %v1151 = vpop.permute.xlu0 %1150
        %1152 = vrot.lane.b32.xlu0 %v809, 80
        %v1153 = vpop.permute.xlu0 %1152
        %1154 = vrot.lane.b32.xlu0 %v810, 80
        %v1155 = vpop.permute.xlu0 %1154
        %v1157 = vsel %vm817, %v1149, 0
        %v1160 = vsel %vm817, %v1151, 0
        %v1163 = vsel %vm817, %v1153, 0
        %v1166 = vsel %vm817, %v1155, 0
        %1168 = vmatprep.subr.bf16.mxu0 0
        %1169 = vmatpush1.bf16.xpose.msra.mxu0 0
        %1170 = vmatprep.subr.bf16.mxu0 0
        %1171 = vmatpush1.bf16.xpose.msra.mxu0 0
        %1172 = vmatprep.subr.bf16.mxu0 0
        %1173 = vmatpush1.bf16.xpose.msra.mxu0 0
        %1174 = vmatprep.subr.bf16.mxu0 0
        %1175 = vmatpush1.bf16.xpose.msra.mxu0 0
        %1176 = vmatprep.subr.bf16.mxu0 0
        %1177 = vmatpush1.bf16.xpose.msra.mxu0 0
        %1178 = vmatprep.subr.bf16.mxu0 0
        %1179 = vmatpush1.bf16.xpose.msra.mxu0 0
        %1180 = vmatprep.subr.bf16.mxu0 0
        %1181 = vmatpush1.bf16.xpose.msra.mxu0 %v1166
        %1182 = vmatprep.subr.bf16.mxu0 0
        %1183 = vmatpush1.bf16.xpose.msra.mxu0 %v1163
        %1184 = vmatprep.subr.bf16.mxu0 0
        %1185 = vmatpush2.bf16.xpose.msra.mxu0 0
        %1186 = vmatprep.subr.bf16.mxu0 0
        %1187 = vmatpush2.bf16.xpose.msra.mxu0 0
        %1188 = vmatprep.subr.bf16.mxu0 0
        %1189 = vmatpush2.bf16.xpose.msra.mxu0 0
        %1190 = vmatprep.subr.bf16.mxu0 0
        %1191 = vmatpush2.bf16.xpose.msra.mxu0 0
        %1192 = vmatprep.subr.bf16.mxu0 0
        %1193 = vmatpush2.bf16.xpose.msra.mxu0 0
        %1194 = vmatprep.subr.bf16.mxu0 0
        %1195 = vmatpush2.bf16.xpose.msra.mxu0 0
        %1196 = vmatprep.subr.bf16.mxu0 0
        %1197 = vmatpush2.bf16.xpose.msra.mxu0 0
        %1198 = vmatprep.subr.bf16.mxu0 0
        %1199 = vmatpush2.bf16.xpose.msra.mxu0 0
        %1200 = vmatprep.mubr.bf16.mxu0 0
        %1201 = vmatmul.mubr.bf16.gmra.mxu0 %v1157
        %v1202 = vpop.f32.mrf.mxu0
        %v1203 = vadd.f32 0.0, %v1202
        %v1204 = vpop.f32.mrf.mxu0
        %v1205 = vpop.f32.mrf.mxu0
        %v1206 = vadd.f32 0.0, %v1205
        %v1207 = vpop.f32.mrf.mxu0
        %1208 = vmatprep.mubr.bf16.mxu0 0
        %1209 = vmatmul.mubr.bf16.gmra.mxu0 %v1160
        %v1210 = vpop.f32.mrf.mxu0
        %v1211 = vadd.f32 0.0, %v1210
        %v1212 = vpop.f32.mrf.mxu0
        %v1213 = vpop.f32.mrf.mxu0
        %v1214 = vpop.f32.mrf.mxu0
        %1215 = vdwg.mxu0
        %v1216 = vsel %vm878, %v1203, -inf
        %1217 = vmax.xlane.f32.xlu0 %v1216
        %v1218 = vpop.xlane.xlu0 %1217
        %v1219 = vsel %vm878, %v1206, -inf
        %1220 = vmax.xlane.f32.xlu0 %v1219
        %v1221 = vpop.xlane.xlu0 %1220
        %v1222 = vsel %vm878, %v1211, -inf
        %1223 = vmax.xlane.f32.xlu0 %v1222
        %v1224 = vpop.xlane.xlu0 %1223
        %v1225 = vsub.f32 %v1203, %v1218
        %v1226 = vsub.f32 %v1206, %v1221
        %v1227 = vsub.f32 %v1211, %v1224
        %v1228 = vmul.f32 %v1225, 1.442695
        %v1229 = vpow.pop %v1228
        %v1230 = vmul.f32 %v1226, 1.442695
        %v1231 = vpow.pop %v1230
        %v1232 = vmul.f32 %v1227, 1.442695
        %v1233 = vpow.pop %v1232
        %v1234 = vmul.f32 %v1229, %v728
        %v1235 = vmul.f32 %v1231, %v728
        %v1236 = vmul.f32 %v1233, %v728
        %v1237 = vsel %vm878, %v1234, 0.0
        %1238 = vadd.xlane.f32.xlu0 %v1237
        %v1239 = vpop.xlane.xlu0 %1238
        %v1240 = vsel %vm878, %v1235, 0.0
        %1241 = vadd.xlane.f32.xlu0 %v1240
        %v1242 = vpop.xlane.xlu0 %1241
        %v1243 = vsel %vm878, %v1236, 0.0
        %1244 = vadd.xlane.f32.xlu0 %v1243
        %v1245 = vpop.xlane.xlu0 %1244
        %v1246 = vrcp.pop %v1239
        %v1247 = vrcp.pop %v1242
        %v1248 = vrcp.pop %v1245
        %v1249 = vmul.f32 %v1234, %v1246
        %v1250 = vmul.f32 %v1235, %v1247
        %v1251 = vmul.f32 %v1236, %v1248
        %v1252 = vpack.c.bf16 %v1250, %v1249
        %v1253 = vpack.c.bf16 %v1251, %v1251
        %1254 = vrot.lane.b32.xlu0 %v809, 48
        %v1255 = vpop.permute.xlu0 %1254
        %1256 = vrot.lane.b32.xlu0 %v810, 48
        %v1257 = vpop.permute.xlu0 %1256
        %v1260 = vsel %vm878, %v1252, 0
        %v1263 = vsel %vm878, %v1253, 0
        %v1266 = vsel %vm928, %v1257, 0
        %1268 = vmatprep.subr.bf16.mxu0 0
        %1269 = vmatpush1.bf16.msra.mxu0 0
        %1270 = vmatprep.subr.bf16.mxu0 0
        %1271 = vmatpush1.bf16.msra.mxu0 0
        %1272 = vmatprep.subr.bf16.mxu0 0
        %1273 = vmatpush1.bf16.msra.mxu0 0
        %1274 = vmatprep.subr.bf16.mxu0 0
        %1275 = vmatpush1.bf16.msra.mxu0 0
        %1276 = vmatprep.subr.bf16.mxu0 0
        %1277 = vmatpush1.bf16.msra.mxu0 0
        %1278 = vmatprep.subr.bf16.mxu0 0
        %1279 = vmatpush1.bf16.msra.mxu0 0
        %1280 = vmatprep.subr.bf16.mxu0 0
        %1281 = vmatpush1.bf16.msra.mxu0 %v1266
        %1282 = vmatprep.subr.bf16.mxu0 0
        %1283 = vmatpush1.bf16.msra.mxu0 %v1255
        %1284 = vmatprep.subr.bf16.mxu0 0
        %1285 = vmatpush2.bf16.msra.mxu0 0
        %1286 = vmatprep.subr.bf16.mxu0 0
        %1287 = vmatpush2.bf16.msra.mxu0 0
        %1288 = vmatprep.subr.bf16.mxu0 0
        %1289 = vmatpush2.bf16.msra.mxu0 0
        %1290 = vmatprep.subr.bf16.mxu0 0
        %1291 = vmatpush2.bf16.msra.mxu0 0
        %1292 = vmatprep.subr.bf16.mxu0 0
        %1293 = vmatpush2.bf16.msra.mxu0 0
        %1294 = vmatprep.subr.bf16.mxu0 0
        %1295 = vmatpush2.bf16.msra.mxu0 0
        %1296 = vmatprep.subr.bf16.mxu0 0
        %1297 = vmatpush2.bf16.msra.mxu0 0
        %1298 = vmatprep.subr.bf16.mxu0 0
        %1299 = vmatpush2.bf16.msra.mxu0 0
        %1300 = vmatprep.mubr.bf16.mxu0 0
        %1301 = vmatmul.mubr.bf16.gmra.mxu0 %v1260
        %v1302 = vpop.f32.mrf.mxu0
        %v1303 = vadd.f32 0.0, %v1302
        %v1304 = vpop.f32.mrf.mxu0
        %v1305 = vpop.f32.mrf.mxu0
        %v1306 = vadd.f32 0.0, %v1305
        %v1307 = vpop.f32.mrf.mxu0
        %1308 = vmatprep.mubr.bf16.mxu0 0
        %1309 = vmatmul.mubr.bf16.gmra.mxu0 %v1263
        %v1310 = vpop.f32.mrf.mxu0
        %v1311 = vadd.f32 0.0, %v1310
        %v1312 = vpop.f32.mrf.mxu0
        %v1313 = vpop.f32.mrf.mxu0
        %v1314 = vpop.f32.mrf.mxu0
        %1315 = vdwg.mxu0
        %1316 = vrot.lane.b32.xlu0 %v809, 104
        %v1317 = vpop.permute.xlu0 %1316
        %1318 = vrot.lane.b32.xlu0 %v810, 104
        %v1319 = vpop.permute.xlu0 %1318
        %1320 = vrot.lane.b32.xlu0 %v809, 72
        %v1321 = vpop.permute.xlu0 %1320
        %1322 = vrot.lane.b32.xlu0 %v810, 72
        %v1323 = vpop.permute.xlu0 %1322
        %v1325 = vsel %vm817, %v1317, 0
        %v1328 = vsel %vm817, %v1319, 0
        %v1331 = vsel %vm817, %v1321, 0
        %v1334 = vsel %vm817, %v1323, 0
        %1336 = vmatprep.subr.bf16.mxu0 0
        %1337 = vmatpush1.bf16.xpose.msra.mxu0 0
        %1338 = vmatprep.subr.bf16.mxu0 0
        %1339 = vmatpush1.bf16.xpose.msra.mxu0 0
        %1340 = vmatprep.subr.bf16.mxu0 0
        %1341 = vmatpush1.bf16.xpose.msra.mxu0 0
        %1342 = vmatprep.subr.bf16.mxu0 0
        %1343 = vmatpush1.bf16.xpose.msra.mxu0 0
        %1344 = vmatprep.subr.bf16.mxu0 0
        %1345 = vmatpush1.bf16.xpose.msra.mxu0 0
        %1346 = vmatprep.subr.bf16.mxu0 0
        %1347 = vmatpush1.bf16.xpose.msra.mxu0 0
        %1348 = vmatprep.subr.bf16.mxu0 0
        %1349 = vmatpush1.bf16.xpose.msra.mxu0 %v1334
        %1350 = vmatprep.subr.bf16.mxu0 0
        %1351 = vmatpush1.bf16.xpose.msra.mxu0 %v1331
        %1352 = vmatprep.subr.bf16.mxu0 0
        %1353 = vmatpush2.bf16.xpose.msra.mxu0 0
        %1354 = vmatprep.subr.bf16.mxu0 0
        %1355 = vmatpush2.bf16.xpose.msra.mxu0 0
        %1356 = vmatprep.subr.bf16.mxu0 0
        %1357 = vmatpush2.bf16.xpose.msra.mxu0 0
        %1358 = vmatprep.subr.bf16.mxu0 0
        %1359 = vmatpush2.bf16.xpose.msra.mxu0 0
        %1360 = vmatprep.subr.bf16.mxu0 0
        %1361 = vmatpush2.bf16.xpose.msra.mxu0 0
        %1362 = vmatprep.subr.bf16.mxu0 0
        %1363 = vmatpush2.bf16.xpose.msra.mxu0 0
        %1364 = vmatprep.subr.bf16.mxu0 0
        %1365 = vmatpush2.bf16.xpose.msra.mxu0 0
        %1366 = vmatprep.subr.bf16.mxu0 0
        %1367 = vmatpush2.bf16.xpose.msra.mxu0 0
        %1368 = vmatprep.mubr.bf16.mxu0 0
        %1369 = vmatmul.mubr.bf16.gmra.mxu0 %v1325
        %v1370 = vpop.f32.mrf.mxu0
        %v1371 = vadd.f32 0.0, %v1370
        %v1372 = vpop.f32.mrf.mxu0
        %v1373 = vpop.f32.mrf.mxu0
        %v1374 = vadd.f32 0.0, %v1373
        %v1375 = vpop.f32.mrf.mxu0
        %1376 = vmatprep.mubr.bf16.mxu0 0
        %1377 = vmatmul.mubr.bf16.gmra.mxu0 %v1328
        %v1378 = vpop.f32.mrf.mxu0
        %v1379 = vadd.f32 0.0, %v1378
        %v1380 = vpop.f32.mrf.mxu0
        %v1381 = vpop.f32.mrf.mxu0
        %v1382 = vpop.f32.mrf.mxu0
        %1383 = vdwg.mxu0
        %v1384 = vsel %vm878, %v1371, -inf
        %1385 = vmax.xlane.f32.xlu0 %v1384
        %v1386 = vpop.xlane.xlu0 %1385
        %v1387 = vsel %vm878, %v1374, -inf
        %1388 = vmax.xlane.f32.xlu0 %v1387
        %v1389 = vpop.xlane.xlu0 %1388
        %v1390 = vsel %vm878, %v1379, -inf
        %1391 = vmax.xlane.f32.xlu0 %v1390
        %v1392 = vpop.xlane.xlu0 %1391
        %v1393 = vsub.f32 %v1371, %v1386
        %v1394 = vsub.f32 %v1374, %v1389
        %v1395 = vsub.f32 %v1379, %v1392
        %v1396 = vmul.f32 %v1393, 1.442695
        %v1397 = vpow.pop %v1396
        %v1398 = vmul.f32 %v1394, 1.442695
        %v1399 = vpow.pop %v1398
        %v1400 = vmul.f32 %v1395, 1.442695
        %v1401 = vpow.pop %v1400
        %v1402 = vmul.f32 %v1397, %v728
        %v1403 = vmul.f32 %v1399, %v728
        %v1404 = vmul.f32 %v1401, %v728
        %v1405 = vsel %vm878, %v1402, 0.0
        %1406 = vadd.xlane.f32.xlu0 %v1405
        %v1407 = vpop.xlane.xlu0 %1406
        %v1408 = vsel %vm878, %v1403, 0.0
        %1409 = vadd.xlane.f32.xlu0 %v1408
        %v1410 = vpop.xlane.xlu0 %1409
        %v1411 = vsel %vm878, %v1404, 0.0
        %1412 = vadd.xlane.f32.xlu0 %v1411
        %v1413 = vpop.xlane.xlu0 %1412
        %v1414 = vrcp.pop %v1407
        %v1415 = vrcp.pop %v1410
        %v1416 = vrcp.pop %v1413
        %v1417 = vmul.f32 %v1402, %v1414
        %v1418 = vmul.f32 %v1403, %v1415
        %v1419 = vmul.f32 %v1404, %v1416
        %v1420 = vpack.c.bf16 %v1418, %v1417
        %v1421 = vpack.c.bf16 %v1419, %v1419
        %1422 = vrot.lane.b32.xlu0 %v809, 40
        %v1423 = vpop.permute.xlu0 %1422
        %1424 = vrot.lane.b32.xlu0 %v810, 40
        %v1425 = vpop.permute.xlu0 %1424
        %v1428 = vsel %vm878, %v1420, 0
        %v1431 = vsel %vm878, %v1421, 0
        %v1434 = vsel %vm928, %v1425, 0
        %1436 = vmatprep.subr.bf16.mxu0 0
        %1437 = vmatpush1.bf16.msra.mxu0 0
        %1438 = vmatprep.subr.bf16.mxu0 0
        %1439 = vmatpush1.bf16.msra.mxu0 0
        %1440 = vmatprep.subr.bf16.mxu0 0
        %1441 = vmatpush1.bf16.msra.mxu0 0
        %1442 = vmatprep.subr.bf16.mxu0 0
        %1443 = vmatpush1.bf16.msra.mxu0 0
        %1444 = vmatprep.subr.bf16.mxu0 0
        %1445 = vmatpush1.bf16.msra.mxu0 0
        %1446 = vmatprep.subr.bf16.mxu0 0
        %1447 = vmatpush1.bf16.msra.mxu0 0
        %1448 = vmatprep.subr.bf16.mxu0 0
        %1449 = vmatpush1.bf16.msra.mxu0 %v1434
        %1450 = vmatprep.subr.bf16.mxu0 0
        %1451 = vmatpush1.bf16.msra.mxu0 %v1423
        %1452 = vmatprep.subr.bf16.mxu0 0
        %1453 = vmatpush2.bf16.msra.mxu0 0
        %1454 = vmatprep.subr.bf16.mxu0 0
        %1455 = vmatpush2.bf16.msra.mxu0 0
        %1456 = vmatprep.subr.bf16.mxu0 0
        %1457 = vmatpush2.bf16.msra.mxu0 0
        %1458 = vmatprep.subr.bf16.mxu0 0
        %1459 = vmatpush2.bf16.msra.mxu0 0
        %1460 = vmatprep.subr.bf16.mxu0 0
        %1461 = vmatpush2.bf16.msra.mxu0 0
        %1462 = vmatprep.subr.bf16.mxu0 0
        %1463 = vmatpush2.bf16.msra.mxu0 0
        %1464 = vmatprep.subr.bf16.mxu0 0
        %1465 = vmatpush2.bf16.msra.mxu0 0
        %1466 = vmatprep.subr.bf16.mxu0 0
        %1467 = vmatpush2.bf16.msra.mxu0 0
        %1468 = vmatprep.mubr.bf16.mxu0 0
        %1469 = vmatmul.mubr.bf16.gmra.mxu0 %v1428
        %v1470 = vpop.f32.mrf.mxu0
        %v1471 = vadd.f32 0.0, %v1470
        %v1472 = vpop.f32.mrf.mxu0
        %v1473 = vpop.f32.mrf.mxu0
        %v1474 = vadd.f32 0.0, %v1473
        %v1475 = vpop.f32.mrf.mxu0
        %1476 = vmatprep.mubr.bf16.mxu0 0
        %1477 = vmatmul.mubr.bf16.gmra.mxu0 %v1431
        %v1478 = vpop.f32.mrf.mxu0
        %v1479 = vadd.f32 0.0, %v1478
        %v1480 = vpop.f32.mrf.mxu0
        %v1481 = vpop.f32.mrf.mxu0
        %v1482 = vpop.f32.mrf.mxu0
        %1483 = vdwg.mxu0
        %1487 = vrot.lane.b32.xlu0 %v1135, 8
        %v1488 = vpop.permute.xlu0 %1487
        %1489 = vrot.lane.b32.xlu0 %v1138, 8
        %v1490 = vpop.permute.xlu0 %1489
        %1491 = vrot.lane.b32.xlu0 %v1143, 8
        %v1492 = vpop.permute.xlu0 %1491
        %1499 = vrot.lane.b32.xlu0 %v1303, 16
        %v1500 = vpop.permute.xlu0 %1499
        %1501 = vrot.lane.b32.xlu0 %v1306, 16
        %v1502 = vpop.permute.xlu0 %1501
        %1503 = vrot.lane.b32.xlu0 %v1311, 16
        %v1504 = vpop.permute.xlu0 %1503
        %1511 = vrot.lane.b32.xlu0 %v1471, 24
        %v1512 = vpop.permute.xlu0 %1511
        %1513 = vrot.lane.b32.xlu0 %v1474, 24
        %v1514 = vpop.permute.xlu0 %1513
        %1515 = vrot.lane.b32.xlu0 %v1479, 24
        %v1516 = vpop.permute.xlu0 %1515
        %v1520 = vsel %vm817, %v967, %v1488
        %v1521 = vsel %vm817, %v970, %v1490
        %v1522 = vsel %vm817, %v975, %v1492
        %vm1523 = vcmask 130048
        %v1524 = vsel %vm1523, %v1520, %v1500
        %v1525 = vsel %vm1523, %v1521, %v1502
        %v1526 = vsel %vm1523, %v1522, %v1504
        %v1527 = vsel %vm878, %v1524, %v1512
        %v1528 = vsel %vm878, %v1525, %v1514
        %v1529 = vsel %vm878, %v1526, %v1516
        %v1530 = vpack.c.bf16 %v1528, %v1527
        %v1531 = vpack.c.bf16 %v1529, %v1529
        %v1532 = vld [vmem:[%s5] sm:$0xf]
        %v1533 = vld [vmem:[%s5 + $0x4] sm:$0xf]
        %v1534 = vld [vmem:[%s5 + $0x8] sm:$0xf]
        %v1535 = vld [vmem:[%s5 + $0xc] sm:$0xf]
        %v1536 = vld [vmem:[%s6] sm:$0x1]
        %v1538 = vlaneseq
        %v1539 = vshrl.u32 %v1538, 7
        %v1540 = vsub.s32 0, %v1539
        %v1541 = vrot.slane %v1536, %v1540
        %v1547 = vunpack.c.l.b16 %v1532
        %v1548 = vunpack.c.l.b16 %v1533
        %v1549 = vunpack.c.l.b16 %v1534
        %v1550 = vunpack.c.l.b16 %v1535
        %v1551 = vpack.c.b16 %v1548, %v1547
        %v1552 = vpack.c.b16 %v1550, %v1549
        %v1556 = vsel %vm754, %v1530, 0
        %v1559 = vsel %vm754, %v1531, 0
        %1561 = vmatprep.subr.bf16.mxu0 0
        %1562 = vmatpush1.bf16.msra.mxu0 0
        %1563 = vmatprep.subr.bf16.mxu0 0
        %1564 = vmatpush1.bf16.msra.mxu0 0
        %1565 = vmatprep.subr.bf16.mxu0 0
        %1566 = vmatpush1.bf16.msra.mxu0 0
        %1567 = vmatprep.subr.bf16.mxu0 0
        %1568 = vmatpush1.bf16.msra.mxu0 0
        %1569 = vmatprep.subr.bf16.mxu0 0
        %1570 = vmatpush1.bf16.msra.mxu0 0
        %1571 = vmatprep.subr.bf16.mxu0 0
        %1572 = vmatpush1.bf16.msra.mxu0 0
        %1573 = vmatprep.subr.bf16.mxu0 0
        %1574 = vmatpush1.bf16.msra.mxu0 %v1552
        %1575 = vmatprep.subr.bf16.mxu0 0
        %1576 = vmatpush1.bf16.msra.mxu0 %v1551
        %1577 = vmatprep.subr.bf16.mxu0 0
        %1578 = vmatpush2.bf16.msra.mxu0 0
        %1579 = vmatprep.subr.bf16.mxu0 0
        %1580 = vmatpush2.bf16.msra.mxu0 0
        %1581 = vmatprep.subr.bf16.mxu0 0
        %1582 = vmatpush2.bf16.msra.mxu0 0
        %1583 = vmatprep.subr.bf16.mxu0 0
        %1584 = vmatpush2.bf16.msra.mxu0 0
        %1585 = vmatprep.subr.bf16.mxu0 0
        %1586 = vmatpush2.bf16.msra.mxu0 0
        %1587 = vmatprep.subr.bf16.mxu0 0
        %1588 = vmatpush2.bf16.msra.mxu0 0
        %1589 = vmatprep.subr.bf16.mxu0 0
        %1590 = vmatpush2.bf16.msra.mxu0 0
        %1591 = vmatprep.subr.bf16.mxu0 0
        %1592 = vmatpush2.bf16.msra.mxu0 0
        %1593 = vmatprep.mubr.bf16.mxu0 0
        %1594 = vmatmul.mubr.bf16.gmra.mxu0 %v1556
        %v1595 = vpop.f32.mrf.mxu0
        %v1596 = vadd.f32 %v1541, %v1595
        %v1597 = vpop.f32.mrf.mxu0
        %v1598 = vpop.f32.mrf.mxu0
        %v1599 = vadd.f32 %v1541, %v1598
        %v1600 = vpop.f32.mrf.mxu0
        %1601 = vmatprep.mubr.bf16.mxu0 0
        %1602 = vmatmul.mubr.bf16.gmra.mxu0 %v1559
        %v1603 = vpop.f32.mrf.mxu0
        %v1604 = vadd.f32 %v1541, %v1603
        %v1605 = vpop.f32.mrf.mxu0
        %v1606 = vpop.f32.mrf.mxu0
        %v1607 = vpop.f32.mrf.mxu0
        %1608 = vdwg.mxu0
        %v1609 = vadd.f32 %v721, %v1596
        %v1610 = vadd.f32 %v722, %v1599
        %v1611 = vadd.f32 %v723, %v1604
        %v1612 = vld [vmem:[%s7] sm:$0x1]
        %v1613 = vld [vmem:[%s8] sm:$0x1]
        %v1614 = vsel %vm754, %v1609, 0.0
        %1615 = vadd.xlane.f32.xlu0 %v1614
        %v1616 = vpop.xlane.xlu0 %1615
        %v1617 = vsel %vm754, %v1610, 0.0
        %1618 = vadd.xlane.f32.xlu0 %v1617
        %v1619 = vpop.xlane.xlu0 %1618
        %v1620 = vsel %vm754, %v1611, 0.0
        %1621 = vadd.xlane.f32.xlu0 %v1620
        %v1622 = vpop.xlane.xlu0 %1621
        %v1623 = vrcp.pop 32.0
        %v1624 = vmul.f32 %v1616, %v1623
        %v1625 = vmul.f32 %v1619, %v1623
        %v1626 = vmul.f32 %v1622, %v1623
        %v1627 = vsub.f32 %v1609, %v1624
        %v1628 = vsub.f32 %v1610, %v1625
        %v1629 = vsub.f32 %v1611, %v1626
        %v1630 = vmul.f32 %v1627, %v1627
        %v1631 = vmul.f32 %v1628, %v1628
        %v1632 = vmul.f32 %v1629, %v1629
        %v1633 = vsel %vm754, %v1630, 0.0
        %1634 = vadd.xlane.f32.xlu0 %v1633
        %v1635 = vpop.xlane.xlu0 %1634
        %v1636 = vsel %vm754, %v1631, 0.0
        %1637 = vadd.xlane.f32.xlu0 %v1636
        %v1638 = vpop.xlane.xlu0 %1637
        %v1639 = vsel %vm754, %v1632, 0.0
        %1640 = vadd.xlane.f32.xlu0 %v1639
        %v1641 = vpop.xlane.xlu0 %1640
        %v1642 = vmul.f32 %v1635, %v1623
        %v1643 = vmul.f32 %v1638, %v1623
        %v1644 = vmul.f32 %v1641, %v1623
        %v1645 = vadd.f32 %v1642, 1e-05
        %v1646 = vadd.f32 %v1643, 1e-05
        %v1647 = vadd.f32 %v1644, 1e-05
        %v1648 = vrsqrt.pop %v1645
        %v1649 = vrsqrt.pop %v1646
        %v1650 = vrsqrt.pop %v1647
        %v1651 = vmul.f32 %v1627, %v1648
        %v1652 = vmul.f32 %v1628, %v1649
        %v1653 = vmul.f32 %v1629, %v1650
        %v1655 = vlaneseq
        %v1656 = vshrl.u32 %v1655, 7
        %v1657 = vsub.s32 0, %v1656
        %v1658 = vrot.slane %v1612, %v1657
        %v1660 = vmul.f32 %v1651, %v1658
        %v1661 = vmul.f32 %v1652, %v1658
        %v1662 = vmul.f32 %v1653, %v1658
        %v1664 = vlaneseq
        %v1665 = vshrl.u32 %v1664, 7
        %v1666 = vsub.s32 0, %v1665
        %v1667 = vrot.slane %v1613, %v1666
        %v1669 = vadd.f32 %v1660, %v1667
        %v1670 = vadd.f32 %v1661, %v1667
        %v1671 = vadd.f32 %v1662, %v1667
        %v1672 = vpack.c.bf16 %v1670, %v1669
        %v1673 = vpack.c.bf16 %v1671, %v1671
        %v1674 = vld [vmem:[%s9] sm:$0xf]
        %v1675 = vld [vmem:[%s9 + $0x4] sm:$0xf]
        %v1676 = vld [vmem:[%s9 + $0x8] sm:$0xf]
        %v1677 = vld [vmem:[%s9 + $0xc] sm:$0xf]
        %v1678 = vld [vmem:[%s10] sm:$0x1]
        %v1680 = vlaneseq
        %v1681 = vshrl.u32 %v1680, 7
        %v1682 = vsub.s32 0, %v1681
        %v1683 = vrot.slane %v1678, %v1682
        %v1689 = vunpack.c.l.b16 %v1674
        %v1690 = vunpack.c.l.b16 %v1675
        %v1691 = vunpack.c.l.b16 %v1676
        %v1692 = vunpack.c.l.b16 %v1677
        %v1693 = vpack.c.b16 %v1690, %v1689
        %v1694 = vpack.c.b16 %v1692, %v1691
        %v1698 = vsel %vm754, %v1672, 0
        %v1701 = vsel %vm754, %v1673, 0
        %1703 = vmatprep.subr.bf16.mxu0 0
        %1704 = vmatpush1.bf16.msra.mxu0 0
        %1705 = vmatprep.subr.bf16.mxu0 0
        %1706 = vmatpush1.bf16.msra.mxu0 0
        %1707 = vmatprep.subr.bf16.mxu0 0
        %1708 = vmatpush1.bf16.msra.mxu0 0
        %1709 = vmatprep.subr.bf16.mxu0 0
        %1710 = vmatpush1.bf16.msra.mxu0 0
        %1711 = vmatprep.subr.bf16.mxu0 0
        %1712 = vmatpush1.bf16.msra.mxu0 0
        %1713 = vmatprep.subr.bf16.mxu0 0
        %1714 = vmatpush1.bf16.msra.mxu0 0
        %1715 = vmatprep.subr.bf16.mxu0 0
        %1716 = vmatpush1.bf16.msra.mxu0 %v1694
        %1717 = vmatprep.subr.bf16.mxu0 0
        %1718 = vmatpush1.bf16.msra.mxu0 %v1693
        %1719 = vmatprep.subr.bf16.mxu0 0
        %1720 = vmatpush2.bf16.msra.mxu0 0
        %1721 = vmatprep.subr.bf16.mxu0 0
        %1722 = vmatpush2.bf16.msra.mxu0 0
        %1723 = vmatprep.subr.bf16.mxu0 0
        %1724 = vmatpush2.bf16.msra.mxu0 0
        %1725 = vmatprep.subr.bf16.mxu0 0
        %1726 = vmatpush2.bf16.msra.mxu0 0
        %1727 = vmatprep.subr.bf16.mxu0 0
        %1728 = vmatpush2.bf16.msra.mxu0 0
        %1729 = vmatprep.subr.bf16.mxu0 0
        %1730 = vmatpush2.bf16.msra.mxu0 0
        %1731 = vmatprep.subr.bf16.mxu0 0
        %1732 = vmatpush2.bf16.msra.mxu0 0
        %1733 = vmatprep.subr.bf16.mxu0 0
        %1734 = vmatpush2.bf16.msra.mxu0 0
        %1735 = vmatprep.mubr.bf16.mxu0 0
        %1736 = vmatmul.mubr.bf16.gmra.mxu0 %v1698
        %v1737 = vpop.f32.mrf.mxu0
        %v1738 = vadd.f32 %v1683, %v1737
        %v1739 = vpop.f32.mrf.mxu0
        %v1740 = vpop.f32.mrf.mxu0
        %v1741 = vadd.f32 %v1683, %v1740
        %v1742 = vpop.f32.mrf.mxu0
        %1743 = vmatprep.mubr.bf16.mxu0 0
        %1744 = vmatmul.mubr.bf16.gmra.mxu0 %v1701
        %v1745 = vpop.f32.mrf.mxu0
        %v1746 = vadd.f32 %v1683, %v1745
        %v1747 = vpop.f32.mrf.mxu0
        %v1748 = vpop.f32.mrf.mxu0
        %v1749 = vpop.f32.mrf.mxu0
        %1750 = vdwg.mxu0
        %v1751 = vmax.f32 %v1738, 0.0
        %v1752 = vmax.f32 %v1741, 0.0
        %v1753 = vmax.f32 %v1746, 0.0
        %v1754 = vpack.c.bf16 %v1752, %v1751
        %v1755 = vpack.c.bf16 %v1753, %v1753
        %v1756 = vld [vmem:[%s11] sm:$0xf]
        %v1757 = vld [vmem:[%s11 + $0x4] sm:$0xf]
        %v1758 = vld [vmem:[%s11 + $0x8] sm:$0xf]
        %v1759 = vld [vmem:[%s11 + $0xc] sm:$0xf]
        %v1760 = vld [vmem:[%s11 + $0x10] sm:$0xf]
        %v1761 = vld [vmem:[%s11 + $0x14] sm:$0xf]
        %v1762 = vld [vmem:[%s11 + $0x18] sm:$0xf]
        %v1763 = vld [vmem:[%s11 + $0x1c] sm:$0xf]
        %v1764 = vld [vmem:[%s12] sm:$0x1]
        %v1766 = vlaneseq
        %v1767 = vshrl.u32 %v1766, 7
        %v1768 = vsub.s32 0, %v1767
        %v1769 = vrot.slane %v1764, %v1768
        %v1779 = vunpack.c.l.b16 %v1756
        %v1780 = vunpack.c.l.b16 %v1757
        %v1781 = vunpack.c.l.b16 %v1758
        %v1782 = vunpack.c.l.b16 %v1759
        %v1783 = vunpack.c.l.b16 %v1760
        %v1784 = vunpack.c.l.b16 %v1761
        %v1785 = vunpack.c.l.b16 %v1762
        %v1786 = vunpack.c.l.b16 %v1763
        %v1787 = vpack.c.b16 %v1780, %v1779
        %v1788 = vpack.c.b16 %v1782, %v1781
        %v1789 = vpack.c.b16 %v1784, %v1783
        %v1790 = vpack.c.b16 %v1786, %v1785
        %vm1795 = vcmask 523264
        %v1797 = vsel %vm1795, %v1754, 0
        %v1800 = vsel %vm1795, %v1755, 0
        %1802 = vmatprep.subr.bf16.mxu0 0
        %1803 = vmatpush1.bf16.msra.mxu0 0
        %1804 = vmatprep.subr.bf16.mxu0 0
        %1805 = vmatpush1.bf16.msra.mxu0 0
        %1806 = vmatprep.subr.bf16.mxu0 0
        %1807 = vmatpush1.bf16.msra.mxu0 0
        %1808 = vmatprep.subr.bf16.mxu0 0
        %1809 = vmatpush1.bf16.msra.mxu0 0
        %1810 = vmatprep.subr.bf16.mxu0 0
        %1811 = vmatpush1.bf16.msra.mxu0 %v1790
        %1812 = vmatprep.subr.bf16.mxu0 0
        %1813 = vmatpush1.bf16.msra.mxu0 %v1789
        %1814 = vmatprep.subr.bf16.mxu0 0
        %1815 = vmatpush1.bf16.msra.mxu0 %v1788
        %1816 = vmatprep.subr.bf16.mxu0 0
        %1817 = vmatpush1.bf16.msra.mxu0 %v1787
        %1818 = vmatprep.subr.bf16.mxu0 0
        %1819 = vmatpush2.bf16.msra.mxu0 0
        %1820 = vmatprep.subr.bf16.mxu0 0
        %1821 = vmatpush2.bf16.msra.mxu0 0
        %1822 = vmatprep.subr.bf16.mxu0 0
        %1823 = vmatpush2.bf16.msra.mxu0 0
        %1824 = vmatprep.subr.bf16.mxu0 0
        %1825 = vmatpush2.bf16.msra.mxu0 0
        %1826 = vmatprep.subr.bf16.mxu0 0
        %1827 = vmatpush2.bf16.msra.mxu0 0
        %1828 = vmatprep.subr.bf16.mxu0 0
        %1829 = vmatpush2.bf16.msra.mxu0 0
        %1830 = vmatprep.subr.bf16.mxu0 0
        %1831 = vmatpush2.bf16.msra.mxu0 0
        %1832 = vmatprep.subr.bf16.mxu0 0
        %1833 = vmatpush2.bf16.msra.mxu0 0
        %1834 = vmatprep.mubr.bf16.mxu0 0
        %1835 = vmatmul.mubr.bf16.gmra.mxu0 %v1797
        %v1836 = vpop.f32.mrf.mxu0
        %v1837 = vadd.f32 %v1769, %v1836
        %v1838 = vpop.f32.mrf.mxu0
        %v1839 = vpop.f32.mrf.mxu0
        %v1840 = vadd.f32 %v1769, %v1839
        %v1841 = vpop.f32.mrf.mxu0
        %1842 = vmatprep.mubr.bf16.mxu0 0
        %1843 = vmatmul.mubr.bf16.gmra.mxu0 %v1800
        %v1844 = vpop.f32.mrf.mxu0
        %v1845 = vadd.f32 %v1769, %v1844
        %v1846 = vpop.f32.mrf.mxu0
        %v1847 = vpop.f32.mrf.mxu0
        %v1848 = vpop.f32.mrf.mxu0
        %1849 = vdwg.mxu0
        %v1850 = vadd.f32 %v1669, %v1837
        %v1851 = vadd.f32 %v1670, %v1840
        %v1852 = vadd.f32 %v1671, %v1845
        %v1853 = vld [vmem:[%s13] sm:$0x1]
        %v1854 = vld [vmem:[%s14] sm:$0x1]
        %v1855 = vsel %vm754, %v1850, 0.0
        %1856 = vadd.xlane.f32.xlu0 %v1855
        %v1857 = vpop.xlane.xlu0 %1856
        %v1858 = vsel %vm754, %v1851, 0.0
        %1859 = vadd.xlane.f32.xlu0 %v1858
        %v1860 = vpop.xlane.xlu0 %1859
        %v1861 = vsel %vm754, %v1852, 0.0
        %1862 = vadd.xlane.f32.xlu0 %v1861
        %v1863 = vpop.xlane.xlu0 %1862
        %v1864 = vmul.f32 %v1857, %v1623
        %v1865 = vmul.f32 %v1860, %v1623
        %v1866 = vmul.f32 %v1863, %v1623
        %v1867 = vsub.f32 %v1850, %v1864
        %v1868 = vsub.f32 %v1851, %v1865
        %v1869 = vsub.f32 %v1852, %v1866
        %v1870 = vmul.f32 %v1867, %v1867
        %v1871 = vmul.f32 %v1868, %v1868
        %v1872 = vmul.f32 %v1869, %v1869
        %v1873 = vsel %vm754, %v1870, 0.0
        %1874 = vadd.xlane.f32.xlu0 %v1873
        %v1875 = vpop.xlane.xlu0 %1874
        %v1876 = vsel %vm754, %v1871, 0.0
        %1877 = vadd.xlane.f32.xlu0 %v1876
        %v1878 = vpop.xlane.xlu0 %1877
        %v1879 = vsel %vm754, %v1872, 0.0
        %1880 = vadd.xlane.f32.xlu0 %v1879
        %v1881 = vpop.xlane.xlu0 %1880
        %v1882 = vmul.f32 %v1875, %v1623
        %v1883 = vmul.f32 %v1878, %v1623
        %v1884 = vmul.f32 %v1881, %v1623
        %v1885 = vadd.f32 %v1882, 1e-05
        %v1886 = vadd.f32 %v1883, 1e-05
        %v1887 = vadd.f32 %v1884, 1e-05
        %v1888 = vrsqrt.pop %v1885
        %v1889 = vrsqrt.pop %v1886
        %v1890 = vrsqrt.pop %v1887
        %v1891 = vmul.f32 %v1867, %v1888
        %v1892 = vmul.f32 %v1868, %v1889
        %v1893 = vmul.f32 %v1869, %v1890
        %v1895 = vlaneseq
        %v1896 = vshrl.u32 %v1895, 7
        %v1897 = vsub.s32 0, %v1896
        %v1898 = vrot.slane %v1853, %v1897
        %v1900 = vmul.f32 %v1891, %v1898
        %v1901 = vmul.f32 %v1892, %v1898
        %v1902 = vmul.f32 %v1893, %v1898
        %v1904 = vlaneseq
        %v1905 = vshrl.u32 %v1904, 7
        %v1906 = vsub.s32 0, %v1905
        %v1907 = vrot.slane %v1854, %v1906
        %v1909 = vadd.f32 %v1900, %v1907
        %v1910 = vadd.f32 %v1901, %v1907
        %v1911 = vadd.f32 %v1902, %v1907
        %v1912 = vpack.c.bf16 %v1910, %v1909
        %v1913 = vpack.c.bf16 %v1911, %v1911
        %s1914 = scalar_lea.vmem %s3, 16
        %v1915 = vld [vmem:[%s1914] sm:$0xf]
        %v1916 = vld [vmem:[%s1914 + $0x4] sm:$0xf]
        %v1917 = vld [vmem:[%s1914 + $0x8] sm:$0xf]
        %v1918 = vld [vmem:[%s1914 + $0xc] sm:$0xf]
        %s1919 = scalar_lea.vmem %s4, 1
        %v1920 = vld [vmem:[%s1919] sm:$0x1]
        %v1922 = vlaneseq
        %v1923 = vshrl.u32 %v1922, 7
        %v1924 = vsub.s32 0, %v1923
        %v1925 = vrot.slane %v1920, %v1924
        %v1931 = vunpack.c.l.b16 %v1915
        %v1932 = vunpack.c.l.b16 %v1916
        %v1933 = vunpack.c.l.b16 %v1917
        %v1934 = vunpack.c.l.b16 %v1918
        %v1935 = vpack.c.b16 %v1932, %v1931
        %v1936 = vpack.c.b16 %v1934, %v1933
        %v1940 = vsel %vm754, %v1912, 0
        %v1943 = vsel %vm754, %v1913, 0
        %1945 = vmatprep.subr.bf16.mxu0 0
        %1946 = vmatpush1.bf16.msra.mxu0 0
        %1947 = vmatprep.subr.bf16.mxu0 0
        %1948 = vmatpush1.bf16.msra.mxu0 0
        %1949 = vmatprep.subr.bf16.mxu0 0
        %1950 = vmatpush1.bf16.msra.mxu0 0
        %1951 = vmatprep.subr.bf16.mxu0 0
        %1952 = vmatpush1.bf16.msra.mxu0 0
        %1953 = vmatprep.subr.bf16.mxu0 0
        %1954 = vmatpush1.bf16.msra.mxu0 0
        %1955 = vmatprep.subr.bf16.mxu0 0
        %1956 = vmatpush1.bf16.msra.mxu0 0
        %1957 = vmatprep.subr.bf16.mxu0 0
        %1958 = vmatpush1.bf16.msra.mxu0 %v1936
        %1959 = vmatprep.subr.bf16.mxu0 0
        %1960 = vmatpush1.bf16.msra.mxu0 %v1935
        %1961 = vmatprep.subr.bf16.mxu0 0
        %1962 = vmatpush2.bf16.msra.mxu0 0
        %1963 = vmatprep.subr.bf16.mxu0 0
        %1964 = vmatpush2.bf16.msra.mxu0 0
        %1965 = vmatprep.subr.bf16.mxu0 0
        %1966 = vmatpush2.bf16.msra.mxu0 0
        %1967 = vmatprep.subr.bf16.mxu0 0
        %1968 = vmatpush2.bf16.msra.mxu0 0
        %1969 = vmatprep.subr.bf16.mxu0 0
        %1970 = vmatpush2.bf16.msra.mxu0 0
        %1971 = vmatprep.subr.bf16.mxu0 0
        %1972 = vmatpush2.bf16.msra.mxu0 0
        %1973 = vmatprep.subr.bf16.mxu0 0
        %1974 = vmatpush2.bf16.msra.mxu0 0
        %1975 = vmatprep.subr.bf16.mxu0 0
        %1976 = vmatpush2.bf16.msra.mxu0 0
        %1977 = vmatprep.mubr.bf16.mxu0 0
        %1978 = vmatmul.mubr.bf16.gmra.mxu0 %v1940
        %v1979 = vpop.f32.mrf.mxu0
        %v1980 = vadd.f32 %v1925, %v1979
        %v1981 = vpop.f32.mrf.mxu0
        %v1982 = vpop.f32.mrf.mxu0
        %v1983 = vadd.f32 %v1925, %v1982
        %v1984 = vpop.f32.mrf.mxu0
        %1985 = vmatprep.mubr.bf16.mxu0 0
        %1986 = vmatmul.mubr.bf16.gmra.mxu0 %v1943
        %v1987 = vpop.f32.mrf.mxu0
        %v1988 = vadd.f32 %v1925, %v1987
        %v1989 = vpop.f32.mrf.mxu0
        %v1990 = vpop.f32.mrf.mxu0
        %v1991 = vpop.f32.mrf.mxu0
        %1992 = vdwg.mxu0
        %v1993 = vpack.c.bf16 %v1983, %v1980
        %v1994 = vpack.c.bf16 %v1988, %v1988
        %1997 = vrot.lane.b32.xlu0 %v1993, 96
        %v1998 = vpop.permute.xlu0 %1997
        %1999 = vrot.lane.b32.xlu0 %v1994, 96
        %v2000 = vpop.permute.xlu0 %1999
        %v2002 = vsel %vm817, %v1993, 0
        %v2005 = vsel %vm817, %v1994, 0
        %v2008 = vsel %vm817, %v1998, 0
        %v2011 = vsel %vm817, %v2000, 0
        %2013 = vmatprep.subr.bf16.mxu0 0
        %2014 = vmatpush1.bf16.xpose.msra.mxu0 0
        %2015 = vmatprep.subr.bf16.mxu0 0
        %2016 = vmatpush1.bf16.xpose.msra.mxu0 0
        %2017 = vmatprep.subr.bf16.mxu0 0
        %2018 = vmatpush1.bf16.xpose.msra.mxu0 0
        %2019 = vmatprep.subr.bf16.mxu0 0
        %2020 = vmatpush1.bf16.xpose.msra.mxu0 0
        %2021 = vmatprep.subr.bf16.mxu0 0
        %2022 = vmatpush1.bf16.xpose.msra.mxu0 0
        %2023 = vmatprep.subr.bf16.mxu0 0
        %2024 = vmatpush1.bf16.xpose.msra.mxu0 0
        %2025 = vmatprep.subr.bf16.mxu0 0
        %2026 = vmatpush1.bf16.xpose.msra.mxu0 %v2011
        %2027 = vmatprep.subr.bf16.mxu0 0
        %2028 = vmatpush1.bf16.xpose.msra.mxu0 %v2008
        %2029 = vmatprep.subr.bf16.mxu0 0
        %2030 = vmatpush2.bf16.xpose.msra.mxu0 0
        %2031 = vmatprep.subr.bf16.mxu0 0
        %2032 = vmatpush2.bf16.xpose.msra.mxu0 0
        %2033 = vmatprep.subr.bf16.mxu0 0
        %2034 = vmatpush2.bf16.xpose.msra.mxu0 0
        %2035 = vmatprep.subr.bf16.mxu0 0
        %2036 = vmatpush2.bf16.xpose.msra.mxu0 0
        %2037 = vmatprep.subr.bf16.mxu0 0
        %2038 = vmatpush2.bf16.xpose.msra.mxu0 0
        %2039 = vmatprep.subr.bf16.mxu0 0
        %2040 = vmatpush2.bf16.xpose.msra.mxu0 0
        %2041 = vmatprep.subr.bf16.mxu0 0
        %2042 = vmatpush2.bf16.xpose.msra.mxu0 0
        %2043 = vmatprep.subr.bf16.mxu0 0
        %2044 = vmatpush2.bf16.xpose.msra.mxu0 0
        %2045 = vmatprep.mubr.bf16.mxu0 0
        %2046 = vmatmul.mubr.bf16.gmra.mxu0 %v2002
        %v2047 = vpop.f32.mrf.mxu0
        %v2048 = vadd.f32 0.0, %v2047
        %v2049 = vpop.f32.mrf.mxu0
        %v2050 = vpop.f32.mrf.mxu0
        %v2051 = vadd.f32 0.0, %v2050
        %v2052 = vpop.f32.mrf.mxu0
        %2053 = vmatprep.mubr.bf16.mxu0 0
        %2054 = vmatmul.mubr.bf16.gmra.mxu0 %v2005
        %v2055 = vpop.f32.mrf.mxu0
        %v2056 = vadd.f32 0.0, %v2055
        %v2057 = vpop.f32.mrf.mxu0
        %v2058 = vpop.f32.mrf.mxu0
        %v2059 = vpop.f32.mrf.mxu0
        %2060 = vdwg.mxu0
        %v2061 = vsel %vm878, %v2048, -inf
        %2062 = vmax.xlane.f32.xlu0 %v2061
        %v2063 = vpop.xlane.xlu0 %2062
        %v2064 = vsel %vm878, %v2051, -inf
        %2065 = vmax.xlane.f32.xlu0 %v2064
        %v2066 = vpop.xlane.xlu0 %2065
        %v2067 = vsel %vm878, %v2056, -inf
        %2068 = vmax.xlane.f32.xlu0 %v2067
        %v2069 = vpop.xlane.xlu0 %2068
        %v2070 = vsub.f32 %v2048, %v2063
        %v2071 = vsub.f32 %v2051, %v2066
        %v2072 = vsub.f32 %v2056, %v2069
        %v2073 = vmul.f32 %v2070, 1.442695
        %v2074 = vpow.pop %v2073
        %v2075 = vmul.f32 %v2071, 1.442695
        %v2076 = vpow.pop %v2075
        %v2077 = vmul.f32 %v2072, 1.442695
        %v2078 = vpow.pop %v2077
        %v2079 = vmul.f32 %v2074, %v728
        %v2080 = vmul.f32 %v2076, %v728
        %v2081 = vmul.f32 %v2078, %v728
        %v2082 = vsel %vm878, %v2079, 0.0
        %2083 = vadd.xlane.f32.xlu0 %v2082
        %v2084 = vpop.xlane.xlu0 %2083
        %v2085 = vsel %vm878, %v2080, 0.0
        %2086 = vadd.xlane.f32.xlu0 %v2085
        %v2087 = vpop.xlane.xlu0 %2086
        %v2088 = vsel %vm878, %v2081, 0.0
        %2089 = vadd.xlane.f32.xlu0 %v2088
        %v2090 = vpop.xlane.xlu0 %2089
        %v2091 = vrcp.pop %v2084
        %v2092 = vrcp.pop %v2087
        %v2093 = vrcp.pop %v2090
        %v2094 = vmul.f32 %v2079, %v2091
        %v2095 = vmul.f32 %v2080, %v2092
        %v2096 = vmul.f32 %v2081, %v2093
        %v2097 = vpack.c.bf16 %v2095, %v2094
        %v2098 = vpack.c.bf16 %v2096, %v2096
        %2099 = vrot.lane.b32.xlu0 %v1993, 64
        %v2100 = vpop.permute.xlu0 %2099
        %2101 = vrot.lane.b32.xlu0 %v1994, 64
        %v2102 = vpop.permute.xlu0 %2101
        %v2105 = vsel %vm878, %v2097, 0
        %v2108 = vsel %vm878, %v2098, 0
        %v2111 = vsel %vm928, %v2102, 0
        %2113 = vmatprep.subr.bf16.mxu0 0
        %2114 = vmatpush1.bf16.msra.mxu0 0
        %2115 = vmatprep.subr.bf16.mxu0 0
        %2116 = vmatpush1.bf16.msra.mxu0 0
        %2117 = vmatprep.subr.bf16.mxu0 0
        %2118 = vmatpush1.bf16.msra.mxu0 0
        %2119 = vmatprep.subr.bf16.mxu0 0
        %2120 = vmatpush1.bf16.msra.mxu0 0
        %2121 = vmatprep.subr.bf16.mxu0 0
        %2122 = vmatpush1.bf16.msra.mxu0 0
        %2123 = vmatprep.subr.bf16.mxu0 0
        %2124 = vmatpush1.bf16.msra.mxu0 0
        %2125 = vmatprep.subr.bf16.mxu0 0
        %2126 = vmatpush1.bf16.msra.mxu0 %v2111
        %2127 = vmatprep.subr.bf16.mxu0 0
        %2128 = vmatpush1.bf16.msra.mxu0 %v2100
        %2129 = vmatprep.subr.bf16.mxu0 0
        %2130 = vmatpush2.bf16.msra.mxu0 0
        %2131 = vmatprep.subr.bf16.mxu0 0
        %2132 = vmatpush2.bf16.msra.mxu0 0
        %2133 = vmatprep.subr.bf16.mxu0 0
        %2134 = vmatpush2.bf16.msra.mxu0 0
        %2135 = vmatprep.subr.bf16.mxu0 0
        %2136 = vmatpush2.bf16.msra.mxu0 0
        %2137 = vmatprep.subr.bf16.mxu0 0
        %2138 = vmatpush2.bf16.msra.mxu0 0
        %2139 = vmatprep.subr.bf16.mxu0 0
        %2140 = vmatpush2.bf16.msra.mxu0 0
        %2141 = vmatprep.subr.bf16.mxu0 0
        %2142 = vmatpush2.bf16.msra.mxu0 0
        %2143 = vmatprep.subr.bf16.mxu0 0
        %2144 = vmatpush2.bf16.msra.mxu0 0
        %2145 = vmatprep.mubr.bf16.mxu0 0
        %2146 = vmatmul.mubr.bf16.gmra.mxu0 %v2105
        %v2147 = vpop.f32.mrf.mxu0
        %v2148 = vadd.f32 0.0, %v2147
        %v2149 = vpop.f32.mrf.mxu0
        %v2150 = vpop.f32.mrf.mxu0
        %v2151 = vadd.f32 0.0, %v2150
        %v2152 = vpop.f32.mrf.mxu0
        %2153 = vmatprep.mubr.bf16.mxu0 0
        %2154 = vmatmul.mubr.bf16.gmra.mxu0 %v2108
        %v2155 = vpop.f32.mrf.mxu0
        %v2156 = vadd.f32 0.0, %v2155
        %v2157 = vpop.f32.mrf.mxu0
        %v2158 = vpop.f32.mrf.mxu0
        %v2159 = vpop.f32.mrf.mxu0
        %2160 = vdwg.mxu0
        %2161 = vrot.lane.b32.xlu0 %v1993, 120
        %v2162 = vpop.permute.xlu0 %2161
        %2163 = vrot.lane.b32.xlu0 %v1994, 120
        %v2164 = vpop.permute.xlu0 %2163
        %2165 = vrot.lane.b32.xlu0 %v1993, 88
        %v2166 = vpop.permute.xlu0 %2165
        %2167 = vrot.lane.b32.xlu0 %v1994, 88
        %v2168 = vpop.permute.xlu0 %2167
        %v2170 = vsel %vm817, %v2162, 0
        %v2173 = vsel %vm817, %v2164, 0
        %v2176 = vsel %vm817, %v2166, 0
        %v2179 = vsel %vm817, %v2168, 0
        %2181 = vmatprep.subr.bf16.mxu0 0
        %2182 = vmatpush1.bf16.xpose.msra.mxu0 0
        %2183 = vmatprep.subr.bf16.mxu0 0
        %2184 = vmatpush1.bf16.xpose.msra.mxu0 0
        %2185 = vmatprep.subr.bf16.mxu0 0
        %2186 = vmatpush1.bf16.xpose.msra.mxu0 0
        %2187 = vmatprep.subr.bf16.mxu0 0
        %2188 = vmatpush1.bf16.xpose.msra.mxu0 0
        %2189 = vmatprep.subr.bf16.mxu0 0
        %2190 = vmatpush1.bf16.xpose.msra.mxu0 0
        %2191 = vmatprep.subr.bf16.mxu0 0
        %2192 = vmatpush1.bf16.xpose.msra.mxu0 0
        %2193 = vmatprep.subr.bf16.mxu0 0
        %2194 = vmatpush1.bf16.xpose.msra.mxu0 %v2179
        %2195 = vmatprep.subr.bf16.mxu0 0
        %2196 = vmatpush1.bf16.xpose.msra.mxu0 %v2176
        %2197 = vmatprep.subr.bf16.mxu0 0
        %2198 = vmatpush2.bf16.xpose.msra.mxu0 0
        %2199 = vmatprep.subr.bf16.mxu0 0
        %2200 = vmatpush2.bf16.xpose.msra.mxu0 0
        %2201 = vmatprep.subr.bf16.mxu0 0
        %2202 = vmatpush2.bf16.xpose.msra.mxu0 0
        %2203 = vmatprep.subr.bf16.mxu0 0
        %2204 = vmatpush2.bf16.xpose.msra.mxu0 0
        %2205 = vmatprep.subr.bf16.mxu0 0
        %2206 = vmatpush2.bf16.xpose.msra.mxu0 0
        %2207 = vmatprep.subr.bf16.mxu0 0
        %2208 = vmatpush2.bf16.xpose.msra.mxu0 0
        %2209 = vmatprep.subr.bf16.mxu0 0
        %2210 = vmatpush2.bf16.xpose.msra.mxu0 0
        %2211 = vmatprep.subr.bf16.mxu0 0
        %2212 = vmatpush2.bf16.xpose.msra.mxu0 0
        %2213 = vmatprep.mubr.bf16.mxu0 0
        %2214 = vmatmul.mubr.bf16.gmra.mxu0 %v2170
        %v2215 = vpop.f32.mrf.mxu0
        %v2216 = vadd.f32 0.0, %v2215
        %v2217 = vpop.f32.mrf.mxu0
        %v2218 = vpop.f32.mrf.mxu0
        %v2219 = vadd.f32 0.0, %v2218
        %v2220 = vpop.f32.mrf.mxu0
        %2221 = vmatprep.mubr.bf16.mxu0 0
        %2222 = vmatmul.mubr.bf16.gmra.mxu0 %v2173
        %v2223 = vpop.f32.mrf.mxu0
        %v2224 = vadd.f32 0.0, %v2223
        %v2225 = vpop.f32.mrf.mxu0
        %v2226 = vpop.f32.mrf.mxu0
        %v2227 = vpop.f32.mrf.mxu0
        %2228 = vdwg.mxu0
        %v2229 = vsel %vm878, %v2216, -inf
        %2230 = vmax.xlane.f32.xlu0 %v2229
        %v2231 = vpop.xlane.xlu0 %2230
        %v2232 = vsel %vm878, %v2219, -inf
        %2233 = vmax.xlane.f32.xlu0 %v2232
        %v2234 = vpop.xlane.xlu0 %2233
        %v2235 = vsel %vm878, %v2224, -inf
        %2236 = vmax.xlane.f32.xlu0 %v2235
        %v2237 = vpop.xlane.xlu0 %2236
        %v2238 = vsub.f32 %v2216, %v2231
        %v2239 = vsub.f32 %v2219, %v2234
        %v2240 = vsub.f32 %v2224, %v2237
        %v2241 = vmul.f32 %v2238, 1.442695
        %v2242 = vpow.pop %v2241
        %v2243 = vmul.f32 %v2239, 1.442695
        %v2244 = vpow.pop %v2243
        %v2245 = vmul.f32 %v2240, 1.442695
        %v2246 = vpow.pop %v2245
        %v2247 = vmul.f32 %v2242, %v728
        %v2248 = vmul.f32 %v2244, %v728
        %v2249 = vmul.f32 %v2246, %v728
        %v2250 = vsel %vm878, %v2247, 0.0
        %2251 = vadd.xlane.f32.xlu0 %v2250
        %v2252 = vpop.xlane.xlu0 %2251
        %v2253 = vsel %vm878, %v2248, 0.0
        %2254 = vadd.xlane.f32.xlu0 %v2253
        %v2255 = vpop.xlane.xlu0 %2254
        %v2256 = vsel %vm878, %v2249, 0.0
        %2257 = vadd.xlane.f32.xlu0 %v2256
        %v2258 = vpop.xlane.xlu0 %2257
        %v2259 = vrcp.pop %v2252
        %v2260 = vrcp.pop %v2255
        %v2261 = vrcp.pop %v2258
        %v2262 = vmul.f32 %v2247, %v2259
        %v2263 = vmul.f32 %v2248, %v2260
        %v2264 = vmul.f32 %v2249, %v2261
        %v2265 = vpack.c.bf16 %v2263, %v2262
        %v2266 = vpack.c.bf16 %v2264, %v2264
        %2267 = vrot.lane.b32.xlu0 %v1993, 56
        %v2268 = vpop.permute.xlu0 %2267
        %2269 = vrot.lane.b32.xlu0 %v1994, 56
        %v2270 = vpop.permute.xlu0 %2269
        %v2273 = vsel %vm878, %v2265, 0
        %v2276 = vsel %vm878, %v2266, 0
        %v2279 = vsel %vm928, %v2270, 0
        %2281 = vmatprep.subr.bf16.mxu0 0
        %2282 = vmatpush1.bf16.msra.mxu0 0
        %2283 = vmatprep.subr.bf16.mxu0 0
        %2284 = vmatpush1.bf16.msra.mxu0 0
        %2285 = vmatprep.subr.bf16.mxu0 0
        %2286 = vmatpush1.bf16.msra.mxu0 0
        %2287 = vmatprep.subr.bf16.mxu0 0
        %2288 = vmatpush1.bf16.msra.mxu0 0
        %2289 = vmatprep.subr.bf16.mxu0 0
        %2290 = vmatpush1.bf16.msra.mxu0 0
        %2291 = vmatprep.subr.bf16.mxu0 0
        %2292 = vmatpush1.bf16.msra.mxu0 0
        %2293 = vmatprep.subr.bf16.mxu0 0
        %2294 = vmatpush1.bf16.msra.mxu0 %v2279
        %2295 = vmatprep.subr.bf16.mxu0 0
        %2296 = vmatpush1.bf16.msra.mxu0 %v2268
        %2297 = vmatprep.subr.bf16.mxu0 0
        %2298 = vmatpush2.bf16.msra.mxu0 0
        %2299 = vmatprep.subr.bf16.mxu0 0
        %2300 = vmatpush2.bf16.msra.mxu0 0
        %2301 = vmatprep.subr.bf16.mxu0 0
        %2302 = vmatpush2.bf16.msra.mxu0 0
        %2303 = vmatprep.subr.bf16.mxu0 0
        %2304 = vmatpush2.bf16.msra.mxu0 0
        %2305 = vmatprep.subr.bf16.mxu0 0
        %2306 = vmatpush2.bf16.msra.mxu0 0
        %2307 = vmatprep.subr.bf16.mxu0 0
        %2308 = vmatpush2.bf16.msra.mxu0 0
        %2309 = vmatprep.subr.bf16.mxu0 0
        %2310 = vmatpush2.bf16.msra.mxu0 0
        %2311 = vmatprep.subr.bf16.mxu0 0
        %2312 = vmatpush2.bf16.msra.mxu0 0
        %2313 = vmatprep.mubr.bf16.mxu0 0
        %2314 = vmatmul.mubr.bf16.gmra.mxu0 %v2273
        %v2315 = vpop.f32.mrf.mxu0
        %v2316 = vadd.f32 0.0, %v2315
        %v2317 = vpop.f32.mrf.mxu0
        %v2318 = vpop.f32.mrf.mxu0
        %v2319 = vadd.f32 0.0, %v2318
        %v2320 = vpop.f32.mrf.mxu0
        %2321 = vmatprep.mubr.bf16.mxu0 0
        %2322 = vmatmul.mubr.bf16.gmra.mxu0 %v2276
        %v2323 = vpop.f32.mrf.mxu0
        %v2324 = vadd.f32 0.0, %v2323
        %v2325 = vpop.f32.mrf.mxu0
        %v2326 = vpop.f32.mrf.mxu0
        %v2327 = vpop.f32.mrf.mxu0
        %2328 = vdwg.mxu0
        %2329 = vrot.lane.b32.xlu0 %v1993, 112
        %v2330 = vpop.permute.xlu0 %2329
        %2331 = vrot.lane.b32.xlu0 %v1994, 112
        %v2332 = vpop.permute.xlu0 %2331
        %2333 = vrot.lane.b32.xlu0 %v1993, 80
        %v2334 = vpop.permute.xlu0 %2333
        %2335 = vrot.lane.b32.xlu0 %v1994, 80
        %v2336 = vpop.permute.xlu0 %2335
        %v2338 = vsel %vm817, %v2330, 0
        %v2341 = vsel %vm817, %v2332, 0
        %v2344 = vsel %vm817, %v2334, 0
        %v2347 = vsel %vm817, %v2336, 0
        %2349 = vmatprep.subr.bf16.mxu0 0
        %2350 = vmatpush1.bf16.xpose.msra.mxu0 0
        %2351 = vmatprep.subr.bf16.mxu0 0
        %2352 = vmatpush1.bf16.xpose.msra.mxu0 0
        %2353 = vmatprep.subr.bf16.mxu0 0
        %2354 = vmatpush1.bf16.xpose.msra.mxu0 0
        %2355 = vmatprep.subr.bf16.mxu0 0
        %2356 = vmatpush1.bf16.xpose.msra.mxu0 0
        %2357 = vmatprep.subr.bf16.mxu0 0
        %2358 = vmatpush1.bf16.xpose.msra.mxu0 0
        %2359 = vmatprep.subr.bf16.mxu0 0
        %2360 = vmatpush1.bf16.xpose.msra.mxu0 0
        %2361 = vmatprep.subr.bf16.mxu0 0
        %2362 = vmatpush1.bf16.xpose.msra.mxu0 %v2347
        %2363 = vmatprep.subr.bf16.mxu0 0
        %2364 = vmatpush1.bf16.xpose.msra.mxu0 %v2344
        %2365 = vmatprep.subr.bf16.mxu0 0
        %2366 = vmatpush2.bf16.xpose.msra.mxu0 0
        %2367 = vmatprep.subr.bf16.mxu0 0
        %2368 = vmatpush2.bf16.xpose.msra.mxu0 0
        %2369 = vmatprep.subr.bf16.mxu0 0
        %2370 = vmatpush2.bf16.xpose.msra.mxu0 0
        %2371 = vmatprep.subr.bf16.mxu0 0
        %2372 = vmatpush2.bf16.xpose.msra.mxu0 0
        %2373 = vmatprep.subr.bf16.mxu0 0
        %2374 = vmatpush2.bf16.xpose.msra.mxu0 0
        %2375 = vmatprep.subr.bf16.mxu0 0
        %2376 = vmatpush2.bf16.xpose.msra.mxu0 0
        %2377 = vmatprep.subr.bf16.mxu0 0
        %2378 = vmatpush2.bf16.xpose.msra.mxu0 0
        %2379 = vmatprep.subr.bf16.mxu0 0
        %2380 = vmatpush2.bf16.xpose.msra.mxu0 0
        %2381 = vmatprep.mubr.bf16.mxu0 0
        %2382 = vmatmul.mubr.bf16.gmra.mxu0 %v2338
        %v2383 = vpop.f32.mrf.mxu0
        %v2384 = vadd.f32 0.0, %v2383
        %v2385 = vpop.f32.mrf.mxu0
        %v2386 = vpop.f32.mrf.mxu0
        %v2387 = vadd.f32 0.0, %v2386
        %v2388 = vpop.f32.mrf.mxu0
        %2389 = vmatprep.mubr.bf16.mxu0 0
        %2390 = vmatmul.mubr.bf16.gmra.mxu0 %v2341
        %v2391 = vpop.f32.mrf.mxu0
        %v2392 = vadd.f32 0.0, %v2391
        %v2393 = vpop.f32.mrf.mxu0
        %v2394 = vpop.f32.mrf.mxu0
        %v2395 = vpop.f32.mrf.mxu0
        %2396 = vdwg.mxu0
        %v2397 = vsel %vm878, %v2384, -inf
        %2398 = vmax.xlane.f32.xlu0 %v2397
        %v2399 = vpop.xlane.xlu0 %2398
        %v2400 = vsel %vm878, %v2387, -inf
        %2401 = vmax.xlane.f32.xlu0 %v2400
        %v2402 = vpop.xlane.xlu0 %2401
        %v2403 = vsel %vm878, %v2392, -inf
        %2404 = vmax.xlane.f32.xlu0 %v2403
        %v2405 = vpop.xlane.xlu0 %2404
        %v2406 = vsub.f32 %v2384, %v2399
        %v2407 = vsub.f32 %v2387, %v2402
        %v2408 = vsub.f32 %v2392, %v2405
        %v2409 = vmul.f32 %v2406, 1.442695
        %v2410 = vpow.pop %v2409
        %v2411 = vmul.f32 %v2407, 1.442695
        %v2412 = vpow.pop %v2411
        %v2413 = vmul.f32 %v2408, 1.442695
        %v2414 = vpow.pop %v2413
        %v2415 = vmul.f32 %v2410, %v728
        %v2416 = vmul.f32 %v2412, %v728
        %v2417 = vmul.f32 %v2414, %v728
        %v2418 = vsel %vm878, %v2415, 0.0
        %2419 = vadd.xlane.f32.xlu0 %v2418
        %v2420 = vpop.xlane.xlu0 %2419
        %v2421 = vsel %vm878, %v2416, 0.0
        %2422 = vadd.xlane.f32.xlu0 %v2421
        %v2423 = vpop.xlane.xlu0 %2422
        %v2424 = vsel %vm878, %v2417, 0.0
        %2425 = vadd.xlane.f32.xlu0 %v2424
        %v2426 = vpop.xlane.xlu0 %2425
        %v2427 = vrcp.pop %v2420
        %v2428 = vrcp.pop %v2423
        %v2429 = vrcp.pop %v2426
        %v2430 = vmul.f32 %v2415, %v2427
        %v2431 = vmul.f32 %v2416, %v2428
        %v2432 = vmul.f32 %v2417, %v2429
        %v2433 = vpack.c.bf16 %v2431, %v2430
        %v2434 = vpack.c.bf16 %v2432, %v2432
        %2435 = vrot.lane.b32.xlu0 %v1993, 48
        %v2436 = vpop.permute.xlu0 %2435
        %2437 = vrot.lane.b32.xlu0 %v1994, 48
        %v2438 = vpop.permute.xlu0 %2437
        %v2441 = vsel %vm878, %v2433, 0
        %v2444 = vsel %vm878, %v2434, 0
        %v2447 = vsel %vm928, %v2438, 0
        %2449 = vmatprep.subr.bf16.mxu0 0
        %2450 = vmatpush1.bf16.msra.mxu0 0
        %2451 = vmatprep.subr.bf16.mxu0 0
        %2452 = vmatpush1.bf16.msra.mxu0 0
        %2453 = vmatprep.subr.bf16.mxu0 0
        %2454 = vmatpush1.bf16.msra.mxu0 0
        %2455 = vmatprep.subr.bf16.mxu0 0
        %2456 = vmatpush1.bf16.msra.mxu0 0
        %2457 = vmatprep.subr.bf16.mxu0 0
        %2458 = vmatpush1.bf16.msra.mxu0 0
        %2459 = vmatprep.subr.bf16.mxu0 0
        %2460 = vmatpush1.bf16.msra.mxu0 0
        %2461 = vmatprep.subr.bf16.mxu0 0
        %2462 = vmatpush1.bf16.msra.mxu0 %v2447
        %2463 = vmatprep.subr.bf16.mxu0 0
        %2464 = vmatpush1.bf16.msra.mxu0 %v2436
        %2465 = vmatprep.subr.bf16.mxu0 0
        %2466 = vmatpush2.bf16.msra.mxu0 0
        %2467 = vmatprep.subr.bf16.mxu0 0
        %2468 = vmatpush2.bf16.msra.mxu0 0
        %2469 = vmatprep.subr.bf16.mxu0 0
        %2470 = vmatpush2.bf16.msra.mxu0 0
        %2471 = vmatprep.subr.bf16.mxu0 0
        %2472 = vmatpush2.bf16.msra.mxu0 0
        %2473 = vmatprep.subr.bf16.mxu0 0
        %2474 = vmatpush2.bf16.msra.mxu0 0
        %2475 = vmatprep.subr.bf16.mxu0 0
        %2476 = vmatpush2.bf16.msra.mxu0 0
        %2477 = vmatprep.subr.bf16.mxu0 0
        %2478 = vmatpush2.bf16.msra.mxu0 0
        %2479 = vmatprep.subr.bf16.mxu0 0
        %2480 = vmatpush2.bf16.msra.mxu0 0
        %2481 = vmatprep.mubr.bf16.mxu0 0
        %2482 = vmatmul.mubr.bf16.gmra.mxu0 %v2441
        %v2483 = vpop.f32.mrf.mxu0
        %v2484 = vadd.f32 0.0, %v2483
        %v2485 = vpop.f32.mrf.mxu0
        %v2486 = vpop.f32.mrf.mxu0
        %v2487 = vadd.f32 0.0, %v2486
        %v2488 = vpop.f32.mrf.mxu0
        %2489 = vmatprep.mubr.bf16.mxu0 0
        %2490 = vmatmul.mubr.bf16.gmra.mxu0 %v2444
        %v2491 = vpop.f32.mrf.mxu0
        %v2492 = vadd.f32 0.0, %v2491
        %v2493 = vpop.f32.mrf.mxu0
        %v2494 = vpop.f32.mrf.mxu0
        %v2495 = vpop.f32.mrf.mxu0
        %2496 = vdwg.mxu0
        %2497 = vrot.lane.b32.xlu0 %v1993, 104
        %v2498 = vpop.permute.xlu0 %2497
        %2499 = vrot.lane.b32.xlu0 %v1994, 104
        %v2500 = vpop.permute.xlu0 %2499
        %2501 = vrot.lane.b32.xlu0 %v1993, 72
        %v2502 = vpop.permute.xlu0 %2501
        %2503 = vrot.lane.b32.xlu0 %v1994, 72
        %v2504 = vpop.permute.xlu0 %2503
        %v2506 = vsel %vm817, %v2498, 0
        %v2509 = vsel %vm817, %v2500, 0
        %v2512 = vsel %vm817, %v2502, 0
        %v2515 = vsel %vm817, %v2504, 0
        %2517 = vmatprep.subr.bf16.mxu0 0
        %2518 = vmatpush1.bf16.xpose.msra.mxu0 0
        %2519 = vmatprep.subr.bf16.mxu0 0
        %2520 = vmatpush1.bf16.xpose.msra.mxu0 0
        %2521 = vmatprep.subr.bf16.mxu0 0
        %2522 = vmatpush1.bf16.xpose.msra.mxu0 0
        %2523 = vmatprep.subr.bf16.mxu0 0
        %2524 = vmatpush1.bf16.xpose.msra.mxu0 0
        %2525 = vmatprep.subr.bf16.mxu0 0
        %2526 = vmatpush1.bf16.xpose.msra.mxu0 0
        %2527 = vmatprep.subr.bf16.mxu0 0
        %2528 = vmatpush1.bf16.xpose.msra.mxu0 0
        %2529 = vmatprep.subr.bf16.mxu0 0
        %2530 = vmatpush1.bf16.xpose.msra.mxu0 %v2515
        %2531 = vmatprep.subr.bf16.mxu0 0
        %2532 = vmatpush1.bf16.xpose.msra.mxu0 %v2512
        %2533 = vmatprep.subr.bf16.mxu0 0
        %2534 = vmatpush2.bf16.xpose.msra.mxu0 0
        %2535 = vmatprep.subr.bf16.mxu0 0
        %2536 = vmatpush2.bf16.xpose.msra.mxu0 0
        %2537 = vmatprep.subr.bf16.mxu0 0
        %2538 = vmatpush2.bf16.xpose.msra.mxu0 0
        %2539 = vmatprep.subr.bf16.mxu0 0
        %2540 = vmatpush2.bf16.xpose.msra.mxu0 0
        %2541 = vmatprep.subr.bf16.mxu0 0
        %2542 = vmatpush2.bf16.xpose.msra.mxu0 0
        %2543 = vmatprep.subr.bf16.mxu0 0
        %2544 = vmatpush2.bf16.xpose.msra.mxu0 0
        %2545 = vmatprep.subr.bf16.mxu0 0
        %2546 = vmatpush2.bf16.xpose.msra.mxu0 0
        %2547 = vmatprep.subr.bf16.mxu0 0
        %2548 = vmatpush2.bf16.xpose.msra.mxu0 0
        %2549 = vmatprep.mubr.bf16.mxu0 0
        %2550 = vmatmul.mubr.bf16.gmra.mxu0 %v2506
        %v2551 = vpop.f32.mrf.mxu0
        %v2552 = vadd.f32 0.0, %v2551
        %v2553 = vpop.f32.mrf.mxu0
        %v2554 = vpop.f32.mrf.mxu0
        %v2555 = vadd.f32 0.0, %v2554
        %v2556 = vpop.f32.mrf.mxu0
        %2557 = vmatprep.mubr.bf16.mxu0 0
        %2558 = vmatmul.mubr.bf16.gmra.mxu0 %v2509
        %v2559 = vpop.f32.mrf.mxu0
        %v2560 = vadd.f32 0.0, %v2559
        %v2561 = vpop.f32.mrf.mxu0
        %v2562 = vpop.f32.mrf.mxu0
        %v2563 = vpop.f32.mrf.mxu0
        %2564 = vdwg.mxu0
        %v2565 = vsel %vm878, %v2552, -inf
        %2566 = vmax.xlane.f32.xlu0 %v2565
        %v2567 = vpop.xlane.xlu0 %2566
        %v2568 = vsel %vm878, %v2555, -inf
        %2569 = vmax.xlane.f32.xlu0 %v2568
        %v2570 = vpop.xlane.xlu0 %2569
        %v2571 = vsel %vm878, %v2560, -inf
        %2572 = vmax.xlane.f32.xlu0 %v2571
        %v2573 = vpop.xlane.xlu0 %2572
        %v2574 = vsub.f32 %v2552, %v2567
        %v2575 = vsub.f32 %v2555, %v2570
        %v2576 = vsub.f32 %v2560, %v2573
        %v2577 = vmul.f32 %v2574, 1.442695
        %v2578 = vpow.pop %v2577
        %v2579 = vmul.f32 %v2575, 1.442695
        %v2580 = vpow.pop %v2579
        %v2581 = vmul.f32 %v2576, 1.442695
        %v2582 = vpow.pop %v2581
        %v2583 = vmul.f32 %v2578, %v728
        %v2584 = vmul.f32 %v2580, %v728
        %v2585 = vmul.f32 %v2582, %v728
        %v2586 = vsel %vm878, %v2583, 0.0
        %2587 = vadd.xlane.f32.xlu0 %v2586
        %v2588 = vpop.xlane.xlu0 %2587
        %v2589 = vsel %vm878, %v2584, 0.0
        %2590 = vadd.xlane.f32.xlu0 %v2589
        %v2591 = vpop.xlane.xlu0 %2590
        %v2592 = vsel %vm878, %v2585, 0.0
        %2593 = vadd.xlane.f32.xlu0 %v2592
        %v2594 = vpop.xlane.xlu0 %2593
        %v2595 = vrcp.pop %v2588
        %v2596 = vrcp.pop %v2591
        %v2597 = vrcp.pop %v2594
        %v2598 = vmul.f32 %v2583, %v2595
        %v2599 = vmul.f32 %v2584, %v2596
        %v2600 = vmul.f32 %v2585, %v2597
        %v2601 = vpack.c.bf16 %v2599, %v2598
        %v2602 = vpack.c.bf16 %v2600, %v2600
        %2603 = vrot.lane.b32.xlu0 %v1993, 40
        %v2604 = vpop.permute.xlu0 %2603
        %2605 = vrot.lane.b32.xlu0 %v1994, 40
        %v2606 = vpop.permute.xlu0 %2605
        %v2609 = vsel %vm878, %v2601, 0
        %v2612 = vsel %vm878, %v2602, 0
        %v2615 = vsel %vm928, %v2606, 0
        %2617 = vmatprep.subr.bf16.mxu0 0
        %2618 = vmatpush1.bf16.msra.mxu0 0
        %2619 = vmatprep.subr.bf16.mxu0 0
        %2620 = vmatpush1.bf16.msra.mxu0 0
        %2621 = vmatprep.subr.bf16.mxu0 0
        %2622 = vmatpush1.bf16.msra.mxu0 0
        %2623 = vmatprep.subr.bf16.mxu0 0
        %2624 = vmatpush1.bf16.msra.mxu0 0
        %2625 = vmatprep.subr.bf16.mxu0 0
        %2626 = vmatpush1.bf16.msra.mxu0 0
        %2627 = vmatprep.subr.bf16.mxu0 0
        %2628 = vmatpush1.bf16.msra.mxu0 0
        %2629 = vmatprep.subr.bf16.mxu0 0
        %2630 = vmatpush1.bf16.msra.mxu0 %v2615
        %2631 = vmatprep.subr.bf16.mxu0 0
        %2632 = vmatpush1.bf16.msra.mxu0 %v2604
        %2633 = vmatprep.subr.bf16.mxu0 0
        %2634 = vmatpush2.bf16.msra.mxu0 0
        %2635 = vmatprep.subr.bf16.mxu0 0
        %2636 = vmatpush2.bf16.msra.mxu0 0
        %2637 = vmatprep.subr.bf16.mxu0 0
        %2638 = vmatpush2.bf16.msra.mxu0 0
        %2639 = vmatprep.subr.bf16.mxu0 0
        %2640 = vmatpush2.bf16.msra.mxu0 0
        %2641 = vmatprep.subr.bf16.mxu0 0
        %2642 = vmatpush2.bf16.msra.mxu0 0
        %2643 = vmatprep.subr.bf16.mxu0 0
        %2644 = vmatpush2.bf16.msra.mxu0 0
        %2645 = vmatprep.subr.bf16.mxu0 0
        %2646 = vmatpush2.bf16.msra.mxu0 0
        %2647 = vmatprep.subr.bf16.mxu0 0
        %2648 = vmatpush2.bf16.msra.mxu0 0
        %2649 = vmatprep.mubr.bf16.mxu0 0
        %2650 = vmatmul.mubr.bf16.gmra.mxu0 %v2609
        %v2651 = vpop.f32.mrf.mxu0
        %v2652 = vadd.f32 0.0, %v2651
        %v2653 = vpop.f32.mrf.mxu0
        %v2654 = vpop.f32.mrf.mxu0
        %v2655 = vadd.f32 0.0, %v2654
        %v2656 = vpop.f32.mrf.mxu0
        %2657 = vmatprep.mubr.bf16.mxu0 0
        %2658 = vmatmul.mubr.bf16.gmra.mxu0 %v2612
        %v2659 = vpop.f32.mrf.mxu0
        %v2660 = vadd.f32 0.0, %v2659
        %v2661 = vpop.f32.mrf.mxu0
        %v2662 = vpop.f32.mrf.mxu0
        %v2663 = vpop.f32.mrf.mxu0
        %2664 = vdwg.mxu0
        %2668 = vrot.lane.b32.xlu0 %v2316, 8
        %v2669 = vpop.permute.xlu0 %2668
        %2670 = vrot.lane.b32.xlu0 %v2319, 8
        %v2671 = vpop.permute.xlu0 %2670
        %2672 = vrot.lane.b32.xlu0 %v2324, 8
        %v2673 = vpop.permute.xlu0 %2672
        %2680 = vrot.lane.b32.xlu0 %v2484, 16
        %v2681 = vpop.permute.xlu0 %2680
        %2682 = vrot.lane.b32.xlu0 %v2487, 16
        %v2683 = vpop.permute.xlu0 %2682
        %2684 = vrot.lane.b32.xlu0 %v2492, 16
        %v2685 = vpop.permute.xlu0 %2684
        %2692 = vrot.lane.b32.xlu0 %v2652, 24
        %v2693 = vpop.permute.xlu0 %2692
        %2694 = vrot.lane.b32.xlu0 %v2655, 24
        %v2695 = vpop.permute.xlu0 %2694
        %2696 = vrot.lane.b32.xlu0 %v2660, 24
        %v2697 = vpop.permute.xlu0 %2696
        %v2701 = vsel %vm817, %v2148, %v2669
        %v2702 = vsel %vm817, %v2151, %v2671
        %v2703 = vsel %vm817, %v2156, %v2673
        %v2704 = vsel %vm1523, %v2701, %v2681
        %v2705 = vsel %vm1523, %v2702, %v2683
        %v2706 = vsel %vm1523, %v2703, %v2685
        %v2707 = vsel %vm878, %v2704, %v2693
        %v2708 = vsel %vm878, %v2705, %v2695
        %v2709 = vsel %vm878, %v2706, %v2697
        %v2710 = vpack.c.bf16 %v2708, %v2707
        %v2711 = vpack.c.bf16 %v2709, %v2709
        %s2712 = scalar_lea.vmem %s5, 16
        %v2713 = vld [vmem:[%s2712] sm:$0xf]
        %v2714 = vld [vmem:[%s2712 + $0x4] sm:$0xf]
        %v2715 = vld [vmem:[%s2712 + $0x8] sm:$0xf]
        %v2716 = vld [vmem:[%s2712 + $0xc] sm:$0xf]
        %s2717 = scalar_lea.vmem %s6, 1
        %v2718 = vld [vmem:[%s2717] sm:$0x1]
        %v2720 = vlaneseq
        %v2721 = vshrl.u32 %v2720, 7
        %v2722 = vsub.s32 0, %v2721
        %v2723 = vrot.slane %v2718, %v2722
        %v2729 = vunpack.c.l.b16 %v2713
        %v2730 = vunpack.c.l.b16 %v2714
        %v2731 = vunpack.c.l.b16 %v2715
        %v2732 = vunpack.c.l.b16 %v2716
        %v2733 = vpack.c.b16 %v2730, %v2729
        %v2734 = vpack.c.b16 %v2732, %v2731
        %v2738 = vsel %vm754, %v2710, 0
        %v2741 = vsel %vm754, %v2711, 0
        %2743 = vmatprep.subr.bf16.mxu0 0
        %2744 = vmatpush1.bf16.msra.mxu0 0
        %2745 = vmatprep.subr.bf16.mxu0 0
        %2746 = vmatpush1.bf16.msra.mxu0 0
        %2747 = vmatprep.subr.bf16.mxu0 0
        %2748 = vmatpush1.bf16.msra.mxu0 0
        %2749 = vmatprep.subr.bf16.mxu0 0
        %2750 = vmatpush1.bf16.msra.mxu0 0
        %2751 = vmatprep.subr.bf16.mxu0 0
        %2752 = vmatpush1.bf16.msra.mxu0 0
        %2753 = vmatprep.subr.bf16.mxu0 0
        %2754 = vmatpush1.bf16.msra.mxu0 0
        %2755 = vmatprep.subr.bf16.mxu0 0
        %2756 = vmatpush1.bf16.msra.mxu0 %v2734
        %2757 = vmatprep.subr.bf16.mxu0 0
        %2758 = vmatpush1.bf16.msra.mxu0 %v2733
        %2759 = vmatprep.subr.bf16.mxu0 0
        %2760 = vmatpush2.bf16.msra.mxu0 0
        %2761 = vmatprep.subr.bf16.mxu0 0
        %2762 = vmatpush2.bf16.msra.mxu0 0
        %2763 = vmatprep.subr.bf16.mxu0 0
        %2764 = vmatpush2.bf16.msra.mxu0 0
        %2765 = vmatprep.subr.bf16.mxu0 0
        %2766 = vmatpush2.bf16.msra.mxu0 0
        %2767 = vmatprep.subr.bf16.mxu0 0
        %2768 = vmatpush2.bf16.msra.mxu0 0
        %2769 = vmatprep.subr.bf16.mxu0 0
        %2770 = vmatpush2.bf16.msra.mxu0 0
        %2771 = vmatprep.subr.bf16.mxu0 0
        %2772 = vmatpush2.bf16.msra.mxu0 0
        %2773 = vmatprep.subr.bf16.mxu0 0
        %2774 = vmatpush2.bf16.msra.mxu0 0
        %2775 = vmatprep.mubr.bf16.mxu0 0
        %2776 = vmatmul.mubr.bf16.gmra.mxu0 %v2738
        %v2777 = vpop.f32.mrf.mxu0
        %v2778 = vadd.f32 %v2723, %v2777
        %v2779 = vpop.f32.mrf.mxu0
        %v2780 = vpop.f32.mrf.mxu0
        %v2781 = vadd.f32 %v2723, %v2780
        %v2782 = vpop.f32.mrf.mxu0
        %2783 = vmatprep.mubr.bf16.mxu0 0
        %2784 = vmatmul.mubr.bf16.gmra.mxu0 %v2741
        %v2785 = vpop.f32.mrf.mxu0
        %v2786 = vadd.f32 %v2723, %v2785
        %v2787 = vpop.f32.mrf.mxu0
        %v2788 = vpop.f32.mrf.mxu0
        %v2789 = vpop.f32.mrf.mxu0
        %2790 = vdwg.mxu0
        %v2791 = vadd.f32 %v1909, %v2778
        %v2792 = vadd.f32 %v1910, %v2781
        %v2793 = vadd.f32 %v1911, %v2786
        %s2794 = scalar_lea.vmem %s7, 1
        %v2795 = vld [vmem:[%s2794] sm:$0x1]
        %s2796 = scalar_lea.vmem %s8, 1
        %v2797 = vld [vmem:[%s2796] sm:$0x1]
        %v2798 = vsel %vm754, %v2791, 0.0
        %2799 = vadd.xlane.f32.xlu0 %v2798
        %v2800 = vpop.xlane.xlu0 %2799
        %v2801 = vsel %vm754, %v2792, 0.0
        %2802 = vadd.xlane.f32.xlu0 %v2801
        %v2803 = vpop.xlane.xlu0 %2802
        %v2804 = vsel %vm754, %v2793, 0.0
        %2805 = vadd.xlane.f32.xlu0 %v2804
        %v2806 = vpop.xlane.xlu0 %2805
        %v2807 = vmul.f32 %v2800, %v1623
        %v2808 = vmul.f32 %v2803, %v1623
        %v2809 = vmul.f32 %v2806, %v1623
        %v2810 = vsub.f32 %v2791, %v2807
        %v2811 = vsub.f32 %v2792, %v2808
        %v2812 = vsub.f32 %v2793, %v2809
        %v2813 = vmul.f32 %v2810, %v2810
        %v2814 = vmul.f32 %v2811, %v2811
        %v2815 = vmul.f32 %v2812, %v2812
        %v2816 = vsel %vm754, %v2813, 0.0
        %2817 = vadd.xlane.f32.xlu0 %v2816
        %v2818 = vpop.xlane.xlu0 %2817
        %v2819 = vsel %vm754, %v2814, 0.0
        %2820 = vadd.xlane.f32.xlu0 %v2819
        %v2821 = vpop.xlane.xlu0 %2820
        %v2822 = vsel %vm754, %v2815, 0.0
        %2823 = vadd.xlane.f32.xlu0 %v2822
        %v2824 = vpop.xlane.xlu0 %2823
        %v2825 = vmul.f32 %v2818, %v1623
        %v2826 = vmul.f32 %v2821, %v1623
        %v2827 = vmul.f32 %v2824, %v1623
        %v2828 = vadd.f32 %v2825, 1e-05
        %v2829 = vadd.f32 %v2826, 1e-05
        %v2830 = vadd.f32 %v2827, 1e-05
        %v2831 = vrsqrt.pop %v2828
        %v2832 = vrsqrt.pop %v2829
        %v2833 = vrsqrt.pop %v2830
        %v2834 = vmul.f32 %v2810, %v2831
        %v2835 = vmul.f32 %v2811, %v2832
        %v2836 = vmul.f32 %v2812, %v2833
        %v2838 = vlaneseq
        %v2839 = vshrl.u32 %v2838, 7
        %v2840 = vsub.s32 0, %v2839
        %v2841 = vrot.slane %v2795, %v2840
        %v2843 = vmul.f32 %v2834, %v2841
        %v2844 = vmul.f32 %v2835, %v2841
        %v2845 = vmul.f32 %v2836, %v2841
        %v2847 = vlaneseq
        %v2848 = vshrl.u32 %v2847, 7
        %v2849 = vsub.s32 0, %v2848
        %v2850 = vrot.slane %v2797, %v2849
        %v2852 = vadd.f32 %v2843, %v2850
        %v2853 = vadd.f32 %v2844, %v2850
        %v2854 = vadd.f32 %v2845, %v2850
        %v2855 = vpack.c.bf16 %v2853, %v2852
        %v2856 = vpack.c.bf16 %v2854, %v2854
        %s2857 = scalar_lea.vmem %s9, 16
        %v2858 = vld [vmem:[%s2857] sm:$0xf]
        %v2859 = vld [vmem:[%s2857 + $0x4] sm:$0xf]
        %v2860 = vld [vmem:[%s2857 + $0x8] sm:$0xf]
        %v2861 = vld [vmem:[%s2857 + $0xc] sm:$0xf]
        %s2862 = scalar_lea.vmem %s10, 1
        %v2863 = vld [vmem:[%s2862] sm:$0x1]
        %v2865 = vlaneseq
        %v2866 = vshrl.u32 %v2865, 7
        %v2867 = vsub.s32 0, %v2866
        %v2868 = vrot.slane %v2863, %v2867
        %v2874 = vunpack.c.l.b16 %v2858
        %v2875 = vunpack.c.l.b16 %v2859
        %v2876 = vunpack.c.l.b16 %v2860
        %v2877 = vunpack.c.l.b16 %v2861
        %v2878 = vpack.c.b16 %v2875, %v2874
        %v2879 = vpack.c.b16 %v2877, %v2876
        %v2883 = vsel %vm754, %v2855, 0
        %v2886 = vsel %vm754, %v2856, 0
        %2888 = vmatprep.subr.bf16.mxu0 0
        %2889 = vmatpush1.bf16.msra.mxu0 0
        %2890 = vmatprep.subr.bf16.mxu0 0
        %2891 = vmatpush1.bf16.msra.mxu0 0
        %2892 = vmatprep.subr.bf16.mxu0 0
        %2893 = vmatpush1.bf16.msra.mxu0 0
        %2894 = vmatprep.subr.bf16.mxu0 0
        %2895 = vmatpush1.bf16.msra.mxu0 0
        %2896 = vmatprep.subr.bf16.mxu0 0
        %2897 = vmatpush1.bf16.msra.mxu0 0
        %2898 = vmatprep.subr.bf16.mxu0 0
        %2899 = vmatpush1.bf16.msra.mxu0 0
        %2900 = vmatprep.subr.bf16.mxu0 0
        %2901 = vmatpush1.bf16.msra.mxu0 %v2879
        %2902 = vmatprep.subr.bf16.mxu0 0
        %2903 = vmatpush1.bf16.msra.mxu0 %v2878
        %2904 = vmatprep.subr.bf16.mxu0 0
        %2905 = vmatpush2.bf16.msra.mxu0 0
        %2906 = vmatprep.subr.bf16.mxu0 0
        %2907 = vmatpush2.bf16.msra.mxu0 0
        %2908 = vmatprep.subr.bf16.mxu0 0
        %2909 = vmatpush2.bf16.msra.mxu0 0
        %2910 = vmatprep.subr.bf16.mxu0 0
        %2911 = vmatpush2.bf16.msra.mxu0 0
        %2912 = vmatprep.subr.bf16.mxu0 0
        %2913 = vmatpush2.bf16.msra.mxu0 0
        %2914 = vmatprep.subr.bf16.mxu0 0
        %2915 = vmatpush2.bf16.msra.mxu0 0
        %2916 = vmatprep.subr.bf16.mxu0 0
        %2917 = vmatpush2.bf16.msra.mxu0 0
        %2918 = vmatprep.subr.bf16.mxu0 0
        %2919 = vmatpush2.bf16.msra.mxu0 0
        %2920 = vmatprep.mubr.bf16.mxu0 0
        %2921 = vmatmul.mubr.bf16.gmra.mxu0 %v2883
        %v2922 = vpop.f32.mrf.mxu0
        %v2923 = vadd.f32 %v2868, %v2922
        %v2924 = vpop.f32.mrf.mxu0
        %v2925 = vpop.f32.mrf.mxu0
        %v2926 = vadd.f32 %v2868, %v2925
        %v2927 = vpop.f32.mrf.mxu0
        %2928 = vmatprep.mubr.bf16.mxu0 0
        %2929 = vmatmul.mubr.bf16.gmra.mxu0 %v2886
        %v2930 = vpop.f32.mrf.mxu0
        %v2931 = vadd.f32 %v2868, %v2930
        %v2932 = vpop.f32.mrf.mxu0
        %v2933 = vpop.f32.mrf.mxu0
        %v2934 = vpop.f32.mrf.mxu0
        %2935 = vdwg.mxu0
        %v2936 = vmax.f32 %v2923, 0.0
        %v2937 = vmax.f32 %v2926, 0.0
        %v2938 = vmax.f32 %v2931, 0.0
        %v2939 = vpack.c.bf16 %v2937, %v2936
        %v2940 = vpack.c.bf16 %v2938, %v2938
        %s2941 = scalar_lea.vmem %s11, 32
        %v2942 = vld [vmem:[%s2941] sm:$0xf]
        %v2943 = vld [vmem:[%s2941 + $0x4] sm:$0xf]
        %v2944 = vld [vmem:[%s2941 + $0x8] sm:$0xf]
        %v2945 = vld [vmem:[%s2941 + $0xc] sm:$0xf]
        %v2946 = vld [vmem:[%s2941 + $0x10] sm:$0xf]
        %v2947 = vld [vmem:[%s2941 + $0x14] sm:$0xf]
        %v2948 = vld [vmem:[%s2941 + $0x18] sm:$0xf]
        %v2949 = vld [vmem:[%s2941 + $0x1c] sm:$0xf]
        %s2950 = scalar_lea.vmem %s12, 1
        %v2951 = vld [vmem:[%s2950] sm:$0x1]
        %v2953 = vlaneseq
        %v2954 = vshrl.u32 %v2953, 7
        %v2955 = vsub.s32 0, %v2954
        %v2956 = vrot.slane %v2951, %v2955
        %v2966 = vunpack.c.l.b16 %v2942
        %v2967 = vunpack.c.l.b16 %v2943
        %v2968 = vunpack.c.l.b16 %v2944
        %v2969 = vunpack.c.l.b16 %v2945
        %v2970 = vunpack.c.l.b16 %v2946
        %v2971 = vunpack.c.l.b16 %v2947
        %v2972 = vunpack.c.l.b16 %v2948
        %v2973 = vunpack.c.l.b16 %v2949
        %v2974 = vpack.c.b16 %v2967, %v2966
        %v2975 = vpack.c.b16 %v2969, %v2968
        %v2976 = vpack.c.b16 %v2971, %v2970
        %v2977 = vpack.c.b16 %v2973, %v2972
        %v2983 = vsel %vm1795, %v2939, 0
        %v2986 = vsel %vm1795, %v2940, 0
        %2988 = vmatprep.subr.bf16.mxu0 0
        %2989 = vmatpush1.bf16.msra.mxu0 0
        %2990 = vmatprep.subr.bf16.mxu0 0
        %2991 = vmatpush1.bf16.msra.mxu0 0
        %2992 = vmatprep.subr.bf16.mxu0 0
        %2993 = vmatpush1.bf16.msra.mxu0 0
        %2994 = vmatprep.subr.bf16.mxu0 0
        %2995 = vmatpush1.bf16.msra.mxu0 0
        %2996 = vmatprep.subr.bf16.mxu0 0
        %2997 = vmatpush1.bf16.msra.mxu0 %v2977
        %2998 = vmatprep.subr.bf16.mxu0 0
        %2999 = vmatpush1.bf16.msra.mxu0 %v2976
        %3000 = vmatprep.subr.bf16.mxu0 0
        %3001 = vmatpush1.bf16.msra.mxu0 %v2975
        %3002 = vmatprep.subr.bf16.mxu0 0
        %3003 = vmatpush1.bf16.msra.mxu0 %v2974
        %3004 = vmatprep.subr.bf16.mxu0 0
        %3005 = vmatpush2.bf16.msra.mxu0 0
        %3006 = vmatprep.subr.bf16.mxu0 0
        %3007 = vmatpush2.bf16.msra.mxu0 0
        %3008 = vmatprep.subr.bf16.mxu0 0
        %3009 = vmatpush2.bf16.msra.mxu0 0
        %3010 = vmatprep.subr.bf16.mxu0 0
        %3011 = vmatpush2.bf16.msra.mxu0 0
        %3012 = vmatprep.subr.bf16.mxu0 0
        %3013 = vmatpush2.bf16.msra.mxu0 0
        %3014 = vmatprep.subr.bf16.mxu0 0
        %3015 = vmatpush2.bf16.msra.mxu0 0
        %3016 = vmatprep.subr.bf16.mxu0 0
        %3017 = vmatpush2.bf16.msra.mxu0 0
        %3018 = vmatprep.subr.bf16.mxu0 0
        %3019 = vmatpush2.bf16.msra.mxu0 0
        %3020 = vmatprep.mubr.bf16.mxu0 0
        %3021 = vmatmul.mubr.bf16.gmra.mxu0 %v2983
        %v3022 = vpop.f32.mrf.mxu0
        %v3023 = vpop.f32.mrf.mxu0
        %v3024 = vpop.f32.mrf.mxu0
        %v3025 = vpop.f32.mrf.mxu0
        %3026 = vmatprep.mubr.bf16.mxu0 0
        %3027 = vmatmul.mubr.bf16.gmra.mxu0 %v2986
        %v3028 = vpop.f32.mrf.mxu0
        %v3029 = vadd.f32 %v2956, %v3028
        %v3030 = vpop.f32.mrf.mxu0
        %v3031 = vpop.f32.mrf.mxu0
        %v3032 = vpop.f32.mrf.mxu0
        %3033 = vdwg.mxu0
        %v3034 = vadd.f32 %v2854, %v3029
        %s3035 = scalar_lea.vmem %s13, 1
        %v3036 = vld [vmem:[%s3035] sm:$0x1]
        %s3037 = scalar_lea.vmem %s14, 1
        %v3038 = vld [vmem:[%s3037] sm:$0x1]
        %v3039 = vsel %vm754, %v3034, 0.0
        %3040 = vadd.xlane.f32.xlu0 %v3039
        %v3041 = vpop.xlane.xlu0 %3040
        %v3042 = vmul.f32 %v3041, %v1623
        %v3043 = vsub.f32 %v3034, %v3042
        %v3044 = vmul.f32 %v3043, %v3043
        %v3045 = vsel %vm754, %v3044, 0.0
        %3046 = vadd.xlane.f32.xlu0 %v3045
        %v3047 = vpop.xlane.xlu0 %3046
        %v3048 = vmul.f32 %v3047, %v1623
        %v3049 = vadd.f32 %v3048, 1e-05
        %v3050 = vrsqrt.pop %v3049
        %v3051 = vmul.f32 %v3043, %v3050
        %v3053 = vlaneseq
        %v3054 = vshrl.u32 %v3053, 7
        %v3055 = vsub.s32 0, %v3054
        %v3056 = vrot.slane %v3036, %v3055
        %v3058 = vmul.f32 %v3051, %v3056
        %v3060 = vlaneseq
        %v3061 = vshrl.u32 %v3060, 7
        %v3062 = vsub.s32 0, %v3061
        %v3063 = vrot.slane %v3038, %v3062
        %v3065 = vadd.f32 %v3058, %v3063
        %v3066 = vld [vmem:[%s15] sm:$0x1]
        %v3067 = vld [vmem:[%s16] sm:$0x1]
        %vm3068 = vcmask 253952
        %v3069 = vsel %vm3068, %v3065, 0.0
        %3070 = vadd.xlane.f32.xlu0 %v3069
        %v3071 = vpop.xlane.xlu0 %3070
        %v3072 = vmul.f32 %v3071, %v1623
        %v3073 = vsub.f32 %v3065, %v3072
        %v3074 = vmul.f32 %v3073, %v3073
        %v3075 = vsel %vm3068, %v3074, 0.0
        %3076 = vadd.xlane.f32.xlu0 %v3075
        %v3077 = vpop.xlane.xlu0 %3076
        %v3078 = vmul.f32 %v3077, %v1623
        %v3079 = vadd.f32 %v3078, 1e-05
        %v3080 = vrsqrt.pop %v3079
        %v3081 = vmul.f32 %v3073, %v3080
        %v3082 = vmul.f32 %v3081, %v3066
        %v3083 = vadd.f32 %v3082, %v3067
        %v3084 = vpack.c.bf16 %v3083, %v3083
        %v3085 = vld [vmem:[%s17] sm:$0xf]
        %v3086 = vld [vmem:[%s17 + $0x4] sm:$0xf]
        %v3087 = vld [vmem:[%s17 + $0x8] sm:$0xf]
        %v3088 = vld [vmem:[%s17 + $0xc] sm:$0xf]
        %v3089 = vld [vmem:[%s18] sm:$0x1]
        %v3094 = vunpack.c.l.b16 %v3085
        %v3095 = vunpack.c.l.b16 %v3086
        %v3096 = vunpack.c.l.b16 %v3087
        %v3097 = vunpack.c.l.b16 %v3088
        %v3098 = vpack.c.b16 %v3095, %v3094
        %v3099 = vpack.c.b16 %v3097, %v3096
        %v3103 = vsel %vm754, %v3084, 0
        %3105 = vmatprep.subr.bf16.mxu0 0
        %3106 = vmatpush1.bf16.msra.mxu0 0
        %3107 = vmatprep.subr.bf16.mxu0 0
        %3108 = vmatpush1.bf16.msra.mxu0 0
        %3109 = vmatprep.subr.bf16.mxu0 0
        %3110 = vmatpush1.bf16.msra.mxu0 0
        %3111 = vmatprep.subr.bf16.mxu0 0
        %3112 = vmatpush1.bf16.msra.mxu0 0
        %3113 = vmatprep.subr.bf16.mxu0 0
        %3114 = vmatpush1.bf16.msra.mxu0 0
        %3115 = vmatprep.subr.bf16.mxu0 0
        %3116 = vmatpush1.bf16.msra.mxu0 0
        %3117 = vmatprep.subr.bf16.mxu0 0
        %3118 = vmatpush1.bf16.msra.mxu0 %v3099
        %3119 = vmatprep.subr.bf16.mxu0 0
        %3120 = vmatpush1.bf16.msra.mxu0 %v3098
        %3121 = vmatprep.subr.bf16.mxu0 0
        %3122 = vmatpush2.bf16.msra.mxu0 0
        %3123 = vmatprep.subr.bf16.mxu0 0
        %3124 = vmatpush2.bf16.msra.mxu0 0
        %3125 = vmatprep.subr.bf16.mxu0 0
        %3126 = vmatpush2.bf16.msra.mxu0 0
        %3127 = vmatprep.subr.bf16.mxu0 0
        %3128 = vmatpush2.bf16.msra.mxu0 0
        %3129 = vmatprep.subr.bf16.mxu0 0
        %3130 = vmatpush2.bf16.msra.mxu0 0
        %3131 = vmatprep.subr.bf16.mxu0 0
        %3132 = vmatpush2.bf16.msra.mxu0 0
        %3133 = vmatprep.subr.bf16.mxu0 0
        %3134 = vmatpush2.bf16.msra.mxu0 0
        %3135 = vmatprep.subr.bf16.mxu0 0
        %3136 = vmatpush2.bf16.msra.mxu0 0
        %3137 = vmatprep.mubr.bf16.mxu0 0
        %3138 = vmatmul.mubr.bf16.gmra.mxu0 %v3103
        %v3139 = vpop.f32.mrf.mxu0
        %v3140 = vadd.f32 %v3089, %v3139
        %v3141 = vpop.f32.mrf.mxu0
        %v3142 = vpop.f32.mrf.mxu0
        %v3143 = vpop.f32.mrf.mxu0
        %3144 = vdwg.mxu0
        %3145 = vst [vmem:[%s594] sm:$0x1] %v3140
        %s3146 = sand.u32 %s445, 1
        %s3147 = scalar_lea.sflag [#allocation3], %s3146
        %s3148 = sand.u32 %s445, 1
        %s3149 = scalar_lea.vmem [#allocation2], %s3148
        // Predicated region
        $region97: #{vit_ebc_forward.1} parent=95 // pred_check
          %p3150 = pneg %p455
        $region98: #{vit_ebc_forward.1} parent=95 // pred_check_branch
          %3152 = sbr.rel (%p3150) target = $region100
        $region99: #{vit_ebc_forward.1} parent=95 // pred_region
          %s3154 = ssub.s32 16, 16
          %3155 = vsyncadd %s3147, %s3154
          %s3156 = smul.addr %s33, 16
          %s3157 = scalar_lea.hbm %s19, %s3156
          %s3159 = sshll.u32 %s3149, 4
          %s3160 = int_to_ptr.vmem [resolvable:$true] %s3159
          %3162 = dma.vmem_to_hbm [thread:$0]  %s3160, 16, %s3157, %s3147
        $region100: #{vit_ebc_forward.1} parent=95 // pred_fallthru
          _
      $region96: #{vit_ebc_forward.1} parent=5 // pred_fallthru
        _
      %p3163 = scmp.le.s32.totalorder 2, %s28
      // Predicated region
      $region101: #{vit_ebc_forward.1} parent=5 // pred_check
        %p3164 = pneg %p3163
      $region102: #{vit_ebc_forward.1} parent=5 // pred_check_branch
        %3166 = sbr.rel (%p3164) target = $region104
      $region103: #{vit_ebc_forward.1} parent=5 // pred_region
        %s3167 = ssub.s32 %s28, 2
        // Predicated region
        $region105: #{vit_ebc_forward.1} parent=103 // pred_check
          %p3168 = pneg %p461
        $region106: #{vit_ebc_forward.1} parent=103 // pred_check_branch
          %3170 = sbr.rel (%p3168) target = $region108
        $region107: #{vit_ebc_forward.1} parent=103 // pred_region
          %s3171 = sand.u32 %s446, 1
          %s3172 = scalar_lea.sflag [#allocation3], %s3171
          %s3173 = sand.u32 %s446, 1
          %s3174 = scalar_lea.vmem [#allocation2], %s3173
          %3175 = dma.done %s3172, 16
        $region108: #{vit_ebc_forward.1} parent=103 // pred_fallthru
          _
      $region104: #{vit_ebc_forward.1} parent=5 // pred_fallthru
        _
    $region6: #{vit_ebc_forward.1} parent=1 // loop_footer
      %s32 = sadd.s32 1, %s28
    $region7: #{vit_ebc_forward.1} parent=1 // loop_footer_branch
      %27 = sbr.rel target = $region3
    $region8: #{vit_ebc_forward.1} parent=1 // loop_exit
      _
    %3176 = vsyncpa [#allocation3], 1
    %s3177 = scalar_lea.sflag [#allocation3], 1
    %3178 = vsyncpa %s3177, 1

</llo_original>
